<compile_context>
chip_gen: v7x
topology: tpu7x:2x2x1
jax: 0.10.0
libtpu: 0.0.40
codegen_flags: <defaults>
</compile_context>

<pallas_src>
import jax
import jax.numpy as jnp
from jax import lax
from jax.experimental import pallas as pl
from jax.experimental.pallas import tpu as pltpu

# ---- model dims (fixed by the module) ------------------------------------
S, B = 8, 2            # small seq / batch for the demo
BS = B * S
E_BERT = 768           # BERT hidden size (input_linear fan-in)
NINP = 200             # ninp
NHEAD = 2
HEAD_DIM = NINP // NHEAD   # 100
HP = 128                   # lane-aligned (padded) head dim
NHID = 200
NLAYERS = 2
NOUT = 9               # nout (constructor arg) -> 9 NER tags
LN_EPS = 1e-5

Q_OFF = 0
K_OFF = NHEAD * HP         # 256
V_OFF = 2 * NHEAD * HP     # 512


def _layer_norm(v, w, b):
    # f32 reduction over exactly NINP=200 features (v is never padded).
    mu = jnp.mean(v, axis=-1, keepdims=True)
    var = jnp.mean((v - mu) ** 2, axis=-1, keepdims=True)
    return (v - mu) * lax.rsqrt(var + LN_EPS) * w + b


def ner_kernel(x_ref, inw_ref, inb_ref,
               qkvw_ref, qkvb_ref, ow_ref, ob_ref,
               w1_ref, b1_ref, w2_ref, b2_ref,
               n1w_ref, n1b_ref, n2w_ref, n2b_ref,
               outw_ref, outb_ref, o_ref):
    bf16 = jnp.bfloat16

    # ---- input_linear + ReLU, one [16, 768] x [768, 200] matmul ----------
    h = jnp.maximum(
        jnp.dot(x_ref[...], inw_ref[...], preferred_element_type=jnp.float32)
        + inb_ref[...], 0.0)                                   # [BS, NINP] f32

    for l in range(NLAYERS):                                   # layers unrolled (L=2)
        # ---- fused, head-padded QKV projection over the whole batch ------
        qkv = jnp.dot(h.astype(bf16), qkvw_ref[l],
                      preferred_element_type=jnp.float32) + qkvb_ref[l]  # [BS, 768]
        qkv_bf = qkv.astype(bf16)

        # ---- per-(batch, head) SxS attention (lane-aligned 128 slabs) ----
        ctx_rows = []
        for b in range(B):                                     # B = 2, unrolled
            rows = slice(b * S, (b + 1) * S)
            head_ctx = []
            for hh in range(NHEAD):                            # H = 2, unrolled
                qh = qkv_bf[rows, Q_OFF + hh * HP:Q_OFF + (hh + 1) * HP]
                kh = qkv_bf[rows, K_OFF + hh * HP:K_OFF + (hh + 1) * HP]
                vh = qkv_bf[rows, V_OFF + hh * HP:V_OFF + (hh + 1) * HP]
                # q already carries the 1/sqrt(head_dim) scale (folded in).
                sc = lax.dot_general(qh, kh, (((1,), (1,)), ((), ())),
                                     preferred_element_type=jnp.float32)  # [S, S]
                sc = sc - jnp.max(sc, axis=-1, keepdims=True)
                p = jnp.exp(sc)
                p = p * pl.reciprocal(jnp.sum(p, axis=-1, keepdims=True),
                                      approx=True)
                head_ctx.append(jnp.dot(p.astype(bf16), vh,
                                        preferred_element_type=jnp.float32))
            ctx_rows.append(jnp.concatenate(head_ctx, axis=-1))   # [S, 2*HP]
        ctx = jnp.concatenate(ctx_rows, axis=0).astype(bf16)       # [BS, 2*HP]

        # ---- attention output projection + residual + LayerNorm ----------
        attn = jnp.dot(ctx, ow_ref[l],
                       preferred_element_type=jnp.float32) + ob_ref[l]    # [BS, NINP]
        h = _layer_norm(h + attn, n1w_ref[l], n1b_ref[l])

        # ---- feed-forward (linear1 -> relu -> linear2) + residual + LN ---
        ff = jnp.maximum(
            jnp.dot(h.astype(bf16), w1_ref[l],
                    preferred_element_type=jnp.float32) + b1_ref[l], 0.0)
        ff = jnp.dot(ff.astype(bf16), w2_ref[l],
                     preferred_element_type=jnp.float32) + b2_ref[l]
        h = _layer_norm(h + ff, n2w_ref[l], n2b_ref[l])

    # ---- linear_out + softmax(dim=-1) (exact divide so rows sum to 1) ----
    logits = jnp.dot(h.astype(bf16), outw_ref[...],
                     preferred_element_type=jnp.float32) + outb_ref[...]  # [BS, NOUT]
    logits = logits - jnp.max(logits, axis=-1, keepdims=True)
    e = jnp.exp(logits)
    o_ref[...] = e / jnp.sum(e, axis=-1, keepdims=True)


def init_params(key):
    """Deterministic synthetic parameters (PyTorch weight shapes: [out, in])."""
    def u(k, shape, a=0.05):
        return jax.random.uniform(k, shape, jnp.float32, minval=-a, maxval=a)
    ks = iter(jax.random.split(key, 32))
    return dict(
        # init_weights(): uniform(-0.1, 0.1) for the two exposed Linears
        in_w=u(next(ks), (NINP, E_BERT), 0.1),
        in_b=u(next(ks), (NINP,), 1.0 / (E_BERT ** 0.5)),
        out_w=u(next(ks), (NOUT, NINP), 0.1),
        out_b=u(next(ks), (NOUT,), 1.0 / (NINP ** 0.5)),
        # TransformerEncoder layers, stacked along a leading L axis
        qkv_w=u(next(ks), (NLAYERS, 3 * NINP, NINP)),
        qkv_b=u(next(ks), (NLAYERS, 3 * NINP)),
        o_w=u(next(ks), (NLAYERS, NINP, NINP)),
        o_b=u(next(ks), (NLAYERS, NINP)),
        ff1_w=u(next(ks), (NLAYERS, NHID, NINP)),
        ff1_b=u(next(ks), (NLAYERS, NHID)),
        ff2_w=u(next(ks), (NLAYERS, NINP, NHID)),
        ff2_b=u(next(ks), (NLAYERS, NINP)),
        n1_w=jnp.ones((NLAYERS, NINP), jnp.float32),
        n1_b=jnp.zeros((NLAYERS, NINP), jnp.float32),
        n2_w=jnp.ones((NLAYERS, NINP), jnp.float32),
        n2_b=jnp.zeros((NLAYERS, NINP), jnp.float32),
    )


def prepare_params(p):
    """ONE-TIME repack of PyTorch-layout params into the kernel layout.

    - Linear weights -> [in, out], bf16 (MXU operands).
    - QKV fused weight -> [L, NINP, 6*HP] with per-head 128-lane slabs
      (q_h0|q_h1|k_h0|k_h1|v_h0|v_h1), zero-padded 100->128; q block carries
      the 1/sqrt(head_dim) scale.
    - Output-projection weight -> [L, 2*HP, NINP] with zero rows in padded
      positions (numerically exact).
    - Biases / LayerNorm params stay f32, shaped [1, N] / [L, 1, N].
    """
    bf16 = jnp.bfloat16
    scale = 1.0 / (HEAD_DIM ** 0.5)
    L = NLAYERS

    qkv_w, qkv_b = p['qkv_w'], p['qkv_b']          # [L, 3*NINP, NINP], [L, 3*NINP]
    q_w = qkv_w[:, :NINP] * scale                  # fold q scaling into weights
    k_w = qkv_w[:, NINP:2 * NINP]
    v_w = qkv_w[:, 2 * NINP:]
    q_b = qkv_b[:, :NINP] * scale
    k_b = qkv_b[:, NINP:2 * NINP]
    v_b = qkv_b[:, 2 * NINP:]

    def pack_w(w):  # [L, NINP(out), NINP(in)] -> [L, NINP(in), NHEAD*HP] padded
        wt = jnp.transpose(w, (0, 2, 1)).reshape(L, NINP, NHEAD, HEAD_DIM)
        wt = jnp.pad(wt, ((0, 0), (0, 0), (0, 0), (0, HP - HEAD_DIM)))
        return wt.reshape(L, NINP, NHEAD * HP)

    def pack_b(b):  # [L, NINP] -> [L, 1, NHEAD*HP] padded
        bt = b.reshape(L, NHEAD, HEAD_DIM)
        bt = jnp.pad(bt, ((0, 0), (0, 0), (0, HP - HEAD_DIM)))
        return bt.reshape(L, 1, NHEAD * HP)

    qkv_w_pad = jnp.concatenate([pack_w(q_w), pack_w(k_w), pack_w(v_w)], axis=-1)
    qkv_b_pad = jnp.concatenate([pack_b(q_b), pack_b(k_b), pack_b(v_b)], axis=-1)

    # out_proj: [L, out, in] -> [L, in(split per head, padded), out]
    o_wt = jnp.transpose(p['o_w'], (0, 2, 1)).reshape(L, NHEAD, HEAD_DIM, NINP)
    o_wt = jnp.pad(o_wt, ((0, 0), (0, 0), (0, HP - HEAD_DIM), (0, 0)))
    o_w_pad = o_wt.reshape(L, NHEAD * HP, NINP)

    return dict(
        in_w=jnp.transpose(p['in_w']).astype(bf16),            # [768, NINP]
        in_b=p['in_b'][None, :],                                # [1, NINP] f32
        qkv_w=qkv_w_pad.astype(bf16),                           # [L, NINP, 768]
        qkv_b=qkv_b_pad,                                        # [L, 1, 768] f32
        o_w=o_w_pad.astype(bf16),                               # [L, 256, NINP]
        o_b=p['o_b'][:, None, :],
        ff1_w=jnp.transpose(p['ff1_w'], (0, 2, 1)).astype(bf16),
        ff1_b=p['ff1_b'][:, None, :],
        ff2_w=jnp.transpose(p['ff2_w'], (0, 2, 1)).astype(bf16),
        ff2_b=p['ff2_b'][:, None, :],
        n1_w=p['n1_w'][:, None, :], n1_b=p['n1_b'][:, None, :],
        n2_w=p['n2_w'][:, None, :], n2_b=p['n2_b'][:, None, :],
        out_w=jnp.transpose(p['out_w']).astype(bf16),           # [NINP, NOUT]
        out_b=p['out_b'][None, :],                              # [1, NOUT] f32
    )


def _cost_estimate():
    flops = 2 * BS * E_BERT * NINP                                    # input_linear
    flops += NLAYERS * 2 * BS * (NINP * 3 * NHEAD * HP                # qkv proj
                                 + NHEAD * HP * NINP                  # out proj
                                 + 2 * NINP * NHID)                   # ffn
    flops += NLAYERS * B * NHEAD * 4 * S * S * HP                     # scores + p@v
    flops += 2 * BS * NINP * NOUT                                     # linear_out
    trans = NLAYERS * B * NHEAD * (S * S + S) + BS * (NOUT + 1)       # exp + recip
    w_bytes = 2 * (E_BERT * NINP
                   + NLAYERS * (NINP * 3 * NHEAD * HP + NHEAD * HP * NINP
                                + 2 * NINP * NHID)
                   + NINP * NOUT)                                     # bf16 weights
    b_bytes = 4 * (NINP + NOUT + NLAYERS * (3 * NHEAD * HP + NINP * 5))
    a_bytes = 2 * BS * E_BERT + 4 * BS * NOUT
    return pl.CostEstimate(flops=flops, transcendentals=trans,
                           bytes_accessed=w_bytes + b_bytes + a_bytes)


@jax.jit
def ner_forward(hidden_sbe, kp):
    """hidden_sbe: [S, B, 768] language-model hidden states -> [S, B, NOUT] probs."""
    # Only activation plumbing per call: [S,B,768] -> [B*S,768] bf16 (~24 KB).
    x = jnp.transpose(hidden_sbe, (1, 0, 2)).reshape(BS, E_BERT).astype(jnp.bfloat16)
    args = (x, kp['in_w'], kp['in_b'],
            kp['qkv_w'], kp['qkv_b'], kp['o_w'], kp['o_b'],
            kp['ff1_w'], kp['ff1_b'], kp['ff2_w'], kp['ff2_b'],
            kp['n1_w'], kp['n1_b'], kp['n2_w'], kp['n2_b'],
            kp['out_w'], kp['out_b'])
    vmem = pl.BlockSpec(memory_space=pltpu.MemorySpace.VMEM)
    out = pl.pallas_call(
        ner_kernel,
        out_shape=jax.ShapeDtypeStruct((BS, NOUT), jnp.float32),
        in_specs=[vmem] * len(args),
        out_specs=vmem,
        cost_estimate=_cost_estimate(),
    )(*args)
    return jnp.transpose(out.reshape(B, S, NOUT), (1, 0, 2))   # back to [S, B, NOUT]


if __name__ == "__main__":
    key = jax.random.PRNGKey(0)
    pkey, xkey = jax.random.split(key)
    params = init_params(pkey)
    # One-time weight packing (kernel layout, bf16) — kept out of the hot path.
    kparams = prepare_params(params)
    # Stand-in for language_model(src)[0]: final hidden states [S, B, 768]
    hidden = jax.random.normal(xkey, (S, B, E_BERT), jnp.float32)

    out = jax.block_until_ready(ner_forward(hidden, kparams))

    assert out.shape == (S, B, NOUT), out.shape
    assert bool(jnp.all(jnp.isfinite(out)))
    # softmax rows must sum to 1 (final softmax uses an exact divide)
    assert bool(jnp.allclose(jnp.sum(out, axis=-1), 1.0, atol=1e-3))
    print("KERNEL_OK")
</pallas_src>

<mosaic_0001>
module attributes {stable_mosaic.version = 11 : i64} {
  func.func @ner_kernel(%arg0: memref<16x768xbf16, #tpu.memory_space<vmem>>, %arg1: memref<768x200xbf16, #tpu.memory_space<vmem>>, %arg2: memref<1x200xf32, #tpu.memory_space<vmem>>, %arg3: memref<2x200x768xbf16, #tpu.memory_space<vmem>>, %arg4: memref<2x1x768xf32, #tpu.memory_space<vmem>>, %arg5: memref<2x256x200xbf16, #tpu.memory_space<vmem>>, %arg6: memref<2x1x200xf32, #tpu.memory_space<vmem>>, %arg7: memref<2x200x200xbf16, #tpu.memory_space<vmem>>, %arg8: memref<2x1x200xf32, #tpu.memory_space<vmem>>, %arg9: memref<2x200x200xbf16, #tpu.memory_space<vmem>>, %arg10: memref<2x1x200xf32, #tpu.memory_space<vmem>>, %arg11: memref<2x1x200xf32, #tpu.memory_space<vmem>>, %arg12: memref<2x1x200xf32, #tpu.memory_space<vmem>>, %arg13: memref<2x1x200xf32, #tpu.memory_space<vmem>>, %arg14: memref<2x1x200xf32, #tpu.memory_space<vmem>>, %arg15: memref<200x9xbf16, #tpu.memory_space<vmem>>, %arg16: memref<1x9xf32, #tpu.memory_space<vmem>>, %arg17: memref<16x9xf32, #tpu.memory_space<vmem>>) attributes {dimension_semantics = [], scalar_prefetch = 0 : i64, scratch_operands = 0 : i64, tpu.core_type = #tpu.core_type<tc>} {
    %c0 = arith.constant 0 : index
    %c0_0 = arith.constant 0 : index
    %0 = vector.load %arg0[%c0, %c0_0] : memref<16x768xbf16, #tpu.memory_space<vmem>>, vector<16x768xbf16>
    %c0_1 = arith.constant 0 : index
    %c0_2 = arith.constant 0 : index
    %1 = vector.load %arg1[%c0_1, %c0_2] : memref<768x200xbf16, #tpu.memory_space<vmem>>, vector<768x200xbf16>
    %cst = arith.constant dense<0.000000e+00> : vector<16x200xf32>
    %2 = tpu.matmul %0, %1, %cst {dimension_numbers = #tpu.dot_dimension_numbers<[1], [0], [0], [1], [0, 0, 1, 1], [], []>} : vector<16x768xbf16>, vector<768x200xbf16>, vector<16x200xf32> -> vector<16x200xf32>
    %c0_3 = arith.constant 0 : index
    %c0_4 = arith.constant 0 : index
    %3 = vector.load %arg2[%c0_3, %c0_4] : memref<1x200xf32, #tpu.memory_space<vmem>>, vector<1x200xf32>
    %4 = vector.broadcast %3 : vector<1x200xf32> to vector<16x200xf32>
    %5 = arith.addf %2, %4 : vector<16x200xf32>
    %cst_5 = arith.constant 0.000000e+00 : f32
    %6 = vector.broadcast %cst_5 : f32 to vector<16x200xf32>
    %7 = arith.maximumf %5, %6 : vector<16x200xf32>
    %8 = arith.truncf %7 : vector<16x200xf32> to vector<16x200xbf16>
    %c0_6 = arith.constant 0 : index
    %c0_7 = arith.constant 0 : index
    %c0_8 = arith.constant 0 : index
    %9 = vector.load %arg3[%c0_6, %c0_7, %c0_8] : memref<2x200x768xbf16, #tpu.memory_space<vmem>>, vector<1x200x768xbf16>
    %10 = vector.shape_cast %9 : vector<1x200x768xbf16> to vector<200x768xbf16>
    %cst_9 = arith.constant dense<0.000000e+00> : vector<16x768xf32>
    %11 = tpu.matmul %8, %10, %cst_9 {dimension_numbers = #tpu.dot_dimension_numbers<[1], [0], [0], [1], [0, 0, 1, 1], [], []>} : vector<16x200xbf16>, vector<200x768xbf16>, vector<16x768xf32> -> vector<16x768xf32>
    %c0_10 = arith.constant 0 : index
    %c0_11 = arith.constant 0 : index
    %c0_12 = arith.constant 0 : index
    %12 = vector.load %arg4[%c0_10, %c0_11, %c0_12] : memref<2x1x768xf32, #tpu.memory_space<vmem>>, vector<1x1x768xf32>
    %13 = vector.shape_cast %12 : vector<1x1x768xf32> to vector<1x768xf32>
    %14 = vector.broadcast %13 : vector<1x768xf32> to vector<16x768xf32>
    %15 = arith.addf %11, %14 : vector<16x768xf32>
    %16 = arith.truncf %15 : vector<16x768xf32> to vector<16x768xbf16>
    %17 = vector.extract_strided_slice %16 {offsets = [0, 0], sizes = [8, 128], strides = [1, 1]} : vector<16x768xbf16> to vector<8x128xbf16>
    %18 = vector.extract_strided_slice %16 {offsets = [0, 256], sizes = [8, 128], strides = [1, 1]} : vector<16x768xbf16> to vector<8x128xbf16>
    %19 = vector.extract_strided_slice %16 {offsets = [0, 512], sizes = [8, 128], strides = [1, 1]} : vector<16x768xbf16> to vector<8x128xbf16>
    %cst_13 = arith.constant dense<0.000000e+00> : vector<8x8xf32>
    %20 = tpu.matmul %17, %18, %cst_13 {dimension_numbers = #tpu.dot_dimension_numbers<[1], [1], [0], [0], [0, 0, 1, 0], [], []>} : vector<8x128xbf16>, vector<8x128xbf16>, vector<8x8xf32> -> vector<8x8xf32>
    %cst_14 = arith.constant dense<0xFF800000> : vector<8xf32>
    %21 = vector.multi_reduction <maximumf>, %20, %cst_14 [1] : vector<8x8xf32> to vector<8xf32>
    %22 = vector.shape_cast %21 : vector<8xf32> to vector<8x1xf32>
    %23 = vector.broadcast %22 : vector<8x1xf32> to vector<8x8xf32>
    %24 = arith.subf %20, %23 : vector<8x8xf32>
    %25 = math.exp %24 : vector<8x8xf32>
    %cst_15 = arith.constant dense<0.000000e+00> : vector<8xf32>
    %26 = vector.multi_reduction <add>, %25, %cst_15 [1] : vector<8x8xf32> to vector<8xf32>
    %27 = vector.shape_cast %26 : vector<8xf32> to vector<8x1xf32>
    %28 = tpu.reciprocal %27 {approx = true} : vector<8x1xf32> -> vector<8x1xf32>
    %29 = vector.broadcast %28 : vector<8x1xf32> to vector<8x8xf32>
    %30 = arith.mulf %25, %29 : vector<8x8xf32>
    %31 = arith.truncf %30 : vector<8x8xf32> to vector<8x8xbf16>
    %cst_16 = arith.constant dense<0.000000e+00> : vector<8x128xf32>
    %32 = tpu.matmul %31, %19, %cst_16 {dimension_numbers = #tpu.dot_dimension_numbers<[1], [0], [0], [1], [0, 0, 1, 1], [], []>} : vector<8x8xbf16>, vector<8x128xbf16>, vector<8x128xf32> -> vector<8x128xf32>
    %33 = vector.extract_strided_slice %16 {offsets = [0, 128], sizes = [8, 128], strides = [1, 1]} : vector<16x768xbf16> to vector<8x128xbf16>
    %34 = vector.extract_strided_slice %16 {offsets = [0, 384], sizes = [8, 128], strides = [1, 1]} : vector<16x768xbf16> to vector<8x128xbf16>
    %35 = vector.extract_strided_slice %16 {offsets = [0, 640], sizes = [8, 128], strides = [1, 1]} : vector<16x768xbf16> to vector<8x128xbf16>
    %cst_17 = arith.constant dense<0.000000e+00> : vector<8x8xf32>
    %36 = tpu.matmul %33, %34, %cst_17 {dimension_numbers = #tpu.dot_dimension_numbers<[1], [1], [0], [0], [0, 0, 1, 0], [], []>} : vector<8x128xbf16>, vector<8x128xbf16>, vector<8x8xf32> -> vector<8x8xf32>
    %cst_18 = arith.constant dense<0xFF800000> : vector<8xf32>
    %37 = vector.multi_reduction <maximumf>, %36, %cst_18 [1] : vector<8x8xf32> to vector<8xf32>
    %38 = vector.shape_cast %37 : vector<8xf32> to vector<8x1xf32>
    %39 = vector.broadcast %38 : vector<8x1xf32> to vector<8x8xf32>
    %40 = arith.subf %36, %39 : vector<8x8xf32>
    %41 = math.exp %40 : vector<8x8xf32>
    %cst_19 = arith.constant dense<0.000000e+00> : vector<8xf32>
    %42 = vector.multi_reduction <add>, %41, %cst_19 [1] : vector<8x8xf32> to vector<8xf32>
    %43 = vector.shape_cast %42 : vector<8xf32> to vector<8x1xf32>
    %44 = tpu.reciprocal %43 {approx = true} : vector<8x1xf32> -> vector<8x1xf32>
    %45 = vector.broadcast %44 : vector<8x1xf32> to vector<8x8xf32>
    %46 = arith.mulf %41, %45 : vector<8x8xf32>
    %47 = arith.truncf %46 : vector<8x8xf32> to vector<8x8xbf16>
    %cst_20 = arith.constant dense<0.000000e+00> : vector<8x128xf32>
    %48 = tpu.matmul %47, %35, %cst_20 {dimension_numbers = #tpu.dot_dimension_numbers<[1], [0], [0], [1], [0, 0, 1, 1], [], []>} : vector<8x8xbf16>, vector<8x128xbf16>, vector<8x128xf32> -> vector<8x128xf32>
    %49 = tpu.concatenate %32, %48 in 1 : vector<8x128xf32>, vector<8x128xf32> -> vector<8x256xf32>
    %50 = vector.extract_strided_slice %16 {offsets = [8, 0], sizes = [8, 128], strides = [1, 1]} : vector<16x768xbf16> to vector<8x128xbf16>
    %51 = vector.extract_strided_slice %16 {offsets = [8, 256], sizes = [8, 128], strides = [1, 1]} : vector<16x768xbf16> to vector<8x128xbf16>
    %52 = vector.extract_strided_slice %16 {offsets = [8, 512], sizes = [8, 128], strides = [1, 1]} : vector<16x768xbf16> to vector<8x128xbf16>
    %cst_21 = arith.constant dense<0.000000e+00> : vector<8x8xf32>
    %53 = tpu.matmul %50, %51, %cst_21 {dimension_numbers = #tpu.dot_dimension_numbers<[1], [1], [0], [0], [0, 0, 1, 0], [], []>} : vector<8x128xbf16>, vector<8x128xbf16>, vector<8x8xf32> -> vector<8x8xf32>
    %cst_22 = arith.constant dense<0xFF800000> : vector<8xf32>
    %54 = vector.multi_reduction <maximumf>, %53, %cst_22 [1] : vector<8x8xf32> to vector<8xf32>
    %55 = vector.shape_cast %54 : vector<8xf32> to vector<8x1xf32>
    %56 = vector.broadcast %55 : vector<8x1xf32> to vector<8x8xf32>
    %57 = arith.subf %53, %56 : vector<8x8xf32>
    %58 = math.exp %57 : vector<8x8xf32>
    %cst_23 = arith.constant dense<0.000000e+00> : vector<8xf32>
    %59 = vector.multi_reduction <add>, %58, %cst_23 [1] : vector<8x8xf32> to vector<8xf32>
    %60 = vector.shape_cast %59 : vector<8xf32> to vector<8x1xf32>
    %61 = tpu.reciprocal %60 {approx = true} : vector<8x1xf32> -> vector<8x1xf32>
    %62 = vector.broadcast %61 : vector<8x1xf32> to vector<8x8xf32>
    %63 = arith.mulf %58, %62 : vector<8x8xf32>
    %64 = arith.truncf %63 : vector<8x8xf32> to vector<8x8xbf16>
    %cst_24 = arith.constant dense<0.000000e+00> : vector<8x128xf32>
    %65 = tpu.matmul %64, %52, %cst_24 {dimension_numbers = #tpu.dot_dimension_numbers<[1], [0], [0], [1], [0, 0, 1, 1], [], []>} : vector<8x8xbf16>, vector<8x128xbf16>, vector<8x128xf32> -> vector<8x128xf32>
    %66 = vector.extract_strided_slice %16 {offsets = [8, 128], sizes = [8, 128], strides = [1, 1]} : vector<16x768xbf16> to vector<8x128xbf16>
    %67 = vector.extract_strided_slice %16 {offsets = [8, 384], sizes = [8, 128], strides = [1, 1]} : vector<16x768xbf16> to vector<8x128xbf16>
    %68 = vector.extract_strided_slice %16 {offsets = [8, 640], sizes = [8, 128], strides = [1, 1]} : vector<16x768xbf16> to vector<8x128xbf16>
    %cst_25 = arith.constant dense<0.000000e+00> : vector<8x8xf32>
    %69 = tpu.matmul %66, %67, %cst_25 {dimension_numbers = #tpu.dot_dimension_numbers<[1], [1], [0], [0], [0, 0, 1, 0], [], []>} : vector<8x128xbf16>, vector<8x128xbf16>, vector<8x8xf32> -> vector<8x8xf32>
    %cst_26 = arith.constant dense<0xFF800000> : vector<8xf32>
    %70 = vector.multi_reduction <maximumf>, %69, %cst_26 [1] : vector<8x8xf32> to vector<8xf32>
    %71 = vector.shape_cast %70 : vector<8xf32> to vector<8x1xf32>
    %72 = vector.broadcast %71 : vector<8x1xf32> to vector<8x8xf32>
    %73 = arith.subf %69, %72 : vector<8x8xf32>
    %74 = math.exp %73 : vector<8x8xf32>
    %cst_27 = arith.constant dense<0.000000e+00> : vector<8xf32>
    %75 = vector.multi_reduction <add>, %74, %cst_27 [1] : vector<8x8xf32> to vector<8xf32>
    %76 = vector.shape_cast %75 : vector<8xf32> to vector<8x1xf32>
    %77 = tpu.reciprocal %76 {approx = true} : vector<8x1xf32> -> vector<8x1xf32>
    %78 = vector.broadcast %77 : vector<8x1xf32> to vector<8x8xf32>
    %79 = arith.mulf %74, %78 : vector<8x8xf32>
    %80 = arith.truncf %79 : vector<8x8xf32> to vector<8x8xbf16>
    %cst_28 = arith.constant dense<0.000000e+00> : vector<8x128xf32>
    %81 = tpu.matmul %80, %68, %cst_28 {dimension_numbers = #tpu.dot_dimension_numbers<[1], [0], [0], [1], [0, 0, 1, 1], [], []>} : vector<8x8xbf16>, vector<8x128xbf16>, vector<8x128xf32> -> vector<8x128xf32>
    %82 = tpu.concatenate %65, %81 in 1 : vector<8x128xf32>, vector<8x128xf32> -> vector<8x256xf32>
    %83 = tpu.concatenate %49, %82 in 0 : vector<8x256xf32>, vector<8x256xf32> -> vector<16x256xf32>
    %84 = arith.truncf %83 : vector<16x256xf32> to vector<16x256xbf16>
    %c0_29 = arith.constant 0 : index
    %c0_30 = arith.constant 0 : index
    %c0_31 = arith.constant 0 : index
    %85 = vector.load %arg5[%c0_29, %c0_30, %c0_31] : memref<2x256x200xbf16, #tpu.memory_space<vmem>>, vector<1x256x200xbf16>
    %86 = vector.shape_cast %85 : vector<1x256x200xbf16> to vector<256x200xbf16>
    %cst_32 = arith.constant dense<0.000000e+00> : vector<16x200xf32>
    %87 = tpu.matmul %84, %86, %cst_32 {dimension_numbers = #tpu.dot_dimension_numbers<[1], [0], [0], [1], [0, 0, 1, 1], [], []>} : vector<16x256xbf16>, vector<256x200xbf16>, vector<16x200xf32> -> vector<16x200xf32>
    %c0_33 = arith.constant 0 : index
    %c0_34 = arith.constant 0 : index
    %c0_35 = arith.constant 0 : index
    %88 = vector.load %arg6[%c0_33, %c0_34, %c0_35] : memref<2x1x200xf32, #tpu.memory_space<vmem>>, vector<1x1x200xf32>
    %89 = vector.shape_cast %88 : vector<1x1x200xf32> to vector<1x200xf32>
    %90 = vector.broadcast %89 : vector<1x200xf32> to vector<16x200xf32>
    %91 = arith.addf %87, %90 : vector<16x200xf32>
    %92 = arith.addf %7, %91 : vector<16x200xf32>
    %c0_36 = arith.constant 0 : index
    %c0_37 = arith.constant 0 : index
    %c0_38 = arith.constant 0 : index
    %93 = vector.load %arg11[%c0_36, %c0_37, %c0_38] : memref<2x1x200xf32, #tpu.memory_space<vmem>>, vector<1x1x200xf32>
    %94 = vector.shape_cast %93 : vector<1x1x200xf32> to vector<1x200xf32>
    %c0_39 = arith.constant 0 : index
    %c0_40 = arith.constant 0 : index
    %c0_41 = arith.constant 0 : index
    %95 = vector.load %arg12[%c0_39, %c0_40, %c0_41] : memref<2x1x200xf32, #tpu.memory_space<vmem>>, vector<1x1x200xf32>
    %96 = vector.shape_cast %95 : vector<1x1x200xf32> to vector<1x200xf32>
    %cst_42 = arith.constant dense<0.000000e+00> : vector<16xf32>
    %97 = vector.multi_reduction <add>, %92, %cst_42 [1] : vector<16x200xf32> to vector<16xf32>
    %98 = vector.shape_cast %97 : vector<16xf32> to vector<16x1xf32>
    %cst_43 = arith.constant 2.000000e+02 : f32
    %99 = vector.broadcast %cst_43 : f32 to vector<16x1xf32>
    %100 = arith.divf %98, %99 : vector<16x1xf32>
    %101 = vector.broadcast %100 : vector<16x1xf32> to vector<16x200xf32>
    %102 = arith.subf %92, %101 : vector<16x200xf32>
    %103 = arith.mulf %102, %102 : vector<16x200xf32>
    %cst_44 = arith.constant dense<0.000000e+00> : vector<16xf32>
    %104 = vector.multi_reduction <add>, %103, %cst_44 [1] : vector<16x200xf32> to vector<16xf32>
    %105 = vector.shape_cast %104 : vector<16xf32> to vector<16x1xf32>
    %cst_45 = arith.constant 2.000000e+02 : f32
    %106 = vector.broadcast %cst_45 : f32 to vector<16x1xf32>
    %107 = arith.divf %105, %106 : vector<16x1xf32>
    %108 = vector.broadcast %100 : vector<16x1xf32> to vector<16x200xf32>
    %109 = arith.subf %92, %108 : vector<16x200xf32>
    %cst_46 = arith.constant 9.99999974E-6 : f32
    %110 = vector.broadcast %cst_46 : f32 to vector<16x1xf32>
    %111 = arith.addf %107, %110 : vector<16x1xf32>
    %112 = math.rsqrt %111 : vector<16x1xf32>
    %113 = vector.broadcast %112 : vector<16x1xf32> to vector<16x200xf32>
    %114 = arith.mulf %109, %113 : vector<16x200xf32>
    %115 = vector.broadcast %94 : vector<1x200xf32> to vector<16x200xf32>
    %116 = arith.mulf %114, %115 : vector<16x200xf32>
    %117 = vector.broadcast %96 : vector<1x200xf32> to vector<16x200xf32>
    %118 = arith.addf %116, %117 : vector<16x200xf32>
    %119 = arith.truncf %118 : vector<16x200xf32> to vector<16x200xbf16>
    %c0_47 = arith.constant 0 : index
    %c0_48 = arith.constant 0 : index
    %c0_49 = arith.constant 0 : index
    %120 = vector.load %arg7[%c0_47, %c0_48, %c0_49] : memref<2x200x200xbf16, #tpu.memory_space<vmem>>, vector<1x200x200xbf16>
    %121 = vector.shape_cast %120 : vector<1x200x200xbf16> to vector<200x200xbf16>
    %cst_50 = arith.constant dense<0.000000e+00> : vector<16x200xf32>
    %122 = tpu.matmul %119, %121, %cst_50 {dimension_numbers = #tpu.dot_dimension_numbers<[1], [0], [0], [1], [0, 0, 1, 1], [], []>} : vector<16x200xbf16>, vector<200x200xbf16>, vector<16x200xf32> -> vector<16x200xf32>
    %c0_51 = arith.constant 0 : index
    %c0_52 = arith.constant 0 : index
    %c0_53 = arith.constant 0 : index
    %123 = vector.load %arg8[%c0_51, %c0_52, %c0_53] : memref<2x1x200xf32, #tpu.memory_space<vmem>>, vector<1x1x200xf32>
    %124 = vector.shape_cast %123 : vector<1x1x200xf32> to vector<1x200xf32>
    %125 = vector.broadcast %124 : vector<1x200xf32> to vector<16x200xf32>
    %126 = arith.addf %122, %125 : vector<16x200xf32>
    %cst_54 = arith.constant 0.000000e+00 : f32
    %127 = vector.broadcast %cst_54 : f32 to vector<16x200xf32>
    %128 = arith.maximumf %126, %127 : vector<16x200xf32>
    %129 = arith.truncf %128 : vector<16x200xf32> to vector<16x200xbf16>
    %c0_55 = arith.constant 0 : index
    %c0_56 = arith.constant 0 : index
    %c0_57 = arith.constant 0 : index
    %130 = vector.load %arg9[%c0_55, %c0_56, %c0_57] : memref<2x200x200xbf16, #tpu.memory_space<vmem>>, vector<1x200x200xbf16>
    %131 = vector.shape_cast %130 : vector<1x200x200xbf16> to vector<200x200xbf16>
    %cst_58 = arith.constant dense<0.000000e+00> : vector<16x200xf32>
    %132 = tpu.matmul %129, %131, %cst_58 {dimension_numbers = #tpu.dot_dimension_numbers<[1], [0], [0], [1], [0, 0, 1, 1], [], []>} : vector<16x200xbf16>, vector<200x200xbf16>, vector<16x200xf32> -> vector<16x200xf32>
    %c0_59 = arith.constant 0 : index
    %c0_60 = arith.constant 0 : index
    %c0_61 = arith.constant 0 : index
    %133 = vector.load %arg10[%c0_59, %c0_60, %c0_61] : memref<2x1x200xf32, #tpu.memory_space<vmem>>, vector<1x1x200xf32>
    %134 = vector.shape_cast %133 : vector<1x1x200xf32> to vector<1x200xf32>
    %135 = vector.broadcast %134 : vector<1x200xf32> to vector<16x200xf32>
    %136 = arith.addf %132, %135 : vector<16x200xf32>
    %137 = arith.addf %118, %136 : vector<16x200xf32>
    %c0_62 = arith.constant 0 : index
    %c0_63 = arith.constant 0 : index
    %c0_64 = arith.constant 0 : index
    %138 = vector.load %arg13[%c0_62, %c0_63, %c0_64] : memref<2x1x200xf32, #tpu.memory_space<vmem>>, vector<1x1x200xf32>
    %139 = vector.shape_cast %138 : vector<1x1x200xf32> to vector<1x200xf32>
    %c0_65 = arith.constant 0 : index
    %c0_66 = arith.constant 0 : index
    %c0_67 = arith.constant 0 : index
    %140 = vector.load %arg14[%c0_65, %c0_66, %c0_67] : memref<2x1x200xf32, #tpu.memory_space<vmem>>, vector<1x1x200xf32>
    %141 = vector.shape_cast %140 : vector<1x1x200xf32> to vector<1x200xf32>
    %cst_68 = arith.constant dense<0.000000e+00> : vector<16xf32>
    %142 = vector.multi_reduction <add>, %137, %cst_68 [1] : vector<16x200xf32> to vector<16xf32>
    %143 = vector.shape_cast %142 : vector<16xf32> to vector<16x1xf32>
    %cst_69 = arith.constant 2.000000e+02 : f32
    %144 = vector.broadcast %cst_69 : f32 to vector<16x1xf32>
    %145 = arith.divf %143, %144 : vector<16x1xf32>
    %146 = vector.broadcast %145 : vector<16x1xf32> to vector<16x200xf32>
    %147 = arith.subf %137, %146 : vector<16x200xf32>
    %148 = arith.mulf %147, %147 : vector<16x200xf32>
    %cst_70 = arith.constant dense<0.000000e+00> : vector<16xf32>
    %149 = vector.multi_reduction <add>, %148, %cst_70 [1] : vector<16x200xf32> to vector<16xf32>
    %150 = vector.shape_cast %149 : vector<16xf32> to vector<16x1xf32>
    %cst_71 = arith.constant 2.000000e+02 : f32
    %151 = vector.broadcast %cst_71 : f32 to vector<16x1xf32>
    %152 = arith.divf %150, %151 : vector<16x1xf32>
    %153 = vector.broadcast %145 : vector<16x1xf32> to vector<16x200xf32>
    %154 = arith.subf %137, %153 : vector<16x200xf32>
    %cst_72 = arith.constant 9.99999974E-6 : f32
    %155 = vector.broadcast %cst_72 : f32 to vector<16x1xf32>
    %156 = arith.addf %152, %155 : vector<16x1xf32>
    %157 = math.rsqrt %156 : vector<16x1xf32>
    %158 = vector.broadcast %157 : vector<16x1xf32> to vector<16x200xf32>
    %159 = arith.mulf %154, %158 : vector<16x200xf32>
    %160 = vector.broadcast %139 : vector<1x200xf32> to vector<16x200xf32>
    %161 = arith.mulf %159, %160 : vector<16x200xf32>
    %162 = vector.broadcast %141 : vector<1x200xf32> to vector<16x200xf32>
    %163 = arith.addf %161, %162 : vector<16x200xf32>
    %164 = arith.truncf %163 : vector<16x200xf32> to vector<16x200xbf16>
    %c1 = arith.constant 1 : index
    %c0_73 = arith.constant 0 : index
    %c0_74 = arith.constant 0 : index
    %165 = vector.load %arg3[%c1, %c0_73, %c0_74] : memref<2x200x768xbf16, #tpu.memory_space<vmem>>, vector<1x200x768xbf16>
    %166 = vector.shape_cast %165 : vector<1x200x768xbf16> to vector<200x768xbf16>
    %cst_75 = arith.constant dense<0.000000e+00> : vector<16x768xf32>
    %167 = tpu.matmul %164, %166, %cst_75 {dimension_numbers = #tpu.dot_dimension_numbers<[1], [0], [0], [1], [0, 0, 1, 1], [], []>} : vector<16x200xbf16>, vector<200x768xbf16>, vector<16x768xf32> -> vector<16x768xf32>
    %c1_76 = arith.constant 1 : index
    %c0_77 = arith.constant 0 : index
    %c0_78 = arith.constant 0 : index
    %168 = vector.load %arg4[%c1_76, %c0_77, %c0_78] : memref<2x1x768xf32, #tpu.memory_space<vmem>>, vector<1x1x768xf32>
    %169 = vector.shape_cast %168 : vector<1x1x768xf32> to vector<1x768xf32>
    %170 = vector.broadcast %169 : vector<1x768xf32> to vector<16x768xf32>
    %171 = arith.addf %167, %170 : vector<16x768xf32>
    %172 = arith.truncf %171 : vector<16x768xf32> to vector<16x768xbf16>
    %173 = vector.extract_strided_slice %172 {offsets = [0, 0], sizes = [8, 128], strides = [1, 1]} : vector<16x768xbf16> to vector<8x128xbf16>
    %174 = vector.extract_strided_slice %172 {offsets = [0, 256], sizes = [8, 128], strides = [1, 1]} : vector<16x768xbf16> to vector<8x128xbf16>
    %175 = vector.extract_strided_slice %172 {offsets = [0, 512], sizes = [8, 128], strides = [1, 1]} : vector<16x768xbf16> to vector<8x128xbf16>
    %cst_79 = arith.constant dense<0.000000e+00> : vector<8x8xf32>
    %176 = tpu.matmul %173, %174, %cst_79 {dimension_numbers = #tpu.dot_dimension_numbers<[1], [1], [0], [0], [0, 0, 1, 0], [], []>} : vector<8x128xbf16>, vector<8x128xbf16>, vector<8x8xf32> -> vector<8x8xf32>
    %cst_80 = arith.constant dense<0xFF800000> : vector<8xf32>
    %177 = vector.multi_reduction <maximumf>, %176, %cst_80 [1] : vector<8x8xf32> to vector<8xf32>
    %178 = vector.shape_cast %177 : vector<8xf32> to vector<8x1xf32>
    %179 = vector.broadcast %178 : vector<8x1xf32> to vector<8x8xf32>
    %180 = arith.subf %176, %179 : vector<8x8xf32>
    %181 = math.exp %180 : vector<8x8xf32>
    %cst_81 = arith.constant dense<0.000000e+00> : vector<8xf32>
    %182 = vector.multi_reduction <add>, %181, %cst_81 [1] : vector<8x8xf32> to vector<8xf32>
    %183 = vector.shape_cast %182 : vector<8xf32> to vector<8x1xf32>
    %184 = tpu.reciprocal %183 {approx = true} : vector<8x1xf32> -> vector<8x1xf32>
    %185 = vector.broadcast %184 : vector<8x1xf32> to vector<8x8xf32>
    %186 = arith.mulf %181, %185 : vector<8x8xf32>
    %187 = arith.truncf %186 : vector<8x8xf32> to vector<8x8xbf16>
    %cst_82 = arith.constant dense<0.000000e+00> : vector<8x128xf32>
    %188 = tpu.matmul %187, %175, %cst_82 {dimension_numbers = #tpu.dot_dimension_numbers<[1], [0], [0], [1], [0, 0, 1, 1], [], []>} : vector<8x8xbf16>, vector<8x128xbf16>, vector<8x128xf32> -> vector<8x128xf32>
    %189 = vector.extract_strided_slice %172 {offsets = [0, 128], sizes = [8, 128], strides = [1, 1]} : vector<16x768xbf16> to vector<8x128xbf16>
    %190 = vector.extract_strided_slice %172 {offsets = [0, 384], sizes = [8, 128], strides = [1, 1]} : vector<16x768xbf16> to vector<8x128xbf16>
    %191 = vector.extract_strided_slice %172 {offsets = [0, 640], sizes = [8, 128], strides = [1, 1]} : vector<16x768xbf16> to vector<8x128xbf16>
    %cst_83 = arith.constant dense<0.000000e+00> : vector<8x8xf32>
    %192 = tpu.matmul %189, %190, %cst_83 {dimension_numbers = #tpu.dot_dimension_numbers<[1], [1], [0], [0], [0, 0, 1, 0], [], []>} : vector<8x128xbf16>, vector<8x128xbf16>, vector<8x8xf32> -> vector<8x8xf32>
    %cst_84 = arith.constant dense<0xFF800000> : vector<8xf32>
    %193 = vector.multi_reduction <maximumf>, %192, %cst_84 [1] : vector<8x8xf32> to vector<8xf32>
    %194 = vector.shape_cast %193 : vector<8xf32> to vector<8x1xf32>
    %195 = vector.broadcast %194 : vector<8x1xf32> to vector<8x8xf32>
    %196 = arith.subf %192, %195 : vector<8x8xf32>
    %197 = math.exp %196 : vector<8x8xf32>
    %cst_85 = arith.constant dense<0.000000e+00> : vector<8xf32>
    %198 = vector.multi_reduction <add>, %197, %cst_85 [1] : vector<8x8xf32> to vector<8xf32>
    %199 = vector.shape_cast %198 : vector<8xf32> to vector<8x1xf32>
    %200 = tpu.reciprocal %199 {approx = true} : vector<8x1xf32> -> vector<8x1xf32>
    %201 = vector.broadcast %200 : vector<8x1xf32> to vector<8x8xf32>
    %202 = arith.mulf %197, %201 : vector<8x8xf32>
    %203 = arith.truncf %202 : vector<8x8xf32> to vector<8x8xbf16>
    %cst_86 = arith.constant dense<0.000000e+00> : vector<8x128xf32>
    %204 = tpu.matmul %203, %191, %cst_86 {dimension_numbers = #tpu.dot_dimension_numbers<[1], [0], [0], [1], [0, 0, 1, 1], [], []>} : vector<8x8xbf16>, vector<8x128xbf16>, vector<8x128xf32> -> vector<8x128xf32>
    %205 = tpu.concatenate %188, %204 in 1 : vector<8x128xf32>, vector<8x128xf32> -> vector<8x256xf32>
    %206 = vector.extract_strided_slice %172 {offsets = [8, 0], sizes = [8, 128], strides = [1, 1]} : vector<16x768xbf16> to vector<8x128xbf16>
    %207 = vector.extract_strided_slice %172 {offsets = [8, 256], sizes = [8, 128], strides = [1, 1]} : vector<16x768xbf16> to vector<8x128xbf16>
    %208 = vector.extract_strided_slice %172 {offsets = [8, 512], sizes = [8, 128], strides = [1, 1]} : vector<16x768xbf16> to vector<8x128xbf16>
    %cst_87 = arith.constant dense<0.000000e+00> : vector<8x8xf32>
    %209 = tpu.matmul %206, %207, %cst_87 {dimension_numbers = #tpu.dot_dimension_numbers<[1], [1], [0], [0], [0, 0, 1, 0], [], []>} : vector<8x128xbf16>, vector<8x128xbf16>, vector<8x8xf32> -> vector<8x8xf32>
    %cst_88 = arith.constant dense<0xFF800000> : vector<8xf32>
    %210 = vector.multi_reduction <maximumf>, %209, %cst_88 [1] : vector<8x8xf32> to vector<8xf32>
    %211 = vector.shape_cast %210 : vector<8xf32> to vector<8x1xf32>
    %212 = vector.broadcast %211 : vector<8x1xf32> to vector<8x8xf32>
    %213 = arith.subf %209, %212 : vector<8x8xf32>
    %214 = math.exp %213 : vector<8x8xf32>
    %cst_89 = arith.constant dense<0.000000e+00> : vector<8xf32>
    %215 = vector.multi_reduction <add>, %214, %cst_89 [1] : vector<8x8xf32> to vector<8xf32>
    %216 = vector.shape_cast %215 : vector<8xf32> to vector<8x1xf32>
    %217 = tpu.reciprocal %216 {approx = true} : vector<8x1xf32> -> vector<8x1xf32>
    %218 = vector.broadcast %217 : vector<8x1xf32> to vector<8x8xf32>
    %219 = arith.mulf %214, %218 : vector<8x8xf32>
    %220 = arith.truncf %219 : vector<8x8xf32> to vector<8x8xbf16>
    %cst_90 = arith.constant dense<0.000000e+00> : vector<8x128xf32>
    %221 = tpu.matmul %220, %208, %cst_90 {dimension_numbers = #tpu.dot_dimension_numbers<[1], [0], [0], [1], [0, 0, 1, 1], [], []>} : vector<8x8xbf16>, vector<8x128xbf16>, vector<8x128xf32> -> vector<8x128xf32>
    %222 = vector.extract_strided_slice %172 {offsets = [8, 128], sizes = [8, 128], strides = [1, 1]} : vector<16x768xbf16> to vector<8x128xbf16>
    %223 = vector.extract_strided_slice %172 {offsets = [8, 384], sizes = [8, 128], strides = [1, 1]} : vector<16x768xbf16> to vector<8x128xbf16>
    %224 = vector.extract_strided_slice %172 {offsets = [8, 640], sizes = [8, 128], strides = [1, 1]} : vector<16x768xbf16> to vector<8x128xbf16>
    %cst_91 = arith.constant dense<0.000000e+00> : vector<8x8xf32>
    %225 = tpu.matmul %222, %223, %cst_91 {dimension_numbers = #tpu.dot_dimension_numbers<[1], [1], [0], [0], [0, 0, 1, 0], [], []>} : vector<8x128xbf16>, vector<8x128xbf16>, vector<8x8xf32> -> vector<8x8xf32>
    %cst_92 = arith.constant dense<0xFF800000> : vector<8xf32>
    %226 = vector.multi_reduction <maximumf>, %225, %cst_92 [1] : vector<8x8xf32> to vector<8xf32>
    %227 = vector.shape_cast %226 : vector<8xf32> to vector<8x1xf32>
    %228 = vector.broadcast %227 : vector<8x1xf32> to vector<8x8xf32>
    %229 = arith.subf %225, %228 : vector<8x8xf32>
    %230 = math.exp %229 : vector<8x8xf32>
    %cst_93 = arith.constant dense<0.000000e+00> : vector<8xf32>
    %231 = vector.multi_reduction <add>, %230, %cst_93 [1] : vector<8x8xf32> to vector<8xf32>
    %232 = vector.shape_cast %231 : vector<8xf32> to vector<8x1xf32>
    %233 = tpu.reciprocal %232 {approx = true} : vector<8x1xf32> -> vector<8x1xf32>
    %234 = vector.broadcast %233 : vector<8x1xf32> to vector<8x8xf32>
    %235 = arith.mulf %230, %234 : vector<8x8xf32>
    %236 = arith.truncf %235 : vector<8x8xf32> to vector<8x8xbf16>
    %cst_94 = arith.constant dense<0.000000e+00> : vector<8x128xf32>
    %237 = tpu.matmul %236, %224, %cst_94 {dimension_numbers = #tpu.dot_dimension_numbers<[1], [0], [0], [1], [0, 0, 1, 1], [], []>} : vector<8x8xbf16>, vector<8x128xbf16>, vector<8x128xf32> -> vector<8x128xf32>
    %238 = tpu.concatenate %221, %237 in 1 : vector<8x128xf32>, vector<8x128xf32> -> vector<8x256xf32>
    %239 = tpu.concatenate %205, %238 in 0 : vector<8x256xf32>, vector<8x256xf32> -> vector<16x256xf32>
    %240 = arith.truncf %239 : vector<16x256xf32> to vector<16x256xbf16>
    %c1_95 = arith.constant 1 : index
    %c0_96 = arith.constant 0 : index
    %c0_97 = arith.constant 0 : index
    %241 = vector.load %arg5[%c1_95, %c0_96, %c0_97] : memref<2x256x200xbf16, #tpu.memory_space<vmem>>, vector<1x256x200xbf16>
    %242 = vector.shape_cast %241 : vector<1x256x200xbf16> to vector<256x200xbf16>
    %cst_98 = arith.constant dense<0.000000e+00> : vector<16x200xf32>
    %243 = tpu.matmul %240, %242, %cst_98 {dimension_numbers = #tpu.dot_dimension_numbers<[1], [0], [0], [1], [0, 0, 1, 1], [], []>} : vector<16x256xbf16>, vector<256x200xbf16>, vector<16x200xf32> -> vector<16x200xf32>
    %c1_99 = arith.constant 1 : index
    %c0_100 = arith.constant 0 : index
    %c0_101 = arith.constant 0 : index
    %244 = vector.load %arg6[%c1_99, %c0_100, %c0_101] : memref<2x1x200xf32, #tpu.memory_space<vmem>>, vector<1x1x200xf32>
    %245 = vector.shape_cast %244 : vector<1x1x200xf32> to vector<1x200xf32>
    %246 = vector.broadcast %245 : vector<1x200xf32> to vector<16x200xf32>
    %247 = arith.addf %243, %246 : vector<16x200xf32>
    %248 = arith.addf %163, %247 : vector<16x200xf32>
    %c1_102 = arith.constant 1 : index
    %c0_103 = arith.constant 0 : index
    %c0_104 = arith.constant 0 : index
    %249 = vector.load %arg11[%c1_102, %c0_103, %c0_104] : memref<2x1x200xf32, #tpu.memory_space<vmem>>, vector<1x1x200xf32>
    %250 = vector.shape_cast %249 : vector<1x1x200xf32> to vector<1x200xf32>
    %c1_105 = arith.constant 1 : index
    %c0_106 = arith.constant 0 : index
    %c0_107 = arith.constant 0 : index
    %251 = vector.load %arg12[%c1_105, %c0_106, %c0_107] : memref<2x1x200xf32, #tpu.memory_space<vmem>>, vector<1x1x200xf32>
    %252 = vector.shape_cast %251 : vector<1x1x200xf32> to vector<1x200xf32>
    %cst_108 = arith.constant dense<0.000000e+00> : vector<16xf32>
    %253 = vector.multi_reduction <add>, %248, %cst_108 [1] : vector<16x200xf32> to vector<16xf32>
    %254 = vector.shape_cast %253 : vector<16xf32> to vector<16x1xf32>
    %cst_109 = arith.constant 2.000000e+02 : f32
    %255 = vector.broadcast %cst_109 : f32 to vector<16x1xf32>
    %256 = arith.divf %254, %255 : vector<16x1xf32>
    %257 = vector.broadcast %256 : vector<16x1xf32> to vector<16x200xf32>
    %258 = arith.subf %248, %257 : vector<16x200xf32>
    %259 = arith.mulf %258, %258 : vector<16x200xf32>
    %cst_110 = arith.constant dense<0.000000e+00> : vector<16xf32>
    %260 = vector.multi_reduction <add>, %259, %cst_110 [1] : vector<16x200xf32> to vector<16xf32>
    %261 = vector.shape_cast %260 : vector<16xf32> to vector<16x1xf32>
    %cst_111 = arith.constant 2.000000e+02 : f32
    %262 = vector.broadcast %cst_111 : f32 to vector<16x1xf32>
    %263 = arith.divf %261, %262 : vector<16x1xf32>
    %264 = vector.broadcast %256 : vector<16x1xf32> to vector<16x200xf32>
    %265 = arith.subf %248, %264 : vector<16x200xf32>
    %cst_112 = arith.constant 9.99999974E-6 : f32
    %266 = vector.broadcast %cst_112 : f32 to vector<16x1xf32>
    %267 = arith.addf %263, %266 : vector<16x1xf32>
    %268 = math.rsqrt %267 : vector<16x1xf32>
    %269 = vector.broadcast %268 : vector<16x1xf32> to vector<16x200xf32>
    %270 = arith.mulf %265, %269 : vector<16x200xf32>
    %271 = vector.broadcast %250 : vector<1x200xf32> to vector<16x200xf32>
    %272 = arith.mulf %270, %271 : vector<16x200xf32>
    %273 = vector.broadcast %252 : vector<1x200xf32> to vector<16x200xf32>
    %274 = arith.addf %272, %273 : vector<16x200xf32>
    %275 = arith.truncf %274 : vector<16x200xf32> to vector<16x200xbf16>
    %c1_113 = arith.constant 1 : index
    %c0_114 = arith.constant 0 : index
    %c0_115 = arith.constant 0 : index
    %276 = vector.load %arg7[%c1_113, %c0_114, %c0_115] : memref<2x200x200xbf16, #tpu.memory_space<vmem>>, vector<1x200x200xbf16>
    %277 = vector.shape_cast %276 : vector<1x200x200xbf16> to vector<200x200xbf16>
    %cst_116 = arith.constant dense<0.000000e+00> : vector<16x200xf32>
    %278 = tpu.matmul %275, %277, %cst_116 {dimension_numbers = #tpu.dot_dimension_numbers<[1], [0], [0], [1], [0, 0, 1, 1], [], []>} : vector<16x200xbf16>, vector<200x200xbf16>, vector<16x200xf32> -> vector<16x200xf32>
    %c1_117 = arith.constant 1 : index
    %c0_118 = arith.constant 0 : index
    %c0_119 = arith.constant 0 : index
    %279 = vector.load %arg8[%c1_117, %c0_118, %c0_119] : memref<2x1x200xf32, #tpu.memory_space<vmem>>, vector<1x1x200xf32>
    %280 = vector.shape_cast %279 : vector<1x1x200xf32> to vector<1x200xf32>
    %281 = vector.broadcast %280 : vector<1x200xf32> to vector<16x200xf32>
    %282 = arith.addf %278, %281 : vector<16x200xf32>
    %cst_120 = arith.constant 0.000000e+00 : f32
    %283 = vector.broadcast %cst_120 : f32 to vector<16x200xf32>
    %284 = arith.maximumf %282, %283 : vector<16x200xf32>
    %285 = arith.truncf %284 : vector<16x200xf32> to vector<16x200xbf16>
    %c1_121 = arith.constant 1 : index
    %c0_122 = arith.constant 0 : index
    %c0_123 = arith.constant 0 : index
    %286 = vector.load %arg9[%c1_121, %c0_122, %c0_123] : memref<2x200x200xbf16, #tpu.memory_space<vmem>>, vector<1x200x200xbf16>
    %287 = vector.shape_cast %286 : vector<1x200x200xbf16> to vector<200x200xbf16>
    %cst_124 = arith.constant dense<0.000000e+00> : vector<16x200xf32>
    %288 = tpu.matmul %285, %287, %cst_124 {dimension_numbers = #tpu.dot_dimension_numbers<[1], [0], [0], [1], [0, 0, 1, 1], [], []>} : vector<16x200xbf16>, vector<200x200xbf16>, vector<16x200xf32> -> vector<16x200xf32>
    %c1_125 = arith.constant 1 : index
    %c0_126 = arith.constant 0 : index
    %c0_127 = arith.constant 0 : index
    %289 = vector.load %arg10[%c1_125, %c0_126, %c0_127] : memref<2x1x200xf32, #tpu.memory_space<vmem>>, vector<1x1x200xf32>
    %290 = vector.shape_cast %289 : vector<1x1x200xf32> to vector<1x200xf32>
    %291 = vector.broadcast %290 : vector<1x200xf32> to vector<16x200xf32>
    %292 = arith.addf %288, %291 : vector<16x200xf32>
    %293 = arith.addf %274, %292 : vector<16x200xf32>
    %c1_128 = arith.constant 1 : index
    %c0_129 = arith.constant 0 : index
    %c0_130 = arith.constant 0 : index
    %294 = vector.load %arg13[%c1_128, %c0_129, %c0_130] : memref<2x1x200xf32, #tpu.memory_space<vmem>>, vector<1x1x200xf32>
    %295 = vector.shape_cast %294 : vector<1x1x200xf32> to vector<1x200xf32>
    %c1_131 = arith.constant 1 : index
    %c0_132 = arith.constant 0 : index
    %c0_133 = arith.constant 0 : index
    %296 = vector.load %arg14[%c1_131, %c0_132, %c0_133] : memref<2x1x200xf32, #tpu.memory_space<vmem>>, vector<1x1x200xf32>
    %297 = vector.shape_cast %296 : vector<1x1x200xf32> to vector<1x200xf32>
    %cst_134 = arith.constant dense<0.000000e+00> : vector<16xf32>
    %298 = vector.multi_reduction <add>, %293, %cst_134 [1] : vector<16x200xf32> to vector<16xf32>
    %299 = vector.shape_cast %298 : vector<16xf32> to vector<16x1xf32>
    %cst_135 = arith.constant 2.000000e+02 : f32
    %300 = vector.broadcast %cst_135 : f32 to vector<16x1xf32>
    %301 = arith.divf %299, %300 : vector<16x1xf32>
    %302 = vector.broadcast %301 : vector<16x1xf32> to vector<16x200xf32>
    %303 = arith.subf %293, %302 : vector<16x200xf32>
    %304 = arith.mulf %303, %303 : vector<16x200xf32>
    %cst_136 = arith.constant dense<0.000000e+00> : vector<16xf32>
    %305 = vector.multi_reduction <add>, %304, %cst_136 [1] : vector<16x200xf32> to vector<16xf32>
    %306 = vector.shape_cast %305 : vector<16xf32> to vector<16x1xf32>
    %cst_137 = arith.constant 2.000000e+02 : f32
    %307 = vector.broadcast %cst_137 : f32 to vector<16x1xf32>
    %308 = arith.divf %306, %307 : vector<16x1xf32>
    %309 = vector.broadcast %301 : vector<16x1xf32> to vector<16x200xf32>
    %310 = arith.subf %293, %309 : vector<16x200xf32>
    %cst_138 = arith.constant 9.99999974E-6 : f32
    %311 = vector.broadcast %cst_138 : f32 to vector<16x1xf32>
    %312 = arith.addf %308, %311 : vector<16x1xf32>
    %313 = math.rsqrt %312 : vector<16x1xf32>
    %314 = vector.broadcast %313 : vector<16x1xf32> to vector<16x200xf32>
    %315 = arith.mulf %310, %314 : vector<16x200xf32>
    %316 = vector.broadcast %295 : vector<1x200xf32> to vector<16x200xf32>
    %317 = arith.mulf %315, %316 : vector<16x200xf32>
    %318 = vector.broadcast %297 : vector<1x200xf32> to vector<16x200xf32>
    %319 = arith.addf %317, %318 : vector<16x200xf32>
    %320 = arith.truncf %319 : vector<16x200xf32> to vector<16x200xbf16>
    %c0_139 = arith.constant 0 : index
    %c0_140 = arith.constant 0 : index
    %321 = vector.load %arg15[%c0_139, %c0_140] : memref<200x9xbf16, #tpu.memory_space<vmem>>, vector<200x9xbf16>
    %cst_141 = arith.constant dense<0.000000e+00> : vector<16x9xf32>
    %322 = tpu.matmul %320, %321, %cst_141 {dimension_numbers = #tpu.dot_dimension_numbers<[1], [0], [0], [1], [0, 0, 1, 1], [], []>} : vector<16x200xbf16>, vector<200x9xbf16>, vector<16x9xf32> -> vector<16x9xf32>
    %c0_142 = arith.constant 0 : index
    %c0_143 = arith.constant 0 : index
    %323 = vector.load %arg16[%c0_142, %c0_143] : memref<1x9xf32, #tpu.memory_space<vmem>>, vector<1x9xf32>
    %324 = vector.broadcast %323 : vector<1x9xf32> to vector<16x9xf32>
    %325 = arith.addf %322, %324 : vector<16x9xf32>
    %cst_144 = arith.constant dense<0xFF800000> : vector<16xf32>
    %326 = vector.multi_reduction <maximumf>, %325, %cst_144 [1] : vector<16x9xf32> to vector<16xf32>
    %327 = vector.shape_cast %326 : vector<16xf32> to vector<16x1xf32>
    %328 = vector.broadcast %327 : vector<16x1xf32> to vector<16x9xf32>
    %329 = arith.subf %325, %328 : vector<16x9xf32>
    %330 = math.exp %329 : vector<16x9xf32>
    %cst_145 = arith.constant dense<0.000000e+00> : vector<16xf32>
    %331 = vector.multi_reduction <add>, %330, %cst_145 [1] : vector<16x9xf32> to vector<16xf32>
    %332 = vector.shape_cast %331 : vector<16xf32> to vector<16x1xf32>
    %333 = vector.broadcast %332 : vector<16x1xf32> to vector<16x9xf32>
    %334 = arith.divf %330, %333 : vector<16x9xf32>
    %c0_146 = arith.constant 0 : index
    %c0_147 = arith.constant 0 : index
    %335 = vector.load %arg17[%c0_146, %c0_147] : memref<16x9xf32, #tpu.memory_space<vmem>>, vector<16x9xf32>
    tpu.vector_store %arg17[%c0_146, %c0_147], %334 {strides = array<i32>} : memref<16x9xf32, #tpu.memory_space<vmem>>, vector<16x9xf32>,
    return
  }
}

</mosaic_0001>

<llo_original>
// kernel: ner_forward.1
$region0: #{ner_forward.1}
  #allocation0 [shape = 'u32[]', space=smem, size = 0x4, offset = 0x4, fixed_abs, tag = 'smem constant byte address 0x4 - core index']
  #allocation1 [shape = 'u32[144,128]{1,0:T(1,128)}', space=vmem, size = 0x12000, scoped, tag = 'internal scratch']
  %s0 = inlined_call_operand.vmem [shape: bf16[16,768], index: 0, kind: input, shape index: {}]
  %s1 = inlined_call_operand.vmem [shape: bf16[768,200], index: 1, kind: input, shape index: {}]
  %s2 = inlined_call_operand.vmem [shape: f32[1,200], index: 2, kind: input, shape index: {}]
  %s3 = inlined_call_operand.vmem [shape: bf16[2,200,768], index: 3, kind: input, shape index: {}]
  %s4 = inlined_call_operand.vmem [shape: f32[2,1,768], index: 4, kind: input, shape index: {}]
  %s5 = inlined_call_operand.vmem [shape: bf16[2,256,200], index: 5, kind: input, shape index: {}]
  %s6 = inlined_call_operand.vmem [shape: f32[2,1,200], index: 6, kind: input, shape index: {}]
  %s7 = inlined_call_operand.vmem [shape: bf16[2,200,200], index: 7, kind: input, shape index: {}]
  %s8 = inlined_call_operand.vmem [shape: f32[2,1,200], index: 8, kind: input, shape index: {}]
  %s9 = inlined_call_operand.hbm [shape: bf16[2,200,200], index: 9, kind: input, shape index: {}]
  %s10 = inlined_call_operand.vmem [shape: f32[2,1,200], index: 10, kind: input, shape index: {}]
  %s11 = inlined_call_operand.vmem [shape: f32[2,1,200], index: 11, kind: input, shape index: {}]
  %s12 = inlined_call_operand.vmem [shape: f32[2,1,200], index: 12, kind: input, shape index: {}]
  %s13 = inlined_call_operand.vmem [shape: f32[2,1,200], index: 13, kind: input, shape index: {}]
  %s14 = inlined_call_operand.vmem [shape: f32[2,1,200], index: 14, kind: input, shape index: {}]
  %s15 = inlined_call_operand.vmem [shape: bf16[200,9], index: 15, kind: input, shape index: {}]
  %s16 = inlined_call_operand.vmem [shape: f32[1,9], index: 16, kind: input, shape index: {}]
  %s17 = inlined_call_operand.vmem [shape: f32[16,9], index: 17, kind: output, shape index: {}]
  %s18 = sld [smem:[#allocation0]]
  $region82: #{ner_forward.1} parent=0
    _
  %s20 = ssub.s32 1, %s18
  %s21 = scalar_select 0, %s20, %s18
  $region1: #{ner_forward.1} parent=0
    #allocation2 [shape = 'u8[204800]{0}', space=vmem, size = 0x32000, scoped, tag = 'input window, operand 9, single buffered']
    #allocation3 [shape = 's32[1]{0}', space=sflag, size = 0x4, scoped, tag = 'scoped memory for ner_forward.1']
    %22 = vsyncpa [#allocation3], 0
    // Predicated region
    $region2: #{ner_forward.1} parent=1 // pred_check
      _
    $region3: #{ner_forward.1} parent=1 // pred_check_branch
      %24 = sbr.rel (0) target = $region5
    $region4: #{ner_forward.1} parent=1 // pred_region
      _
    $region5: #{ner_forward.1} parent=1 // pred_fallthru
      _
    // Predicated region
    $region6: #{ner_forward.1} parent=1 // pred_check
      _
    $region7: #{ner_forward.1} parent=1 // pred_check_branch
      %26 = sbr.rel (0) target = $region9
    $region8: #{ner_forward.1} parent=1 // pred_region
      _
    $region9: #{ner_forward.1} parent=1 // pred_fallthru
      _
    // Predicated region
    $region10: #{ner_forward.1} parent=1 // pred_check
      _
    $region11: #{ner_forward.1} parent=1 // pred_check_branch
      %28 = sbr.rel (0) target = $region13
    $region12: #{ner_forward.1} parent=1 // pred_region
      _
    $region13: #{ner_forward.1} parent=1 // pred_fallthru
      _
    // Predicated region
    $region14: #{ner_forward.1} parent=1 // pred_check
      _
    $region15: #{ner_forward.1} parent=1 // pred_check_branch
      %30 = sbr.rel (0) target = $region17
    $region16: #{ner_forward.1} parent=1 // pred_region
      _
    $region17: #{ner_forward.1} parent=1 // pred_fallthru
      _
    // Predicated region
    $region18: #{ner_forward.1} parent=1 // pred_check
      _
    $region19: #{ner_forward.1} parent=1 // pred_check_branch
      %32 = sbr.rel (0) target = $region21
    $region20: #{ner_forward.1} parent=1 // pred_region
      _
    $region21: #{ner_forward.1} parent=1 // pred_fallthru
      _
    // Predicated region
    $region22: #{ner_forward.1} parent=1 // pred_check
      _
    $region23: #{ner_forward.1} parent=1 // pred_check_branch
      %34 = sbr.rel (0) target = $region25
    $region24: #{ner_forward.1} parent=1 // pred_region
      _
    $region25: #{ner_forward.1} parent=1 // pred_fallthru
      _
    // Predicated region
    $region26: #{ner_forward.1} parent=1 // pred_check
      _
    $region27: #{ner_forward.1} parent=1 // pred_check_branch
      %36 = sbr.rel (0) target = $region29
    $region28: #{ner_forward.1} parent=1 // pred_region
      _
    $region29: #{ner_forward.1} parent=1 // pred_fallthru
      _
    // Predicated region
    $region30: #{ner_forward.1} parent=1 // pred_check
      _
    $region31: #{ner_forward.1} parent=1 // pred_check_branch
      %38 = sbr.rel (0) target = $region33
    $region32: #{ner_forward.1} parent=1 // pred_region
      _
    $region33: #{ner_forward.1} parent=1 // pred_fallthru
      _
    // Predicated region
    $region34: #{ner_forward.1} parent=1 // pred_check
      _
    $region35: #{ner_forward.1} parent=1 // pred_check_branch
      %40 = sbr.rel (0) target = $region37
    $region36: #{ner_forward.1} parent=1 // pred_region
      _
    $region37: #{ner_forward.1} parent=1 // pred_fallthru
      _
    // Predicated region
    $region38: #{ner_forward.1} parent=1 // pred_check
      _
    $region39: #{ner_forward.1} parent=1 // pred_check_branch
      %42 = sbr.rel (0) target = $region41
    $region40: #{ner_forward.1} parent=1 // pred_region
      %s44 = ssub.s32 6400, 6400
      %45 = vsyncadd [#allocation3], %s44
      %s46 = sshll.u32 [#allocation2], 4
      %s47 = int_to_ptr.vmem [resolvable:$true] %s46
      %52 = dma.hbm_to_vmem [thread:$0]  %s9, 6400, %s47, [#allocation3], 128, 128, 8
    $region41: #{ner_forward.1} parent=1 // pred_fallthru
      _
    // Predicated region
    $region42: #{ner_forward.1} parent=1 // pred_check
      _
    $region43: #{ner_forward.1} parent=1 // pred_check_branch
      %54 = sbr.rel (0) target = $region45
    $region44: #{ner_forward.1} parent=1 // pred_region
      _
    $region45: #{ner_forward.1} parent=1 // pred_fallthru
      _
    // Predicated region
    $region46: #{ner_forward.1} parent=1 // pred_check
      _
    $region47: #{ner_forward.1} parent=1 // pred_check_branch
      %56 = sbr.rel (0) target = $region49
    $region48: #{ner_forward.1} parent=1 // pred_region
      _
    $region49: #{ner_forward.1} parent=1 // pred_fallthru
      _
    // Predicated region
    $region50: #{ner_forward.1} parent=1 // pred_check
      _
    $region51: #{ner_forward.1} parent=1 // pred_check_branch
      %58 = sbr.rel (0) target = $region53
    $region52: #{ner_forward.1} parent=1 // pred_region
      _
    $region53: #{ner_forward.1} parent=1 // pred_fallthru
      _
    // Predicated region
    $region54: #{ner_forward.1} parent=1 // pred_check
      _
    $region55: #{ner_forward.1} parent=1 // pred_check_branch
      %60 = sbr.rel (0) target = $region57
    $region56: #{ner_forward.1} parent=1 // pred_region
      _
    $region57: #{ner_forward.1} parent=1 // pred_fallthru
      _
    // Predicated region
    $region58: #{ner_forward.1} parent=1 // pred_check
      _
    $region59: #{ner_forward.1} parent=1 // pred_check_branch
      %62 = sbr.rel (0) target = $region61
    $region60: #{ner_forward.1} parent=1 // pred_region
      _
    $region61: #{ner_forward.1} parent=1 // pred_fallthru
      _
    // Predicated region
    $region62: #{ner_forward.1} parent=1 // pred_check
      _
    $region63: #{ner_forward.1} parent=1 // pred_check_branch
      %64 = sbr.rel (0) target = $region65
    $region64: #{ner_forward.1} parent=1 // pred_region
      _
    $region65: #{ner_forward.1} parent=1 // pred_fallthru
      _
    // Predicated region
    $region66: #{ner_forward.1} parent=1 // pred_check
      _
    $region67: #{ner_forward.1} parent=1 // pred_check_branch
      %66 = sbr.rel (0) target = $region69
    $region68: #{ner_forward.1} parent=1 // pred_region
      _
    $region69: #{ner_forward.1} parent=1 // pred_fallthru
      _
    // Predicated region
    $region70: #{ner_forward.1} parent=1 // pred_check
      _
    $region71: #{ner_forward.1} parent=1 // pred_check_branch
      %68 = sbr.rel (0) target = $region73
    $region72: #{ner_forward.1} parent=1 // pred_region
      %69 = dma.done [#allocation3], 6400
    $region73: #{ner_forward.1} parent=1 // pred_fallthru
      _
    %v71 = vld [vmem:[%s0] sm:$0xff]
    %v72 = vld [vmem:[%s0 + $0x8] sm:$0xff]
    %v73 = vld [vmem:[%s0 + $0x10] sm:$0xff]
    %v74 = vld [vmem:[%s0 + $0x18] sm:$0xff]
    %v75 = vld [vmem:[%s0 + $0x20] sm:$0xff]
    %v76 = vld [vmem:[%s0 + $0x28] sm:$0xff]
    %v77 = vld [vmem:[%s1] sm:$0xff]
    %v78 = vld [vmem:[%s1 + $0x8] sm:$0xff]
    %v79 = vld [vmem:[%s1 + $0x10] sm:$0xff]
    %v80 = vld [vmem:[%s1 + $0x18] sm:$0xff]
    %v81 = vld [vmem:[%s1 + $0x20] sm:$0xff]
    %v82 = vld [vmem:[%s1 + $0x28] sm:$0xff]
    %v83 = vld [vmem:[%s1 + $0x30] sm:$0xff]
    %v84 = vld [vmem:[%s1 + $0x38] sm:$0xff]
    %v85 = vld [vmem:[%s1 + $0x40] sm:$0xff]
    %v86 = vld [vmem:[%s1 + $0x48] sm:$0xff]
    %v87 = vld [vmem:[%s1 + $0x50] sm:$0xff]
    %v88 = vld [vmem:[%s1 + $0x58] sm:$0xff]
    %v89 = vld [vmem:[%s1 + $0x60] sm:$0xff]
    %v90 = vld [vmem:[%s1 + $0x68] sm:$0xff]
    %v91 = vld [vmem:[%s1 + $0x70] sm:$0xff]
    %v92 = vld [vmem:[%s1 + $0x78] sm:$0xff]
    %v93 = vld [vmem:[%s1 + $0x80] sm:$0xff]
    %v94 = vld [vmem:[%s1 + $0x88] sm:$0xff]
    %v95 = vld [vmem:[%s1 + $0x90] sm:$0xff]
    %v96 = vld [vmem:[%s1 + $0x98] sm:$0xff]
    %v97 = vld [vmem:[%s1 + $0xa0] sm:$0xff]
    %v98 = vld [vmem:[%s1 + $0xa8] sm:$0xff]
    %v99 = vld [vmem:[%s1 + $0xb0] sm:$0xff]
    %v100 = vld [vmem:[%s1 + $0xb8] sm:$0xff]
    %v101 = vld [vmem:[%s1 + $0xc0] sm:$0xff]
    %v102 = vld [vmem:[%s1 + $0xc8] sm:$0xff]
    %v103 = vld [vmem:[%s1 + $0xd0] sm:$0xff]
    %v104 = vld [vmem:[%s1 + $0xd8] sm:$0xff]
    %v105 = vld [vmem:[%s1 + $0xe0] sm:$0xff]
    %v106 = vld [vmem:[%s1 + $0xe8] sm:$0xff]
    %v107 = vld [vmem:[%s1 + $0xf0] sm:$0xff]
    %v108 = vld [vmem:[%s1 + $0xf8] sm:$0xff]
    %v109 = vld [vmem:[%s1 + $0x100] sm:$0xff]
    %v110 = vld [vmem:[%s1 + $0x108] sm:$0xff]
    %v111 = vld [vmem:[%s1 + $0x110] sm:$0xff]
    %v112 = vld [vmem:[%s1 + $0x118] sm:$0xff]
    %v113 = vld [vmem:[%s1 + $0x120] sm:$0xff]
    %v114 = vld [vmem:[%s1 + $0x128] sm:$0xff]
    %v115 = vld [vmem:[%s1 + $0x130] sm:$0xff]
    %v116 = vld [vmem:[%s1 + $0x138] sm:$0xff]
    %v117 = vld [vmem:[%s1 + $0x140] sm:$0xff]
    %v118 = vld [vmem:[%s1 + $0x148] sm:$0xff]
    %v119 = vld [vmem:[%s1 + $0x150] sm:$0xff]
    %v120 = vld [vmem:[%s1 + $0x158] sm:$0xff]
    %v121 = vld [vmem:[%s1 + $0x160] sm:$0xff]
    %v122 = vld [vmem:[%s1 + $0x168] sm:$0xff]
    %v123 = vld [vmem:[%s1 + $0x170] sm:$0xff]
    %v124 = vld [vmem:[%s1 + $0x178] sm:$0xff]
    %v125 = vld [vmem:[%s1 + $0x180] sm:$0xff]
    %v126 = vld [vmem:[%s1 + $0x188] sm:$0xff]
    %v127 = vld [vmem:[%s1 + $0x190] sm:$0xff]
    %v128 = vld [vmem:[%s1 + $0x198] sm:$0xff]
    %v129 = vld [vmem:[%s1 + $0x1a0] sm:$0xff]
    %v130 = vld [vmem:[%s1 + $0x1a8] sm:$0xff]
    %v131 = vld [vmem:[%s1 + $0x1b0] sm:$0xff]
    %v132 = vld [vmem:[%s1 + $0x1b8] sm:$0xff]
    %v133 = vld [vmem:[%s1 + $0x1c0] sm:$0xff]
    %v134 = vld [vmem:[%s1 + $0x1c8] sm:$0xff]
    %v135 = vld [vmem:[%s1 + $0x1d0] sm:$0xff]
    %v136 = vld [vmem:[%s1 + $0x1d8] sm:$0xff]
    %v137 = vld [vmem:[%s1 + $0x1e0] sm:$0xff]
    %v138 = vld [vmem:[%s1 + $0x1e8] sm:$0xff]
    %v139 = vld [vmem:[%s1 + $0x1f0] sm:$0xff]
    %v140 = vld [vmem:[%s1 + $0x1f8] sm:$0xff]
    %v141 = vld [vmem:[%s1 + $0x200] sm:$0xff]
    %v142 = vld [vmem:[%s1 + $0x208] sm:$0xff]
    %v143 = vld [vmem:[%s1 + $0x210] sm:$0xff]
    %v144 = vld [vmem:[%s1 + $0x218] sm:$0xff]
    %v145 = vld [vmem:[%s1 + $0x220] sm:$0xff]
    %v146 = vld [vmem:[%s1 + $0x228] sm:$0xff]
    %v147 = vld [vmem:[%s1 + $0x230] sm:$0xff]
    %v148 = vld [vmem:[%s1 + $0x238] sm:$0xff]
    %v149 = vld [vmem:[%s1 + $0x240] sm:$0xff]
    %v150 = vld [vmem:[%s1 + $0x248] sm:$0xff]
    %v151 = vld [vmem:[%s1 + $0x250] sm:$0xff]
    %v152 = vld [vmem:[%s1 + $0x258] sm:$0xff]
    %v153 = vld [vmem:[%s1 + $0x260] sm:$0xff]
    %v154 = vld [vmem:[%s1 + $0x268] sm:$0xff]
    %v155 = vld [vmem:[%s1 + $0x270] sm:$0xff]
    %v156 = vld [vmem:[%s1 + $0x278] sm:$0xff]
    %v157 = vld [vmem:[%s1 + $0x280] sm:$0xff]
    %v158 = vld [vmem:[%s1 + $0x288] sm:$0xff]
    %v159 = vld [vmem:[%s1 + $0x290] sm:$0xff]
    %v160 = vld [vmem:[%s1 + $0x298] sm:$0xff]
    %v161 = vld [vmem:[%s1 + $0x2a0] sm:$0xff]
    %v162 = vld [vmem:[%s1 + $0x2a8] sm:$0xff]
    %v163 = vld [vmem:[%s1 + $0x2b0] sm:$0xff]
    %v164 = vld [vmem:[%s1 + $0x2b8] sm:$0xff]
    %v165 = vld [vmem:[%s1 + $0x2c0] sm:$0xff]
    %v166 = vld [vmem:[%s1 + $0x2c8] sm:$0xff]
    %v167 = vld [vmem:[%s1 + $0x2d0] sm:$0xff]
    %v168 = vld [vmem:[%s1 + $0x2d8] sm:$0xff]
    %v169 = vld [vmem:[%s1 + $0x2e0] sm:$0xff]
    %v170 = vld [vmem:[%s1 + $0x2e8] sm:$0xff]
    %v171 = vld [vmem:[%s1 + $0x2f0] sm:$0xff]
    %v172 = vld [vmem:[%s1 + $0x2f8] sm:$0xff]
    %v173 = vld [vmem:[%s2] sm:$0x3]
    %v175 = vlaneseq
    %v176 = vshrl.u32 %v175, 7
    %v177 = vsub.s32 0, %v176
    %v178 = vrot.slane %v173, %v177
    %v179 = vlaneseq
    %v180 = vshrl.u32 %v179, 7
    %v181 = vsub.s32 1, %v180
    %v182 = vrot.slane %v173, %v181
    %v191 = vunpack.c.l.b16 %v71
    %v192 = vunpack.c.h.b16 %v71
    %v193 = vunpack.c.l.b16 %v72
    %v194 = vunpack.c.h.b16 %v72
    %v195 = vunpack.c.l.b16 %v73
    %v196 = vunpack.c.h.b16 %v73
    %v197 = vunpack.c.l.b16 %v74
    %v198 = vunpack.c.h.b16 %v74
    %v199 = vunpack.c.l.b16 %v75
    %v200 = vunpack.c.h.b16 %v75
    %v201 = vunpack.c.l.b16 %v76
    %v202 = vunpack.c.h.b16 %v76
    %v203 = vpack.c.b16 %v197, %v191
    %v204 = vpack.c.b16 %v198, %v192
    %v205 = vpack.c.b16 %v199, %v193
    %v206 = vpack.c.b16 %v200, %v194
    %v207 = vpack.c.b16 %v201, %v195
    %v208 = vpack.c.b16 %v202, %v196
    %v311 = vunpack.c.l.b16 %v77
    %v312 = vunpack.c.h.b16 %v77
    %v313 = vunpack.c.l.b16 %v78
    %v314 = vunpack.c.h.b16 %v78
    %v315 = vunpack.c.l.b16 %v79
    %v316 = vunpack.c.h.b16 %v79
    %v317 = vunpack.c.l.b16 %v80
    %v318 = vunpack.c.h.b16 %v80
    %v319 = vunpack.c.l.b16 %v81
    %v320 = vunpack.c.h.b16 %v81
    %v321 = vunpack.c.l.b16 %v82
    %v322 = vunpack.c.h.b16 %v82
    %v323 = vunpack.c.l.b16 %v83
    %v324 = vunpack.c.h.b16 %v83
    %v325 = vunpack.c.l.b16 %v84
    %v326 = vunpack.c.h.b16 %v84
    %v327 = vunpack.c.l.b16 %v85
    %v328 = vunpack.c.h.b16 %v85
    %v329 = vunpack.c.l.b16 %v86
    %v330 = vunpack.c.h.b16 %v86
    %v331 = vunpack.c.l.b16 %v87
    %v332 = vunpack.c.h.b16 %v87
    %v333 = vunpack.c.l.b16 %v88
    %v334 = vunpack.c.h.b16 %v88
    %v335 = vunpack.c.l.b16 %v89
    %v336 = vunpack.c.h.b16 %v89
    %v337 = vunpack.c.l.b16 %v90
    %v338 = vunpack.c.h.b16 %v90
    %v339 = vunpack.c.l.b16 %v91
    %v340 = vunpack.c.h.b16 %v91
    %v341 = vunpack.c.l.b16 %v92
    %v342 = vunpack.c.h.b16 %v92
    %v343 = vunpack.c.l.b16 %v93
    %v344 = vunpack.c.h.b16 %v93
    %v345 = vunpack.c.l.b16 %v94
    %v346 = vunpack.c.h.b16 %v94
    %v347 = vunpack.c.l.b16 %v95
    %v348 = vunpack.c.h.b16 %v95
    %v349 = vunpack.c.l.b16 %v96
    %v350 = vunpack.c.h.b16 %v96
    %v351 = vunpack.c.l.b16 %v97
    %v352 = vunpack.c.h.b16 %v97
    %v353 = vunpack.c.l.b16 %v98
    %v354 = vunpack.c.h.b16 %v98
    %v355 = vunpack.c.l.b16 %v99
    %v356 = vunpack.c.h.b16 %v99
    %v357 = vunpack.c.l.b16 %v100
    %v358 = vunpack.c.h.b16 %v100
    %v359 = vunpack.c.l.b16 %v101
    %v360 = vunpack.c.h.b16 %v101
    %v361 = vunpack.c.l.b16 %v102
    %v362 = vunpack.c.h.b16 %v102
    %v363 = vunpack.c.l.b16 %v103
    %v364 = vunpack.c.h.b16 %v103
    %v365 = vunpack.c.l.b16 %v104
    %v366 = vunpack.c.h.b16 %v104
    %v367 = vunpack.c.l.b16 %v105
    %v368 = vunpack.c.h.b16 %v105
    %v369 = vunpack.c.l.b16 %v106
    %v370 = vunpack.c.h.b16 %v106
    %v371 = vunpack.c.l.b16 %v107
    %v372 = vunpack.c.h.b16 %v107
    %v373 = vunpack.c.l.b16 %v108
    %v374 = vunpack.c.h.b16 %v108
    %v375 = vunpack.c.l.b16 %v109
    %v376 = vunpack.c.h.b16 %v109
    %v377 = vunpack.c.l.b16 %v110
    %v378 = vunpack.c.h.b16 %v110
    %v379 = vunpack.c.l.b16 %v111
    %v380 = vunpack.c.h.b16 %v111
    %v381 = vunpack.c.l.b16 %v112
    %v382 = vunpack.c.h.b16 %v112
    %v383 = vunpack.c.l.b16 %v113
    %v384 = vunpack.c.h.b16 %v113
    %v385 = vunpack.c.l.b16 %v114
    %v386 = vunpack.c.h.b16 %v114
    %v387 = vunpack.c.l.b16 %v115
    %v388 = vunpack.c.h.b16 %v115
    %v389 = vunpack.c.l.b16 %v116
    %v390 = vunpack.c.h.b16 %v116
    %v391 = vunpack.c.l.b16 %v117
    %v392 = vunpack.c.h.b16 %v117
    %v393 = vunpack.c.l.b16 %v118
    %v394 = vunpack.c.h.b16 %v118
    %v395 = vunpack.c.l.b16 %v119
    %v396 = vunpack.c.h.b16 %v119
    %v397 = vunpack.c.l.b16 %v120
    %v398 = vunpack.c.h.b16 %v120
    %v399 = vunpack.c.l.b16 %v121
    %v400 = vunpack.c.h.b16 %v121
    %v401 = vunpack.c.l.b16 %v122
    %v402 = vunpack.c.h.b16 %v122
    %v403 = vunpack.c.l.b16 %v123
    %v404 = vunpack.c.h.b16 %v123
    %v405 = vunpack.c.l.b16 %v124
    %v406 = vunpack.c.h.b16 %v124
    %v407 = vunpack.c.l.b16 %v125
    %v408 = vunpack.c.h.b16 %v125
    %v409 = vunpack.c.l.b16 %v126
    %v410 = vunpack.c.h.b16 %v126
    %v411 = vunpack.c.l.b16 %v127
    %v412 = vunpack.c.h.b16 %v127
    %v413 = vunpack.c.l.b16 %v128
    %v414 = vunpack.c.h.b16 %v128
    %v415 = vunpack.c.l.b16 %v129
    %v416 = vunpack.c.h.b16 %v129
    %v417 = vunpack.c.l.b16 %v130
    %v418 = vunpack.c.h.b16 %v130
    %v419 = vunpack.c.l.b16 %v131
    %v420 = vunpack.c.h.b16 %v131
    %v421 = vunpack.c.l.b16 %v132
    %v422 = vunpack.c.h.b16 %v132
    %v423 = vunpack.c.l.b16 %v133
    %v424 = vunpack.c.h.b16 %v133
    %v425 = vunpack.c.l.b16 %v134
    %v426 = vunpack.c.h.b16 %v134
    %v427 = vunpack.c.l.b16 %v135
    %v428 = vunpack.c.h.b16 %v135
    %v429 = vunpack.c.l.b16 %v136
    %v430 = vunpack.c.h.b16 %v136
    %v431 = vunpack.c.l.b16 %v137
    %v432 = vunpack.c.h.b16 %v137
    %v433 = vunpack.c.l.b16 %v138
    %v434 = vunpack.c.h.b16 %v138
    %v435 = vunpack.c.l.b16 %v139
    %v436 = vunpack.c.h.b16 %v139
    %v437 = vunpack.c.l.b16 %v140
    %v438 = vunpack.c.h.b16 %v140
    %v439 = vunpack.c.l.b16 %v141
    %v440 = vunpack.c.h.b16 %v141
    %v441 = vunpack.c.l.b16 %v142
    %v442 = vunpack.c.h.b16 %v142
    %v443 = vunpack.c.l.b16 %v143
    %v444 = vunpack.c.h.b16 %v143
    %v445 = vunpack.c.l.b16 %v144
    %v446 = vunpack.c.h.b16 %v144
    %v447 = vunpack.c.l.b16 %v145
    %v448 = vunpack.c.h.b16 %v145
    %v449 = vunpack.c.l.b16 %v146
    %v450 = vunpack.c.h.b16 %v146
    %v451 = vunpack.c.l.b16 %v147
    %v452 = vunpack.c.h.b16 %v147
    %v453 = vunpack.c.l.b16 %v148
    %v454 = vunpack.c.h.b16 %v148
    %v455 = vunpack.c.l.b16 %v149
    %v456 = vunpack.c.h.b16 %v149
    %v457 = vunpack.c.l.b16 %v150
    %v458 = vunpack.c.h.b16 %v150
    %v459 = vunpack.c.l.b16 %v151
    %v460 = vunpack.c.h.b16 %v151
    %v461 = vunpack.c.l.b16 %v152
    %v462 = vunpack.c.h.b16 %v152
    %v463 = vunpack.c.l.b16 %v153
    %v464 = vunpack.c.h.b16 %v153
    %v465 = vunpack.c.l.b16 %v154
    %v466 = vunpack.c.h.b16 %v154
    %v467 = vunpack.c.l.b16 %v155
    %v468 = vunpack.c.h.b16 %v155
    %v469 = vunpack.c.l.b16 %v156
    %v470 = vunpack.c.h.b16 %v156
    %v471 = vunpack.c.l.b16 %v157
    %v472 = vunpack.c.h.b16 %v157
    %v473 = vunpack.c.l.b16 %v158
    %v474 = vunpack.c.h.b16 %v158
    %v475 = vunpack.c.l.b16 %v159
    %v476 = vunpack.c.h.b16 %v159
    %v477 = vunpack.c.l.b16 %v160
    %v478 = vunpack.c.h.b16 %v160
    %v479 = vunpack.c.l.b16 %v161
    %v480 = vunpack.c.h.b16 %v161
    %v481 = vunpack.c.l.b16 %v162
    %v482 = vunpack.c.h.b16 %v162
    %v483 = vunpack.c.l.b16 %v163
    %v484 = vunpack.c.h.b16 %v163
    %v485 = vunpack.c.l.b16 %v164
    %v486 = vunpack.c.h.b16 %v164
    %v487 = vunpack.c.l.b16 %v165
    %v488 = vunpack.c.h.b16 %v165
    %v489 = vunpack.c.l.b16 %v166
    %v490 = vunpack.c.h.b16 %v166
    %v491 = vunpack.c.l.b16 %v167
    %v492 = vunpack.c.h.b16 %v167
    %v493 = vunpack.c.l.b16 %v168
    %v494 = vunpack.c.h.b16 %v168
    %v495 = vunpack.c.l.b16 %v169
    %v496 = vunpack.c.h.b16 %v169
    %v497 = vunpack.c.l.b16 %v170
    %v498 = vunpack.c.h.b16 %v170
    %v499 = vunpack.c.l.b16 %v171
    %v500 = vunpack.c.h.b16 %v171
    %v501 = vunpack.c.l.b16 %v172
    %v502 = vunpack.c.h.b16 %v172
    %v503 = vpack.c.b16 %v313, %v311
    %v504 = vpack.c.b16 %v314, %v312
    %v505 = vpack.c.b16 %v317, %v315
    %v506 = vpack.c.b16 %v318, %v316
    %v507 = vpack.c.b16 %v321, %v319
    %v508 = vpack.c.b16 %v322, %v320
    %v509 = vpack.c.b16 %v325, %v323
    %v510 = vpack.c.b16 %v326, %v324
    %v511 = vpack.c.b16 %v329, %v327
    %v512 = vpack.c.b16 %v330, %v328
    %v513 = vpack.c.b16 %v333, %v331
    %v514 = vpack.c.b16 %v334, %v332
    %v515 = vpack.c.b16 %v337, %v335
    %v516 = vpack.c.b16 %v338, %v336
    %v517 = vpack.c.b16 %v341, %v339
    %v518 = vpack.c.b16 %v342, %v340
    %v519 = vpack.c.b16 %v345, %v343
    %v520 = vpack.c.b16 %v346, %v344
    %v521 = vpack.c.b16 %v349, %v347
    %v522 = vpack.c.b16 %v350, %v348
    %v523 = vpack.c.b16 %v353, %v351
    %v524 = vpack.c.b16 %v354, %v352
    %v525 = vpack.c.b16 %v357, %v355
    %v526 = vpack.c.b16 %v358, %v356
    %v527 = vpack.c.b16 %v361, %v359
    %v528 = vpack.c.b16 %v362, %v360
    %v529 = vpack.c.b16 %v365, %v363
    %v530 = vpack.c.b16 %v366, %v364
    %v531 = vpack.c.b16 %v369, %v367
    %v532 = vpack.c.b16 %v370, %v368
    %v533 = vpack.c.b16 %v373, %v371
    %v534 = vpack.c.b16 %v374, %v372
    %v535 = vpack.c.b16 %v377, %v375
    %v536 = vpack.c.b16 %v378, %v376
    %v537 = vpack.c.b16 %v381, %v379
    %v538 = vpack.c.b16 %v382, %v380
    %v539 = vpack.c.b16 %v385, %v383
    %v540 = vpack.c.b16 %v386, %v384
    %v541 = vpack.c.b16 %v389, %v387
    %v542 = vpack.c.b16 %v390, %v388
    %v543 = vpack.c.b16 %v393, %v391
    %v544 = vpack.c.b16 %v394, %v392
    %v545 = vpack.c.b16 %v397, %v395
    %v546 = vpack.c.b16 %v398, %v396
    %v547 = vpack.c.b16 %v401, %v399
    %v548 = vpack.c.b16 %v402, %v400
    %v549 = vpack.c.b16 %v405, %v403
    %v550 = vpack.c.b16 %v406, %v404
    %v551 = vpack.c.b16 %v409, %v407
    %v552 = vpack.c.b16 %v410, %v408
    %v553 = vpack.c.b16 %v413, %v411
    %v554 = vpack.c.b16 %v414, %v412
    %v555 = vpack.c.b16 %v417, %v415
    %v556 = vpack.c.b16 %v418, %v416
    %v557 = vpack.c.b16 %v421, %v419
    %v558 = vpack.c.b16 %v422, %v420
    %v559 = vpack.c.b16 %v425, %v423
    %v560 = vpack.c.b16 %v426, %v424
    %v561 = vpack.c.b16 %v429, %v427
    %v562 = vpack.c.b16 %v430, %v428
    %v563 = vpack.c.b16 %v433, %v431
    %v564 = vpack.c.b16 %v434, %v432
    %v565 = vpack.c.b16 %v437, %v435
    %v566 = vpack.c.b16 %v438, %v436
    %v567 = vpack.c.b16 %v441, %v439
    %v568 = vpack.c.b16 %v442, %v440
    %v569 = vpack.c.b16 %v445, %v443
    %v570 = vpack.c.b16 %v446, %v444
    %v571 = vpack.c.b16 %v449, %v447
    %v572 = vpack.c.b16 %v450, %v448
    %v573 = vpack.c.b16 %v453, %v451
    %v574 = vpack.c.b16 %v454, %v452
    %v575 = vpack.c.b16 %v457, %v455
    %v576 = vpack.c.b16 %v458, %v456
    %v577 = vpack.c.b16 %v461, %v459
    %v578 = vpack.c.b16 %v462, %v460
    %v579 = vpack.c.b16 %v465, %v463
    %v580 = vpack.c.b16 %v466, %v464
    %v581 = vpack.c.b16 %v469, %v467
    %v582 = vpack.c.b16 %v470, %v468
    %v583 = vpack.c.b16 %v473, %v471
    %v584 = vpack.c.b16 %v474, %v472
    %v585 = vpack.c.b16 %v477, %v475
    %v586 = vpack.c.b16 %v478, %v476
    %v587 = vpack.c.b16 %v481, %v479
    %v588 = vpack.c.b16 %v482, %v480
    %v589 = vpack.c.b16 %v485, %v483
    %v590 = vpack.c.b16 %v486, %v484
    %v591 = vpack.c.b16 %v489, %v487
    %v592 = vpack.c.b16 %v490, %v488
    %v593 = vpack.c.b16 %v493, %v491
    %v594 = vpack.c.b16 %v494, %v492
    %v595 = vpack.c.b16 %v497, %v495
    %v596 = vpack.c.b16 %v498, %v496
    %v597 = vpack.c.b16 %v501, %v499
    %v598 = vpack.c.b16 %v502, %v500
    %695 = vmatprep.subr.bf16.mxu0 %v504
    %696 = vmatpush1.bf16.msra.mxu0 %v503
    %697 = vmatprep.subr.bf16.mxu0 %v506
    %698 = vmatpush1.bf16.msra.mxu0 %v505
    %699 = vmatprep.subr.bf16.mxu0 %v508
    %700 = vmatpush1.bf16.msra.mxu0 %v507
    %701 = vmatprep.subr.bf16.mxu0 %v510
    %702 = vmatpush1.bf16.msra.mxu0 %v509
    %703 = vmatprep.subr.bf16.mxu0 %v512
    %704 = vmatpush1.bf16.msra.mxu0 %v511
    %705 = vmatprep.subr.bf16.mxu0 %v514
    %706 = vmatpush1.bf16.msra.mxu0 %v513
    %707 = vmatprep.subr.bf16.mxu0 %v516
    %708 = vmatpush1.bf16.msra.mxu0 %v515
    %709 = vmatprep.subr.bf16.mxu0 %v518
    %710 = vmatpush1.bf16.msra.mxu0 %v517
    %711 = vmatprep.subr.bf16.mxu0 %v520
    %712 = vmatpush1.bf16.msra.mxu0 %v519
    %713 = vmatprep.subr.bf16.mxu0 %v522
    %714 = vmatpush1.bf16.msra.mxu0 %v521
    %715 = vmatprep.subr.bf16.mxu0 %v524
    %716 = vmatpush1.bf16.msra.mxu0 %v523
    %717 = vmatprep.subr.bf16.mxu0 %v526
    %718 = vmatpush1.bf16.msra.mxu0 %v525
    %719 = vmatprep.subr.bf16.mxu0 %v528
    %720 = vmatpush1.bf16.msra.mxu0 %v527
    %721 = vmatprep.subr.bf16.mxu0 %v530
    %722 = vmatpush1.bf16.msra.mxu0 %v529
    %723 = vmatprep.subr.bf16.mxu0 %v532
    %724 = vmatpush1.bf16.msra.mxu0 %v531
    %725 = vmatprep.subr.bf16.mxu0 %v534
    %726 = vmatpush1.bf16.msra.mxu0 %v533
    %727 = vmatprep.mubr.bf16.mxu0 %v204
    %728 = vmatmul.mubr.bf16.gmra.mrb[0].mxu0 %v203
    %v729 = vpop.f32.mrb[0].mxu0
    %v730 = vadd.f32 %v178, %v729
    %v731 = vpop.f32.mrb[0].mxu0
    %v732 = vadd.f32 %v182, %v731
    %v733 = vpop.f32.mrb[0].mxu0
    %v734 = vadd.f32 %v178, %v733
    %v735 = vpop.f32.mrb[0].mxu0
    %v736 = vadd.f32 %v182, %v735
    %737 = vdwg.mxu0
    %738 = vmatprep.subr.bf16.mxu0 %v536
    %739 = vmatpush1.bf16.msra.mxu0 %v535
    %740 = vmatprep.subr.bf16.mxu0 %v538
    %741 = vmatpush1.bf16.msra.mxu0 %v537
    %742 = vmatprep.subr.bf16.mxu0 %v540
    %743 = vmatpush1.bf16.msra.mxu0 %v539
    %744 = vmatprep.subr.bf16.mxu0 %v542
    %745 = vmatpush1.bf16.msra.mxu0 %v541
    %746 = vmatprep.subr.bf16.mxu0 %v544
    %747 = vmatpush1.bf16.msra.mxu0 %v543
    %748 = vmatprep.subr.bf16.mxu0 %v546
    %749 = vmatpush1.bf16.msra.mxu0 %v545
    %750 = vmatprep.subr.bf16.mxu0 %v548
    %751 = vmatpush1.bf16.msra.mxu0 %v547
    %752 = vmatprep.subr.bf16.mxu0 %v550
    %753 = vmatpush1.bf16.msra.mxu0 %v549
    %754 = vmatprep.subr.bf16.mxu0 %v552
    %755 = vmatpush1.bf16.msra.mxu0 %v551
    %756 = vmatprep.subr.bf16.mxu0 %v554
    %757 = vmatpush1.bf16.msra.mxu0 %v553
    %758 = vmatprep.subr.bf16.mxu0 %v556
    %759 = vmatpush1.bf16.msra.mxu0 %v555
    %760 = vmatprep.subr.bf16.mxu0 %v558
    %761 = vmatpush1.bf16.msra.mxu0 %v557
    %762 = vmatprep.subr.bf16.mxu0 %v560
    %763 = vmatpush1.bf16.msra.mxu0 %v559
    %764 = vmatprep.subr.bf16.mxu0 %v562
    %765 = vmatpush1.bf16.msra.mxu0 %v561
    %766 = vmatprep.subr.bf16.mxu0 %v564
    %767 = vmatpush1.bf16.msra.mxu0 %v563
    %768 = vmatprep.subr.bf16.mxu0 %v566
    %769 = vmatpush1.bf16.msra.mxu0 %v565
    %770 = vmatprep.mubr.bf16.mxu0 %v206
    %771 = vmatmul.mubr.bf16.gmra.mrb[0].mxu0 %v205
    %v772 = vpop.f32.mrb[0].mxu0
    %v773 = vadd.f32 %v730, %v772
    %v774 = vpop.f32.mrb[0].mxu0
    %v775 = vadd.f32 %v732, %v774
    %v776 = vpop.f32.mrb[0].mxu0
    %v777 = vadd.f32 %v734, %v776
    %v778 = vpop.f32.mrb[0].mxu0
    %v779 = vadd.f32 %v736, %v778
    %780 = vdwg.mxu0
    %781 = vmatprep.subr.bf16.mxu0 %v568
    %782 = vmatpush1.bf16.msra.mxu0 %v567
    %783 = vmatprep.subr.bf16.mxu0 %v570
    %784 = vmatpush1.bf16.msra.mxu0 %v569
    %785 = vmatprep.subr.bf16.mxu0 %v572
    %786 = vmatpush1.bf16.msra.mxu0 %v571
    %787 = vmatprep.subr.bf16.mxu0 %v574
    %788 = vmatpush1.bf16.msra.mxu0 %v573
    %789 = vmatprep.subr.bf16.mxu0 %v576
    %790 = vmatpush1.bf16.msra.mxu0 %v575
    %791 = vmatprep.subr.bf16.mxu0 %v578
    %792 = vmatpush1.bf16.msra.mxu0 %v577
    %793 = vmatprep.subr.bf16.mxu0 %v580
    %794 = vmatpush1.bf16.msra.mxu0 %v579
    %795 = vmatprep.subr.bf16.mxu0 %v582
    %796 = vmatpush1.bf16.msra.mxu0 %v581
    %797 = vmatprep.subr.bf16.mxu0 %v584
    %798 = vmatpush1.bf16.msra.mxu0 %v583
    %799 = vmatprep.subr.bf16.mxu0 %v586
    %800 = vmatpush1.bf16.msra.mxu0 %v585
    %801 = vmatprep.subr.bf16.mxu0 %v588
    %802 = vmatpush1.bf16.msra.mxu0 %v587
    %803 = vmatprep.subr.bf16.mxu0 %v590
    %804 = vmatpush1.bf16.msra.mxu0 %v589
    %805 = vmatprep.subr.bf16.mxu0 %v592
    %806 = vmatpush1.bf16.msra.mxu0 %v591
    %807 = vmatprep.subr.bf16.mxu0 %v594
    %808 = vmatpush1.bf16.msra.mxu0 %v593
    %809 = vmatprep.subr.bf16.mxu0 %v596
    %810 = vmatpush1.bf16.msra.mxu0 %v595
    %811 = vmatprep.subr.bf16.mxu0 %v598
    %812 = vmatpush1.bf16.msra.mxu0 %v597
    %813 = vmatprep.mubr.bf16.mxu0 %v208
    %814 = vmatmul.mubr.bf16.gmra.mrb[0].mxu0 %v207
    %v815 = vpop.f32.mrb[0].mxu0
    %v816 = vadd.f32 %v773, %v815
    %v817 = vpop.f32.mrb[0].mxu0
    %v818 = vadd.f32 %v775, %v817
    %v819 = vpop.f32.mrb[0].mxu0
    %v820 = vadd.f32 %v777, %v819
    %v821 = vpop.f32.mrb[0].mxu0
    %v822 = vadd.f32 %v779, %v821
    %823 = vdwg.mxu0
    %v824 = vmax.f32 %v816, 0.0
    %v825 = vmax.f32 %v818, 0.0
    %v826 = vmax.f32 %v820, 0.0
    %v827 = vmax.f32 %v822, 0.0
    %v828 = vpack.c.bf16 %v826, %v824
    %v829 = vpack.c.bf16 %v827, %v825
    %v830 = vld [vmem:[%s3] sm:$0xff]
    %v831 = vld [vmem:[%s3 + $0x8] sm:$0xff]
    %v832 = vld [vmem:[%s3 + $0x10] sm:$0xff]
    %v833 = vld [vmem:[%s3 + $0x18] sm:$0xff]
    %v834 = vld [vmem:[%s3 + $0x20] sm:$0xff]
    %v835 = vld [vmem:[%s3 + $0x28] sm:$0xff]
    %v836 = vld [vmem:[%s3 + $0x30] sm:$0xff]
    %v837 = vld [vmem:[%s3 + $0x38] sm:$0xff]
    %v838 = vld [vmem:[%s3 + $0x40] sm:$0xff]
    %v839 = vld [vmem:[%s3 + $0x48] sm:$0xff]
    %v840 = vld [vmem:[%s3 + $0x50] sm:$0xff]
    %v841 = vld [vmem:[%s3 + $0x58] sm:$0xff]
    %v842 = vld [vmem:[%s3 + $0x60] sm:$0xff]
    %v843 = vld [vmem:[%s3 + $0x68] sm:$0xff]
    %v844 = vld [vmem:[%s3 + $0x70] sm:$0xff]
    %v845 = vld [vmem:[%s3 + $0x78] sm:$0xff]
    %v846 = vld [vmem:[%s3 + $0x80] sm:$0xff]
    %v847 = vld [vmem:[%s3 + $0x88] sm:$0xff]
    %v848 = vld [vmem:[%s3 + $0x90] sm:$0xff]
    %v849 = vld [vmem:[%s3 + $0x98] sm:$0xff]
    %v850 = vld [vmem:[%s3 + $0xa0] sm:$0xff]
    %v851 = vld [vmem:[%s3 + $0xa8] sm:$0xff]
    %v852 = vld [vmem:[%s3 + $0xb0] sm:$0xff]
    %v853 = vld [vmem:[%s3 + $0xb8] sm:$0xff]
    %v854 = vld [vmem:[%s3 + $0xc0] sm:$0xff]
    %v855 = vld [vmem:[%s3 + $0xc8] sm:$0xff]
    %v856 = vld [vmem:[%s3 + $0xd0] sm:$0xff]
    %v857 = vld [vmem:[%s3 + $0xd8] sm:$0xff]
    %v858 = vld [vmem:[%s3 + $0xe0] sm:$0xff]
    %v859 = vld [vmem:[%s3 + $0xe8] sm:$0xff]
    %v860 = vld [vmem:[%s3 + $0xf0] sm:$0xff]
    %v861 = vld [vmem:[%s3 + $0xf8] sm:$0xff]
    %v862 = vld [vmem:[%s3 + $0x100] sm:$0xff]
    %v863 = vld [vmem:[%s3 + $0x108] sm:$0xff]
    %v864 = vld [vmem:[%s3 + $0x110] sm:$0xff]
    %v865 = vld [vmem:[%s3 + $0x118] sm:$0xff]
    %v866 = vld [vmem:[%s3 + $0x120] sm:$0xff]
    %v867 = vld [vmem:[%s3 + $0x128] sm:$0xff]
    %v868 = vld [vmem:[%s3 + $0x130] sm:$0xff]
    %v869 = vld [vmem:[%s3 + $0x138] sm:$0xff]
    %v870 = vld [vmem:[%s3 + $0x140] sm:$0xff]
    %v871 = vld [vmem:[%s3 + $0x148] sm:$0xff]
    %v872 = vld [vmem:[%s3 + $0x150] sm:$0xff]
    %v873 = vld [vmem:[%s3 + $0x158] sm:$0xff]
    %v874 = vld [vmem:[%s3 + $0x160] sm:$0xff]
    %v875 = vld [vmem:[%s3 + $0x168] sm:$0xff]
    %v876 = vld [vmem:[%s3 + $0x170] sm:$0xff]
    %v877 = vld [vmem:[%s3 + $0x178] sm:$0xff]
    %v878 = vld [vmem:[%s3 + $0x180] sm:$0xff]
    %v879 = vld [vmem:[%s3 + $0x188] sm:$0xff]
    %v880 = vld [vmem:[%s3 + $0x190] sm:$0xff]
    %v881 = vld [vmem:[%s3 + $0x198] sm:$0xff]
    %v882 = vld [vmem:[%s3 + $0x1a0] sm:$0xff]
    %v883 = vld [vmem:[%s3 + $0x1a8] sm:$0xff]
    %v884 = vld [vmem:[%s3 + $0x1b0] sm:$0xff]
    %v885 = vld [vmem:[%s3 + $0x1b8] sm:$0xff]
    %v886 = vld [vmem:[%s3 + $0x1c0] sm:$0xff]
    %v887 = vld [vmem:[%s3 + $0x1c8] sm:$0xff]
    %v888 = vld [vmem:[%s3 + $0x1d0] sm:$0xff]
    %v889 = vld [vmem:[%s3 + $0x1d8] sm:$0xff]
    %v890 = vld [vmem:[%s3 + $0x1e0] sm:$0xff]
    %v891 = vld [vmem:[%s3 + $0x1e8] sm:$0xff]
    %v892 = vld [vmem:[%s3 + $0x1f0] sm:$0xff]
    %v893 = vld [vmem:[%s3 + $0x1f8] sm:$0xff]
    %v894 = vld [vmem:[%s3 + $0x200] sm:$0xff]
    %v895 = vld [vmem:[%s3 + $0x208] sm:$0xff]
    %v896 = vld [vmem:[%s3 + $0x210] sm:$0xff]
    %v897 = vld [vmem:[%s3 + $0x218] sm:$0xff]
    %v898 = vld [vmem:[%s3 + $0x220] sm:$0xff]
    %v899 = vld [vmem:[%s3 + $0x228] sm:$0xff]
    %v900 = vld [vmem:[%s3 + $0x230] sm:$0xff]
    %v901 = vld [vmem:[%s3 + $0x238] sm:$0xff]
    %v902 = vld [vmem:[%s3 + $0x240] sm:$0xff]
    %v903 = vld [vmem:[%s3 + $0x248] sm:$0xff]
    %v904 = vld [vmem:[%s3 + $0x250] sm:$0xff]
    %v905 = vld [vmem:[%s4] sm:$0x3f]
    %v907 = vlaneseq
    %v908 = vshrl.u32 %v907, 7
    %v909 = vsub.s32 0, %v908
    %v910 = vrot.slane %v905, %v909
    %v911 = vlaneseq
    %v912 = vshrl.u32 %v911, 7
    %v913 = vsub.s32 1, %v912
    %v914 = vrot.slane %v905, %v913
    %v915 = vlaneseq
    %v916 = vshrl.u32 %v915, 7
    %v917 = vsub.s32 2, %v916
    %v918 = vrot.slane %v905, %v917
    %v919 = vlaneseq
    %v920 = vshrl.u32 %v919, 7
    %v921 = vsub.s32 3, %v920
    %v922 = vrot.slane %v905, %v921
    %v923 = vlaneseq
    %v924 = vshrl.u32 %v923, 7
    %v925 = vsub.s32 4, %v924
    %v926 = vrot.slane %v905, %v925
    %v927 = vlaneseq
    %v928 = vshrl.u32 %v927, 7
    %v929 = vsub.s32 5, %v928
    %v930 = vrot.slane %v905, %v929
    %v1012 = vunpack.c.l.b16 %v830
    %v1013 = vunpack.c.h.b16 %v830
    %v1014 = vunpack.c.l.b16 %v831
    %v1015 = vunpack.c.h.b16 %v831
    %v1016 = vunpack.c.l.b16 %v832
    %v1017 = vunpack.c.h.b16 %v832
    %v1018 = vunpack.c.l.b16 %v833
    %v1019 = vunpack.c.h.b16 %v833
    %v1020 = vunpack.c.l.b16 %v834
    %v1021 = vunpack.c.h.b16 %v834
    %v1022 = vunpack.c.l.b16 %v835
    %v1023 = vunpack.c.h.b16 %v835
    %v1024 = vunpack.c.l.b16 %v836
    %v1025 = vunpack.c.h.b16 %v836
    %v1026 = vunpack.c.l.b16 %v837
    %v1027 = vunpack.c.h.b16 %v837
    %v1028 = vunpack.c.l.b16 %v838
    %v1029 = vunpack.c.h.b16 %v838
    %v1030 = vunpack.c.l.b16 %v839
    %v1031 = vunpack.c.h.b16 %v839
    %v1032 = vunpack.c.l.b16 %v840
    %v1033 = vunpack.c.h.b16 %v840
    %v1034 = vunpack.c.l.b16 %v841
    %v1035 = vunpack.c.h.b16 %v841
    %v1036 = vunpack.c.l.b16 %v842
    %v1037 = vunpack.c.h.b16 %v842
    %v1038 = vunpack.c.l.b16 %v843
    %v1039 = vunpack.c.h.b16 %v843
    %v1040 = vunpack.c.l.b16 %v844
    %v1041 = vunpack.c.h.b16 %v844
    %v1042 = vunpack.c.l.b16 %v845
    %v1043 = vunpack.c.h.b16 %v845
    %v1044 = vunpack.c.l.b16 %v846
    %v1045 = vunpack.c.h.b16 %v846
    %v1046 = vunpack.c.l.b16 %v847
    %v1047 = vunpack.c.h.b16 %v847
    %v1048 = vunpack.c.l.b16 %v848
    %v1049 = vunpack.c.h.b16 %v848
    %v1050 = vunpack.c.l.b16 %v849
    %v1051 = vunpack.c.h.b16 %v849
    %v1052 = vunpack.c.l.b16 %v850
    %v1053 = vunpack.c.h.b16 %v850
    %v1054 = vunpack.c.l.b16 %v851
    %v1055 = vunpack.c.h.b16 %v851
    %v1056 = vunpack.c.l.b16 %v852
    %v1057 = vunpack.c.h.b16 %v852
    %v1058 = vunpack.c.l.b16 %v853
    %v1059 = vunpack.c.h.b16 %v853
    %v1060 = vunpack.c.l.b16 %v854
    %v1061 = vunpack.c.h.b16 %v854
    %v1062 = vunpack.c.l.b16 %v855
    %v1063 = vunpack.c.h.b16 %v855
    %v1064 = vunpack.c.l.b16 %v856
    %v1065 = vunpack.c.h.b16 %v856
    %v1066 = vunpack.c.l.b16 %v857
    %v1067 = vunpack.c.h.b16 %v857
    %v1068 = vunpack.c.l.b16 %v858
    %v1069 = vunpack.c.h.b16 %v858
    %v1070 = vunpack.c.l.b16 %v859
    %v1071 = vunpack.c.h.b16 %v859
    %v1072 = vunpack.c.l.b16 %v860
    %v1073 = vunpack.c.h.b16 %v860
    %v1074 = vunpack.c.l.b16 %v861
    %v1075 = vunpack.c.h.b16 %v861
    %v1076 = vunpack.c.l.b16 %v862
    %v1077 = vunpack.c.h.b16 %v862
    %v1078 = vunpack.c.l.b16 %v863
    %v1079 = vunpack.c.h.b16 %v863
    %v1080 = vunpack.c.l.b16 %v864
    %v1081 = vunpack.c.h.b16 %v864
    %v1082 = vunpack.c.l.b16 %v865
    %v1083 = vunpack.c.h.b16 %v865
    %v1084 = vunpack.c.l.b16 %v866
    %v1085 = vunpack.c.h.b16 %v866
    %v1086 = vunpack.c.l.b16 %v867
    %v1087 = vunpack.c.h.b16 %v867
    %v1088 = vunpack.c.l.b16 %v868
    %v1089 = vunpack.c.h.b16 %v868
    %v1090 = vunpack.c.l.b16 %v869
    %v1091 = vunpack.c.h.b16 %v869
    %v1092 = vunpack.c.l.b16 %v870
    %v1093 = vunpack.c.h.b16 %v870
    %v1094 = vunpack.c.l.b16 %v871
    %v1095 = vunpack.c.h.b16 %v871
    %v1096 = vunpack.c.l.b16 %v872
    %v1097 = vunpack.c.h.b16 %v872
    %v1098 = vunpack.c.l.b16 %v873
    %v1099 = vunpack.c.h.b16 %v873
    %v1100 = vunpack.c.l.b16 %v874
    %v1101 = vunpack.c.h.b16 %v874
    %v1102 = vunpack.c.l.b16 %v875
    %v1103 = vunpack.c.h.b16 %v875
    %v1104 = vunpack.c.l.b16 %v876
    %v1105 = vunpack.c.h.b16 %v876
    %v1106 = vunpack.c.l.b16 %v877
    %v1107 = vunpack.c.h.b16 %v877
    %v1108 = vunpack.c.l.b16 %v878
    %v1109 = vunpack.c.h.b16 %v878
    %v1110 = vunpack.c.l.b16 %v879
    %v1111 = vunpack.c.h.b16 %v879
    %v1112 = vunpack.c.l.b16 %v880
    %v1113 = vunpack.c.h.b16 %v880
    %v1114 = vunpack.c.l.b16 %v881
    %v1115 = vunpack.c.h.b16 %v881
    %v1116 = vunpack.c.l.b16 %v882
    %v1117 = vunpack.c.h.b16 %v882
    %v1118 = vunpack.c.l.b16 %v883
    %v1119 = vunpack.c.h.b16 %v883
    %v1120 = vunpack.c.l.b16 %v884
    %v1121 = vunpack.c.h.b16 %v884
    %v1122 = vunpack.c.l.b16 %v885
    %v1123 = vunpack.c.h.b16 %v885
    %v1124 = vunpack.c.l.b16 %v886
    %v1125 = vunpack.c.h.b16 %v886
    %v1126 = vunpack.c.l.b16 %v887
    %v1127 = vunpack.c.h.b16 %v887
    %v1128 = vunpack.c.l.b16 %v888
    %v1129 = vunpack.c.h.b16 %v888
    %v1130 = vunpack.c.l.b16 %v889
    %v1131 = vunpack.c.h.b16 %v889
    %v1132 = vunpack.c.l.b16 %v890
    %v1133 = vunpack.c.h.b16 %v890
    %v1134 = vunpack.c.l.b16 %v891
    %v1135 = vunpack.c.h.b16 %v891
    %v1136 = vunpack.c.l.b16 %v892
    %v1137 = vunpack.c.h.b16 %v892
    %v1138 = vunpack.c.l.b16 %v893
    %v1139 = vunpack.c.h.b16 %v893
    %v1140 = vunpack.c.l.b16 %v894
    %v1141 = vunpack.c.h.b16 %v894
    %v1142 = vunpack.c.l.b16 %v895
    %v1143 = vunpack.c.h.b16 %v895
    %v1144 = vunpack.c.l.b16 %v896
    %v1145 = vunpack.c.h.b16 %v896
    %v1146 = vunpack.c.l.b16 %v897
    %v1147 = vunpack.c.h.b16 %v897
    %v1148 = vunpack.c.l.b16 %v898
    %v1149 = vunpack.c.h.b16 %v898
    %v1150 = vunpack.c.l.b16 %v899
    %v1151 = vunpack.c.h.b16 %v899
    %v1152 = vunpack.c.l.b16 %v900
    %v1153 = vunpack.c.h.b16 %v900
    %v1154 = vunpack.c.l.b16 %v901
    %v1155 = vunpack.c.h.b16 %v901
    %v1156 = vunpack.c.l.b16 %v902
    %v1157 = vunpack.c.h.b16 %v902
    %v1158 = vunpack.c.l.b16 %v903
    %v1159 = vunpack.c.h.b16 %v903
    %v1160 = vunpack.c.l.b16 %v904
    %v1161 = vunpack.c.h.b16 %v904
    %v1162 = vpack.c.b16 %v1018, %v1012
    %v1163 = vpack.c.b16 %v1019, %v1013
    %v1164 = vpack.c.b16 %v1020, %v1014
    %v1165 = vpack.c.b16 %v1021, %v1015
    %v1166 = vpack.c.b16 %v1022, %v1016
    %v1167 = vpack.c.b16 %v1023, %v1017
    %v1168 = vpack.c.b16 %v1030, %v1024
    %v1169 = vpack.c.b16 %v1031, %v1025
    %v1170 = vpack.c.b16 %v1032, %v1026
    %v1171 = vpack.c.b16 %v1033, %v1027
    %v1172 = vpack.c.b16 %v1034, %v1028
    %v1173 = vpack.c.b16 %v1035, %v1029
    %v1174 = vpack.c.b16 %v1042, %v1036
    %v1175 = vpack.c.b16 %v1043, %v1037
    %v1176 = vpack.c.b16 %v1044, %v1038
    %v1177 = vpack.c.b16 %v1045, %v1039
    %v1178 = vpack.c.b16 %v1046, %v1040
    %v1179 = vpack.c.b16 %v1047, %v1041
    %v1180 = vpack.c.b16 %v1054, %v1048
    %v1181 = vpack.c.b16 %v1055, %v1049
    %v1182 = vpack.c.b16 %v1056, %v1050
    %v1183 = vpack.c.b16 %v1057, %v1051
    %v1184 = vpack.c.b16 %v1058, %v1052
    %v1185 = vpack.c.b16 %v1059, %v1053
    %v1186 = vpack.c.b16 %v1066, %v1060
    %v1187 = vpack.c.b16 %v1067, %v1061
    %v1188 = vpack.c.b16 %v1068, %v1062
    %v1189 = vpack.c.b16 %v1069, %v1063
    %v1190 = vpack.c.b16 %v1070, %v1064
    %v1191 = vpack.c.b16 %v1071, %v1065
    %v1192 = vpack.c.b16 %v1078, %v1072
    %v1193 = vpack.c.b16 %v1079, %v1073
    %v1194 = vpack.c.b16 %v1080, %v1074
    %v1195 = vpack.c.b16 %v1081, %v1075
    %v1196 = vpack.c.b16 %v1082, %v1076
    %v1197 = vpack.c.b16 %v1083, %v1077
    %v1198 = vpack.c.b16 %v1090, %v1084
    %v1199 = vpack.c.b16 %v1091, %v1085
    %v1200 = vpack.c.b16 %v1092, %v1086
    %v1201 = vpack.c.b16 %v1093, %v1087
    %v1202 = vpack.c.b16 %v1094, %v1088
    %v1203 = vpack.c.b16 %v1095, %v1089
    %v1204 = vpack.c.b16 %v1102, %v1096
    %v1205 = vpack.c.b16 %v1103, %v1097
    %v1206 = vpack.c.b16 %v1104, %v1098
    %v1207 = vpack.c.b16 %v1105, %v1099
    %v1208 = vpack.c.b16 %v1106, %v1100
    %v1209 = vpack.c.b16 %v1107, %v1101
    %v1210 = vpack.c.b16 %v1114, %v1108
    %v1211 = vpack.c.b16 %v1115, %v1109
    %v1212 = vpack.c.b16 %v1116, %v1110
    %v1213 = vpack.c.b16 %v1117, %v1111
    %v1214 = vpack.c.b16 %v1118, %v1112
    %v1215 = vpack.c.b16 %v1119, %v1113
    %v1216 = vpack.c.b16 %v1126, %v1120
    %v1217 = vpack.c.b16 %v1127, %v1121
    %v1218 = vpack.c.b16 %v1128, %v1122
    %v1219 = vpack.c.b16 %v1129, %v1123
    %v1220 = vpack.c.b16 %v1130, %v1124
    %v1221 = vpack.c.b16 %v1131, %v1125
    %v1222 = vpack.c.b16 %v1138, %v1132
    %v1223 = vpack.c.b16 %v1139, %v1133
    %v1224 = vpack.c.b16 %v1140, %v1134
    %v1225 = vpack.c.b16 %v1141, %v1135
    %v1226 = vpack.c.b16 %v1142, %v1136
    %v1227 = vpack.c.b16 %v1143, %v1137
    %v1228 = vpack.c.b16 %v1150, %v1144
    %v1229 = vpack.c.b16 %v1151, %v1145
    %v1230 = vpack.c.b16 %v1152, %v1146
    %v1231 = vpack.c.b16 %v1153, %v1147
    %v1232 = vpack.c.b16 %v1154, %v1148
    %v1233 = vpack.c.b16 %v1155, %v1149
    %v1234 = vpack.c.b16 %v1156, %v1156
    %v1235 = vpack.c.b16 %v1157, %v1157
    %v1236 = vpack.c.b16 %v1158, %v1158
    %v1237 = vpack.c.b16 %v1159, %v1159
    %v1238 = vpack.c.b16 %v1160, %v1160
    %v1239 = vpack.c.b16 %v1161, %v1161
    %vm1312 = vcmask 588800
    %v1314 = vsel %vm1312, %v829, 0
    %vm1316 = vcmask 1043456
    %v1318 = vsel %vm1316, %v1234, 0
    %v1321 = vsel %vm1316, %v1235, 0
    %v1324 = vsel %vm1316, %v1236, 0
    %v1327 = vsel %vm1316, %v1237, 0
    %v1330 = vsel %vm1316, %v1238, 0
    %v1333 = vsel %vm1316, %v1239, 0
    %1335 = vmatprep.subr.bf16.mxu0 %v1163
    %1336 = vmatpush1.bf16.msra.mxu0 %v1162
    %1337 = vmatprep.subr.bf16.mxu0 %v1169
    %1338 = vmatpush1.bf16.msra.mxu0 %v1168
    %1339 = vmatprep.subr.bf16.mxu0 %v1175
    %1340 = vmatpush1.bf16.msra.mxu0 %v1174
    %1341 = vmatprep.subr.bf16.mxu0 %v1181
    %1342 = vmatpush1.bf16.msra.mxu0 %v1180
    %1343 = vmatprep.subr.bf16.mxu0 %v1187
    %1344 = vmatpush1.bf16.msra.mxu0 %v1186
    %1345 = vmatprep.subr.bf16.mxu0 %v1193
    %1346 = vmatpush1.bf16.msra.mxu0 %v1192
    %1347 = vmatprep.subr.bf16.mxu0 %v1199
    %1348 = vmatpush1.bf16.msra.mxu0 %v1198
    %1349 = vmatprep.subr.bf16.mxu0 %v1205
    %1350 = vmatpush1.bf16.msra.mxu0 %v1204
    %1351 = vmatprep.subr.bf16.mxu0 %v1211
    %1352 = vmatpush1.bf16.msra.mxu0 %v1210
    %1353 = vmatprep.subr.bf16.mxu0 %v1217
    %1354 = vmatpush1.bf16.msra.mxu0 %v1216
    %1355 = vmatprep.subr.bf16.mxu0 %v1223
    %1356 = vmatpush1.bf16.msra.mxu0 %v1222
    %1357 = vmatprep.subr.bf16.mxu0 %v1229
    %1358 = vmatpush1.bf16.msra.mxu0 %v1228
    %1359 = vmatprep.subr.bf16.mxu0 %v1321
    %1360 = vmatpush1.bf16.msra.mxu0 %v1318
    %1361 = vmatprep.subr.bf16.mxu0 0
    %1362 = vmatpush1.bf16.msra.mxu0 0
    %1363 = vmatprep.subr.bf16.mxu0 0
    %1364 = vmatpush1.bf16.msra.mxu0 0
    %1365 = vmatprep.subr.bf16.mxu0 0
    %1366 = vmatpush1.bf16.msra.mxu0 0
    %1367 = vmatprep.mubr.bf16.mxu0 %v1314
    %1368 = vmatmul.mubr.bf16.gmra.mrb[0].mxu0 %v828
    %v1369 = vpop.f32.mrb[0].mxu0
    %v1370 = vadd.f32 %v910, %v1369
    %v1371 = vpop.f32.mrb[0].mxu0
    %v1372 = vadd.f32 %v914, %v1371
    %v1373 = vpop.f32.mrb[0].mxu0
    %v1374 = vadd.f32 %v910, %v1373
    %v1375 = vpop.f32.mrb[0].mxu0
    %v1376 = vadd.f32 %v914, %v1375
    %1377 = vdwg.mxu0
    %1378 = vmatprep.subr.bf16.mxu0 %v1165
    %1379 = vmatpush1.bf16.msra.mxu0 %v1164
    %1380 = vmatprep.subr.bf16.mxu0 %v1171
    %1381 = vmatpush1.bf16.msra.mxu0 %v1170
    %1382 = vmatprep.subr.bf16.mxu0 %v1177
    %1383 = vmatpush1.bf16.msra.mxu0 %v1176
    %1384 = vmatprep.subr.bf16.mxu0 %v1183
    %1385 = vmatpush1.bf16.msra.mxu0 %v1182
    %1386 = vmatprep.subr.bf16.mxu0 %v1189
    %1387 = vmatpush1.bf16.msra.mxu0 %v1188
    %1388 = vmatprep.subr.bf16.mxu0 %v1195
    %1389 = vmatpush1.bf16.msra.mxu0 %v1194
    %1390 = vmatprep.subr.bf16.mxu0 %v1201
    %1391 = vmatpush1.bf16.msra.mxu0 %v1200
    %1392 = vmatprep.subr.bf16.mxu0 %v1207
    %1393 = vmatpush1.bf16.msra.mxu0 %v1206
    %1394 = vmatprep.subr.bf16.mxu0 %v1213
    %1395 = vmatpush1.bf16.msra.mxu0 %v1212
    %1396 = vmatprep.subr.bf16.mxu0 %v1219
    %1397 = vmatpush1.bf16.msra.mxu0 %v1218
    %1398 = vmatprep.subr.bf16.mxu0 %v1225
    %1399 = vmatpush1.bf16.msra.mxu0 %v1224
    %1400 = vmatprep.subr.bf16.mxu0 %v1231
    %1401 = vmatpush1.bf16.msra.mxu0 %v1230
    %1402 = vmatprep.subr.bf16.mxu0 %v1327
    %1403 = vmatpush1.bf16.msra.mxu0 %v1324
    %1404 = vmatprep.subr.bf16.mxu0 0
    %1405 = vmatpush1.bf16.msra.mxu0 0
    %1406 = vmatprep.subr.bf16.mxu0 0
    %1407 = vmatpush1.bf16.msra.mxu0 0
    %1408 = vmatprep.subr.bf16.mxu0 0
    %1409 = vmatpush1.bf16.msra.mxu0 0
    %1410 = vmatprep.mubr.bf16.mxu0 %v1314
    %1411 = vmatmul.mubr.bf16.gmra.mrb[0].mxu0 %v828
    %v1412 = vpop.f32.mrb[0].mxu0
    %v1413 = vadd.f32 %v918, %v1412
    %v1414 = vpop.f32.mrb[0].mxu0
    %v1415 = vadd.f32 %v922, %v1414
    %v1416 = vpop.f32.mrb[0].mxu0
    %v1417 = vadd.f32 %v918, %v1416
    %v1418 = vpop.f32.mrb[0].mxu0
    %v1419 = vadd.f32 %v922, %v1418
    %1420 = vdwg.mxu0
    %1421 = vmatprep.subr.bf16.mxu0 %v1167
    %1422 = vmatpush1.bf16.msra.mxu0 %v1166
    %1423 = vmatprep.subr.bf16.mxu0 %v1173
    %1424 = vmatpush1.bf16.msra.mxu0 %v1172
    %1425 = vmatprep.subr.bf16.mxu0 %v1179
    %1426 = vmatpush1.bf16.msra.mxu0 %v1178
    %1427 = vmatprep.subr.bf16.mxu0 %v1185
    %1428 = vmatpush1.bf16.msra.mxu0 %v1184
    %1429 = vmatprep.subr.bf16.mxu0 %v1191
    %1430 = vmatpush1.bf16.msra.mxu0 %v1190
    %1431 = vmatprep.subr.bf16.mxu0 %v1197
    %1432 = vmatpush1.bf16.msra.mxu0 %v1196
    %1433 = vmatprep.subr.bf16.mxu0 %v1203
    %1434 = vmatpush1.bf16.msra.mxu0 %v1202
    %1435 = vmatprep.subr.bf16.mxu0 %v1209
    %1436 = vmatpush1.bf16.msra.mxu0 %v1208
    %1437 = vmatprep.subr.bf16.mxu0 %v1215
    %1438 = vmatpush1.bf16.msra.mxu0 %v1214
    %1439 = vmatprep.subr.bf16.mxu0 %v1221
    %1440 = vmatpush1.bf16.msra.mxu0 %v1220
    %1441 = vmatprep.subr.bf16.mxu0 %v1227
    %1442 = vmatpush1.bf16.msra.mxu0 %v1226
    %1443 = vmatprep.subr.bf16.mxu0 %v1233
    %1444 = vmatpush1.bf16.msra.mxu0 %v1232
    %1445 = vmatprep.subr.bf16.mxu0 %v1333
    %1446 = vmatpush1.bf16.msra.mxu0 %v1330
    %1447 = vmatprep.subr.bf16.mxu0 0
    %1448 = vmatpush1.bf16.msra.mxu0 0
    %1449 = vmatprep.subr.bf16.mxu0 0
    %1450 = vmatpush1.bf16.msra.mxu0 0
    %1451 = vmatprep.subr.bf16.mxu0 0
    %1452 = vmatpush1.bf16.msra.mxu0 0
    %1453 = vmatprep.mubr.bf16.mxu0 %v1314
    %1454 = vmatmul.mubr.bf16.gmra.mrb[0].mxu0 %v828
    %v1455 = vpop.f32.mrb[0].mxu0
    %v1456 = vadd.f32 %v926, %v1455
    %v1457 = vpop.f32.mrb[0].mxu0
    %v1458 = vadd.f32 %v930, %v1457
    %v1459 = vpop.f32.mrb[0].mxu0
    %v1460 = vadd.f32 %v926, %v1459
    %v1461 = vpop.f32.mrb[0].mxu0
    %v1462 = vadd.f32 %v930, %v1461
    %1463 = vdwg.mxu0
    %v1464 = vpack.c.bf16 %v1374, %v1370
    %v1465 = vpack.c.bf16 %v1376, %v1372
    %v1466 = vpack.c.bf16 %v1417, %v1413
    %v1467 = vpack.c.bf16 %v1419, %v1415
    %v1468 = vpack.c.bf16 %v1460, %v1456
    %v1469 = vpack.c.bf16 %v1462, %v1458
    %1470 = vmatprep.subr.bf16.mxu0 0
    %1471 = vmatpush1.bf16.xpose.msra.mxu0 %v1466
    %1472 = vmatprep.subr.bf16.mxu0 0
    %1473 = vmatpush1.bf16.xpose.msra.mxu0 0
    %1474 = vmatprep.subr.bf16.mxu0 0
    %1475 = vmatpush1.bf16.xpose.msra.mxu0 0
    %1476 = vmatprep.subr.bf16.mxu0 0
    %1477 = vmatpush1.bf16.xpose.msra.mxu0 0
    %1478 = vmatprep.subr.bf16.mxu0 0
    %1479 = vmatpush1.bf16.xpose.msra.mxu0 0
    %1480 = vmatprep.subr.bf16.mxu0 0
    %1481 = vmatpush1.bf16.xpose.msra.mxu0 0
    %1482 = vmatprep.subr.bf16.mxu0 0
    %1483 = vmatpush1.bf16.xpose.msra.mxu0 0
    %1484 = vmatprep.subr.bf16.mxu0 0
    %1485 = vmatpush1.bf16.xpose.msra.mxu0 0
    %1486 = vmatprep.subr.bf16.mxu0 0
    %1487 = vmatpush1.bf16.xpose.msra.mxu0 0
    %1488 = vmatprep.subr.bf16.mxu0 0
    %1489 = vmatpush1.bf16.xpose.msra.mxu0 0
    %1490 = vmatprep.subr.bf16.mxu0 0
    %1491 = vmatpush1.bf16.xpose.msra.mxu0 0
    %1492 = vmatprep.subr.bf16.mxu0 0
    %1493 = vmatpush1.bf16.xpose.msra.mxu0 0
    %1494 = vmatprep.subr.bf16.mxu0 0
    %1495 = vmatpush1.bf16.xpose.msra.mxu0 0
    %1496 = vmatprep.subr.bf16.mxu0 0
    %1497 = vmatpush1.bf16.xpose.msra.mxu0 0
    %1498 = vmatprep.subr.bf16.mxu0 0
    %1499 = vmatpush1.bf16.xpose.msra.mxu0 0
    %1500 = vmatprep.subr.bf16.mxu0 0
    %1501 = vmatpush1.bf16.xpose.msra.mxu0 0
    %1502 = vmatprep.mubr.bf16.mxu0 0
    %1503 = vmatmul.mubr.bf16.gmra.mrb[0].mxu0 %v1464
    %v1504 = vpop.f32.mrb[0].mxu0
    %v1505 = vadd.f32 0.0, %v1504
    %v1506 = vpop.f32.mrb[0].mxu0
    %v1507 = vpop.f32.mrb[0].mxu0
    %v1508 = vpop.f32.mrb[0].mxu0
    %1509 = vdwg.mxu0
    %vm1510 = vcmask 64512
    %v1511 = vsel %vm1510, %v1505, -inf
    %1512 = vmax.xlane.f32.xlu0 %v1511
    %v1513 = vpop.xlane.xlu0 %1512
    %v1514 = vsub.f32 %v1505, %v1513
    %v1515 = vmul.f32 %v1514, 1.442695
    %v1516 = vpow.pop %v1515
    %v1517 = vsel %vm1510, %v1516, 0.0
    %1518 = vadd.xlane.f32.xlu0 %v1517
    %v1519 = vpop.xlane.xlu0 %1518
    %v1520 = vrcp.pop %v1519
    %v1521 = vmul.f32 %v1516, %v1520
    %v1522 = vpack.c.bf16 %v1521, %v1521
    %v1524 = vsel %vm1510, %v1522, 0
    %v1527 = vsel %vm1316, %v1468, 0
    %1529 = vmatprep.subr.bf16.mxu0 0
    %1530 = vmatpush1.bf16.msra.mxu0 %v1527
    %1531 = vmatprep.subr.bf16.mxu0 0
    %1532 = vmatpush1.bf16.msra.mxu0 0
    %1533 = vmatprep.subr.bf16.mxu0 0
    %1534 = vmatpush1.bf16.msra.mxu0 0
    %1535 = vmatprep.subr.bf16.mxu0 0
    %1536 = vmatpush1.bf16.msra.mxu0 0
    %1537 = vmatprep.subr.bf16.mxu0 0
    %1538 = vmatpush1.bf16.msra.mxu0 0
    %1539 = vmatprep.subr.bf16.mxu0 0
    %1540 = vmatpush1.bf16.msra.mxu0 0
    %1541 = vmatprep.subr.bf16.mxu0 0
    %1542 = vmatpush1.bf16.msra.mxu0 0
    %1543 = vmatprep.subr.bf16.mxu0 0
    %1544 = vmatpush1.bf16.msra.mxu0 0
    %1545 = vmatprep.subr.bf16.mxu0 0
    %1546 = vmatpush1.bf16.msra.mxu0 0
    %1547 = vmatprep.subr.bf16.mxu0 0
    %1548 = vmatpush1.bf16.msra.mxu0 0
    %1549 = vmatprep.subr.bf16.mxu0 0
    %1550 = vmatpush1.bf16.msra.mxu0 0
    %1551 = vmatprep.subr.bf16.mxu0 0
    %1552 = vmatpush1.bf16.msra.mxu0 0
    %1553 = vmatprep.subr.bf16.mxu0 0
    %1554 = vmatpush1.bf16.msra.mxu0 0
    %1555 = vmatprep.subr.bf16.mxu0 0
    %1556 = vmatpush1.bf16.msra.mxu0 0
    %1557 = vmatprep.subr.bf16.mxu0 0
    %1558 = vmatpush1.bf16.msra.mxu0 0
    %1559 = vmatprep.subr.bf16.mxu0 0
    %1560 = vmatpush1.bf16.msra.mxu0 0
    %1561 = vmatprep.mubr.bf16.mxu0 0
    %1562 = vmatmul.mubr.bf16.gmra.mrb[0].mxu0 %v1524
    %v1563 = vpop.f32.mrb[0].mxu0
    %v1564 = vadd.f32 0.0, %v1563
    %v1565 = vpop.f32.mrb[0].mxu0
    %v1566 = vpop.f32.mrb[0].mxu0
    %v1567 = vpop.f32.mrb[0].mxu0
    %1568 = vdwg.mxu0
    %1569 = vmatprep.subr.bf16.mxu0 0
    %1570 = vmatpush1.bf16.xpose.msra.mxu0 %v1467
    %1571 = vmatprep.subr.bf16.mxu0 0
    %1572 = vmatpush1.bf16.xpose.msra.mxu0 0
    %1573 = vmatprep.subr.bf16.mxu0 0
    %1574 = vmatpush1.bf16.xpose.msra.mxu0 0
    %1575 = vmatprep.subr.bf16.mxu0 0
    %1576 = vmatpush1.bf16.xpose.msra.mxu0 0
    %1577 = vmatprep.subr.bf16.mxu0 0
    %1578 = vmatpush1.bf16.xpose.msra.mxu0 0
    %1579 = vmatprep.subr.bf16.mxu0 0
    %1580 = vmatpush1.bf16.xpose.msra.mxu0 0
    %1581 = vmatprep.subr.bf16.mxu0 0
    %1582 = vmatpush1.bf16.xpose.msra.mxu0 0
    %1583 = vmatprep.subr.bf16.mxu0 0
    %1584 = vmatpush1.bf16.xpose.msra.mxu0 0
    %1585 = vmatprep.subr.bf16.mxu0 0
    %1586 = vmatpush1.bf16.xpose.msra.mxu0 0
    %1587 = vmatprep.subr.bf16.mxu0 0
    %1588 = vmatpush1.bf16.xpose.msra.mxu0 0
    %1589 = vmatprep.subr.bf16.mxu0 0
    %1590 = vmatpush1.bf16.xpose.msra.mxu0 0
    %1591 = vmatprep.subr.bf16.mxu0 0
    %1592 = vmatpush1.bf16.xpose.msra.mxu0 0
    %1593 = vmatprep.subr.bf16.mxu0 0
    %1594 = vmatpush1.bf16.xpose.msra.mxu0 0
    %1595 = vmatprep.subr.bf16.mxu0 0
    %1596 = vmatpush1.bf16.xpose.msra.mxu0 0
    %1597 = vmatprep.subr.bf16.mxu0 0
    %1598 = vmatpush1.bf16.xpose.msra.mxu0 0
    %1599 = vmatprep.subr.bf16.mxu0 0
    %1600 = vmatpush1.bf16.xpose.msra.mxu0 0
    %1601 = vmatprep.mubr.bf16.mxu0 0
    %1602 = vmatmul.mubr.bf16.gmra.mrb[0].mxu0 %v1465
    %v1603 = vpop.f32.mrb[0].mxu0
    %v1604 = vadd.f32 0.0, %v1603
    %v1605 = vpop.f32.mrb[0].mxu0
    %v1606 = vpop.f32.mrb[0].mxu0
    %v1607 = vpop.f32.mrb[0].mxu0
    %1608 = vdwg.mxu0
    %v1609 = vsel %vm1510, %v1604, -inf
    %1610 = vmax.xlane.f32.xlu0 %v1609
    %v1611 = vpop.xlane.xlu0 %1610
    %v1612 = vsub.f32 %v1604, %v1611
    %v1613 = vmul.f32 %v1612, 1.442695
    %v1614 = vpow.pop %v1613
    %v1615 = vsel %vm1510, %v1614, 0.0
    %1616 = vadd.xlane.f32.xlu0 %v1615
    %v1617 = vpop.xlane.xlu0 %1616
    %v1618 = vrcp.pop %v1617
    %v1619 = vmul.f32 %v1614, %v1618
    %v1620 = vpack.c.bf16 %v1619, %v1619
    %v1622 = vsel %vm1510, %v1620, 0
    %v1625 = vsel %vm1316, %v1469, 0
    %1627 = vmatprep.subr.bf16.mxu0 0
    %1628 = vmatpush1.bf16.msra.mxu0 %v1625
    %1629 = vmatprep.subr.bf16.mxu0 0
    %1630 = vmatpush1.bf16.msra.mxu0 0
    %1631 = vmatprep.subr.bf16.mxu0 0
    %1632 = vmatpush1.bf16.msra.mxu0 0
    %1633 = vmatprep.subr.bf16.mxu0 0
    %1634 = vmatpush1.bf16.msra.mxu0 0
    %1635 = vmatprep.subr.bf16.mxu0 0
    %1636 = vmatpush1.bf16.msra.mxu0 0
    %1637 = vmatprep.subr.bf16.mxu0 0
    %1638 = vmatpush1.bf16.msra.mxu0 0
    %1639 = vmatprep.subr.bf16.mxu0 0
    %1640 = vmatpush1.bf16.msra.mxu0 0
    %1641 = vmatprep.subr.bf16.mxu0 0
    %1642 = vmatpush1.bf16.msra.mxu0 0
    %1643 = vmatprep.subr.bf16.mxu0 0
    %1644 = vmatpush1.bf16.msra.mxu0 0
    %1645 = vmatprep.subr.bf16.mxu0 0
    %1646 = vmatpush1.bf16.msra.mxu0 0
    %1647 = vmatprep.subr.bf16.mxu0 0
    %1648 = vmatpush1.bf16.msra.mxu0 0
    %1649 = vmatprep.subr.bf16.mxu0 0
    %1650 = vmatpush1.bf16.msra.mxu0 0
    %1651 = vmatprep.subr.bf16.mxu0 0
    %1652 = vmatpush1.bf16.msra.mxu0 0
    %1653 = vmatprep.subr.bf16.mxu0 0
    %1654 = vmatpush1.bf16.msra.mxu0 0
    %1655 = vmatprep.subr.bf16.mxu0 0
    %1656 = vmatpush1.bf16.msra.mxu0 0
    %1657 = vmatprep.subr.bf16.mxu0 0
    %1658 = vmatpush1.bf16.msra.mxu0 0
    %1659 = vmatprep.mubr.bf16.mxu0 0
    %1660 = vmatmul.mubr.bf16.gmra.mrb[0].mxu0 %v1622
    %v1661 = vpop.f32.mrb[0].mxu0
    %v1662 = vadd.f32 0.0, %v1661
    %v1663 = vpop.f32.mrb[0].mxu0
    %v1664 = vpop.f32.mrb[0].mxu0
    %v1665 = vpop.f32.mrb[0].mxu0
    %1666 = vdwg.mxu0
    %v1668 = vrot.slane %v1464, 4
    %v1671 = vrot.slane %v1466, 4
    %1673 = vmatprep.subr.bf16.mxu0 0
    %1674 = vmatpush1.bf16.xpose.msra.mxu0 %v1671
    %1675 = vmatprep.subr.bf16.mxu0 0
    %1676 = vmatpush1.bf16.xpose.msra.mxu0 0
    %1677 = vmatprep.subr.bf16.mxu0 0
    %1678 = vmatpush1.bf16.xpose.msra.mxu0 0
    %1679 = vmatprep.subr.bf16.mxu0 0
    %1680 = vmatpush1.bf16.xpose.msra.mxu0 0
    %1681 = vmatprep.subr.bf16.mxu0 0
    %1682 = vmatpush1.bf16.xpose.msra.mxu0 0
    %1683 = vmatprep.subr.bf16.mxu0 0
    %1684 = vmatpush1.bf16.xpose.msra.mxu0 0
    %1685 = vmatprep.subr.bf16.mxu0 0
    %1686 = vmatpush1.bf16.xpose.msra.mxu0 0
    %1687 = vmatprep.subr.bf16.mxu0 0
    %1688 = vmatpush1.bf16.xpose.msra.mxu0 0
    %1689 = vmatprep.subr.bf16.mxu0 0
    %1690 = vmatpush1.bf16.xpose.msra.mxu0 0
    %1691 = vmatprep.subr.bf16.mxu0 0
    %1692 = vmatpush1.bf16.xpose.msra.mxu0 0
    %1693 = vmatprep.subr.bf16.mxu0 0
    %1694 = vmatpush1.bf16.xpose.msra.mxu0 0
    %1695 = vmatprep.subr.bf16.mxu0 0
    %1696 = vmatpush1.bf16.xpose.msra.mxu0 0
    %1697 = vmatprep.subr.bf16.mxu0 0
    %1698 = vmatpush1.bf16.xpose.msra.mxu0 0
    %1699 = vmatprep.subr.bf16.mxu0 0
    %1700 = vmatpush1.bf16.xpose.msra.mxu0 0
    %1701 = vmatprep.subr.bf16.mxu0 0
    %1702 = vmatpush1.bf16.xpose.msra.mxu0 0
    %1703 = vmatprep.subr.bf16.mxu0 0
    %1704 = vmatpush1.bf16.xpose.msra.mxu0 0
    %1705 = vmatprep.mubr.bf16.mxu0 0
    %1706 = vmatmul.mubr.bf16.gmra.mrb[0].mxu0 %v1668
    %v1707 = vpop.f32.mrb[0].mxu0
    %v1708 = vadd.f32 0.0, %v1707
    %v1709 = vpop.f32.mrb[0].mxu0
    %v1710 = vpop.f32.mrb[0].mxu0
    %v1711 = vpop.f32.mrb[0].mxu0
    %1712 = vdwg.mxu0
    %v1713 = vsel %vm1510, %v1708, -inf
    %1714 = vmax.xlane.f32.xlu0 %v1713
    %v1715 = vpop.xlane.xlu0 %1714
    %v1716 = vsub.f32 %v1708, %v1715
    %v1717 = vmul.f32 %v1716, 1.442695
    %v1718 = vpow.pop %v1717
    %v1719 = vsel %vm1510, %v1718, 0.0
    %1720 = vadd.xlane.f32.xlu0 %v1719
    %v1721 = vpop.xlane.xlu0 %1720
    %v1722 = vrcp.pop %v1721
    %v1723 = vmul.f32 %v1718, %v1722
    %v1724 = vpack.c.bf16 %v1723, %v1723
    %v1726 = vrot.slane %v1468, 4
    %v1728 = vsel %vm1510, %v1724, 0
    %v1731 = vsel %vm1316, %v1726, 0
    %1733 = vmatprep.subr.bf16.mxu0 0
    %1734 = vmatpush1.bf16.msra.mxu0 %v1731
    %1735 = vmatprep.subr.bf16.mxu0 0
    %1736 = vmatpush1.bf16.msra.mxu0 0
    %1737 = vmatprep.subr.bf16.mxu0 0
    %1738 = vmatpush1.bf16.msra.mxu0 0
    %1739 = vmatprep.subr.bf16.mxu0 0
    %1740 = vmatpush1.bf16.msra.mxu0 0
    %1741 = vmatprep.subr.bf16.mxu0 0
    %1742 = vmatpush1.bf16.msra.mxu0 0
    %1743 = vmatprep.subr.bf16.mxu0 0
    %1744 = vmatpush1.bf16.msra.mxu0 0
    %1745 = vmatprep.subr.bf16.mxu0 0
    %1746 = vmatpush1.bf16.msra.mxu0 0
    %1747 = vmatprep.subr.bf16.mxu0 0
    %1748 = vmatpush1.bf16.msra.mxu0 0
    %1749 = vmatprep.subr.bf16.mxu0 0
    %1750 = vmatpush1.bf16.msra.mxu0 0
    %1751 = vmatprep.subr.bf16.mxu0 0
    %1752 = vmatpush1.bf16.msra.mxu0 0
    %1753 = vmatprep.subr.bf16.mxu0 0
    %1754 = vmatpush1.bf16.msra.mxu0 0
    %1755 = vmatprep.subr.bf16.mxu0 0
    %1756 = vmatpush1.bf16.msra.mxu0 0
    %1757 = vmatprep.subr.bf16.mxu0 0
    %1758 = vmatpush1.bf16.msra.mxu0 0
    %1759 = vmatprep.subr.bf16.mxu0 0
    %1760 = vmatpush1.bf16.msra.mxu0 0
    %1761 = vmatprep.subr.bf16.mxu0 0
    %1762 = vmatpush1.bf16.msra.mxu0 0
    %1763 = vmatprep.subr.bf16.mxu0 0
    %1764 = vmatpush1.bf16.msra.mxu0 0
    %1765 = vmatprep.mubr.bf16.mxu0 0
    %1766 = vmatmul.mubr.bf16.gmra.mrb[0].mxu0 %v1728
    %v1767 = vpop.f32.mrb[0].mxu0
    %v1768 = vadd.f32 0.0, %v1767
    %v1769 = vpop.f32.mrb[0].mxu0
    %v1770 = vpop.f32.mrb[0].mxu0
    %v1771 = vpop.f32.mrb[0].mxu0
    %1772 = vdwg.mxu0
    %v1774 = vrot.slane %v1465, 4
    %v1777 = vrot.slane %v1467, 4
    %1779 = vmatprep.subr.bf16.mxu0 0
    %1780 = vmatpush1.bf16.xpose.msra.mxu0 %v1777
    %1781 = vmatprep.subr.bf16.mxu0 0
    %1782 = vmatpush1.bf16.xpose.msra.mxu0 0
    %1783 = vmatprep.subr.bf16.mxu0 0
    %1784 = vmatpush1.bf16.xpose.msra.mxu0 0
    %1785 = vmatprep.subr.bf16.mxu0 0
    %1786 = vmatpush1.bf16.xpose.msra.mxu0 0
    %1787 = vmatprep.subr.bf16.mxu0 0
    %1788 = vmatpush1.bf16.xpose.msra.mxu0 0
    %1789 = vmatprep.subr.bf16.mxu0 0
    %1790 = vmatpush1.bf16.xpose.msra.mxu0 0
    %1791 = vmatprep.subr.bf16.mxu0 0
    %1792 = vmatpush1.bf16.xpose.msra.mxu0 0
    %1793 = vmatprep.subr.bf16.mxu0 0
    %1794 = vmatpush1.bf16.xpose.msra.mxu0 0
    %1795 = vmatprep.subr.bf16.mxu0 0
    %1796 = vmatpush1.bf16.xpose.msra.mxu0 0
    %1797 = vmatprep.subr.bf16.mxu0 0
    %1798 = vmatpush1.bf16.xpose.msra.mxu0 0
    %1799 = vmatprep.subr.bf16.mxu0 0
    %1800 = vmatpush1.bf16.xpose.msra.mxu0 0
    %1801 = vmatprep.subr.bf16.mxu0 0
    %1802 = vmatpush1.bf16.xpose.msra.mxu0 0
    %1803 = vmatprep.subr.bf16.mxu0 0
    %1804 = vmatpush1.bf16.xpose.msra.mxu0 0
    %1805 = vmatprep.subr.bf16.mxu0 0
    %1806 = vmatpush1.bf16.xpose.msra.mxu0 0
    %1807 = vmatprep.subr.bf16.mxu0 0
    %1808 = vmatpush1.bf16.xpose.msra.mxu0 0
    %1809 = vmatprep.subr.bf16.mxu0 0
    %1810 = vmatpush1.bf16.xpose.msra.mxu0 0
    %1811 = vmatprep.mubr.bf16.mxu0 0
    %1812 = vmatmul.mubr.bf16.gmra.mrb[0].mxu0 %v1774
    %v1813 = vpop.f32.mrb[0].mxu0
    %v1814 = vadd.f32 0.0, %v1813
    %v1815 = vpop.f32.mrb[0].mxu0
    %v1816 = vpop.f32.mrb[0].mxu0
    %v1817 = vpop.f32.mrb[0].mxu0
    %1818 = vdwg.mxu0
    %v1819 = vsel %vm1510, %v1814, -inf
    %1820 = vmax.xlane.f32.xlu0 %v1819
    %v1821 = vpop.xlane.xlu0 %1820
    %v1822 = vsub.f32 %v1814, %v1821
    %v1823 = vmul.f32 %v1822, 1.442695
    %v1824 = vpow.pop %v1823
    %v1825 = vsel %vm1510, %v1824, 0.0
    %1826 = vadd.xlane.f32.xlu0 %v1825
    %v1827 = vpop.xlane.xlu0 %1826
    %v1828 = vrcp.pop %v1827
    %v1829 = vmul.f32 %v1824, %v1828
    %v1830 = vpack.c.bf16 %v1829, %v1829
    %v1832 = vrot.slane %v1469, 4
    %v1834 = vsel %vm1510, %v1830, 0
    %v1837 = vsel %vm1316, %v1832, 0
    %1839 = vmatprep.subr.bf16.mxu0 0
    %1840 = vmatpush1.bf16.msra.mxu0 %v1837
    %1841 = vmatprep.subr.bf16.mxu0 0
    %1842 = vmatpush1.bf16.msra.mxu0 0
    %1843 = vmatprep.subr.bf16.mxu0 0
    %1844 = vmatpush1.bf16.msra.mxu0 0
    %1845 = vmatprep.subr.bf16.mxu0 0
    %1846 = vmatpush1.bf16.msra.mxu0 0
    %1847 = vmatprep.subr.bf16.mxu0 0
    %1848 = vmatpush1.bf16.msra.mxu0 0
    %1849 = vmatprep.subr.bf16.mxu0 0
    %1850 = vmatpush1.bf16.msra.mxu0 0
    %1851 = vmatprep.subr.bf16.mxu0 0
    %1852 = vmatpush1.bf16.msra.mxu0 0
    %1853 = vmatprep.subr.bf16.mxu0 0
    %1854 = vmatpush1.bf16.msra.mxu0 0
    %1855 = vmatprep.subr.bf16.mxu0 0
    %1856 = vmatpush1.bf16.msra.mxu0 0
    %1857 = vmatprep.subr.bf16.mxu0 0
    %1858 = vmatpush1.bf16.msra.mxu0 0
    %1859 = vmatprep.subr.bf16.mxu0 0
    %1860 = vmatpush1.bf16.msra.mxu0 0
    %1861 = vmatprep.subr.bf16.mxu0 0
    %1862 = vmatpush1.bf16.msra.mxu0 0
    %1863 = vmatprep.subr.bf16.mxu0 0
    %1864 = vmatpush1.bf16.msra.mxu0 0
    %1865 = vmatprep.subr.bf16.mxu0 0
    %1866 = vmatpush1.bf16.msra.mxu0 0
    %1867 = vmatprep.subr.bf16.mxu0 0
    %1868 = vmatpush1.bf16.msra.mxu0 0
    %1869 = vmatprep.subr.bf16.mxu0 0
    %1870 = vmatpush1.bf16.msra.mxu0 0
    %1871 = vmatprep.mubr.bf16.mxu0 0
    %1872 = vmatmul.mubr.bf16.gmra.mrb[0].mxu0 %v1834
    %v1873 = vpop.f32.mrb[0].mxu0
    %v1874 = vadd.f32 0.0, %v1873
    %v1875 = vpop.f32.mrb[0].mxu0
    %v1876 = vpop.f32.mrb[0].mxu0
    %v1877 = vpop.f32.mrb[0].mxu0
    %1878 = vdwg.mxu0
    %v1879 = vpack.c.bf16 %v1768, %v1564
    %v1880 = vpack.c.bf16 %v1874, %v1662
    %v1881 = vld [vmem:[%s5] sm:$0xff]
    %v1882 = vld [vmem:[%s5 + $0x8] sm:$0xff]
    %v1883 = vld [vmem:[%s5 + $0x10] sm:$0xff]
    %v1884 = vld [vmem:[%s5 + $0x18] sm:$0xff]
    %v1885 = vld [vmem:[%s5 + $0x20] sm:$0xff]
    %v1886 = vld [vmem:[%s5 + $0x28] sm:$0xff]
    %v1887 = vld [vmem:[%s5 + $0x30] sm:$0xff]
    %v1888 = vld [vmem:[%s5 + $0x38] sm:$0xff]
    %v1889 = vld [vmem:[%s5 + $0x40] sm:$0xff]
    %v1890 = vld [vmem:[%s5 + $0x48] sm:$0xff]
    %v1891 = vld [vmem:[%s5 + $0x50] sm:$0xff]
    %v1892 = vld [vmem:[%s5 + $0x58] sm:$0xff]
    %v1893 = vld [vmem:[%s5 + $0x60] sm:$0xff]
    %v1894 = vld [vmem:[%s5 + $0x68] sm:$0xff]
    %v1895 = vld [vmem:[%s5 + $0x70] sm:$0xff]
    %v1896 = vld [vmem:[%s5 + $0x78] sm:$0xff]
    %v1897 = vld [vmem:[%s5 + $0x80] sm:$0xff]
    %v1898 = vld [vmem:[%s5 + $0x88] sm:$0xff]
    %v1899 = vld [vmem:[%s5 + $0x90] sm:$0xff]
    %v1900 = vld [vmem:[%s5 + $0x98] sm:$0xff]
    %v1901 = vld [vmem:[%s5 + $0xa0] sm:$0xff]
    %v1902 = vld [vmem:[%s5 + $0xa8] sm:$0xff]
    %v1903 = vld [vmem:[%s5 + $0xb0] sm:$0xff]
    %v1904 = vld [vmem:[%s5 + $0xb8] sm:$0xff]
    %v1905 = vld [vmem:[%s5 + $0xc0] sm:$0xff]
    %v1906 = vld [vmem:[%s5 + $0xc8] sm:$0xff]
    %v1907 = vld [vmem:[%s5 + $0xd0] sm:$0xff]
    %v1908 = vld [vmem:[%s5 + $0xd8] sm:$0xff]
    %v1909 = vld [vmem:[%s5 + $0xe0] sm:$0xff]
    %v1910 = vld [vmem:[%s5 + $0xe8] sm:$0xff]
    %v1911 = vld [vmem:[%s5 + $0xf0] sm:$0xff]
    %v1912 = vld [vmem:[%s5 + $0xf8] sm:$0xff]
    %v1913 = vld [vmem:[%s6] sm:$0x3]
    %v1915 = vlaneseq
    %v1916 = vshrl.u32 %v1915, 7
    %v1917 = vsub.s32 0, %v1916
    %v1918 = vrot.slane %v1913, %v1917
    %v1919 = vlaneseq
    %v1920 = vshrl.u32 %v1919, 7
    %v1921 = vsub.s32 1, %v1920
    %v1922 = vrot.slane %v1913, %v1921
    %v1957 = vunpack.c.l.b16 %v1881
    %v1958 = vunpack.c.h.b16 %v1881
    %v1959 = vunpack.c.l.b16 %v1882
    %v1960 = vunpack.c.h.b16 %v1882
    %v1961 = vunpack.c.l.b16 %v1883
    %v1962 = vunpack.c.h.b16 %v1883
    %v1963 = vunpack.c.l.b16 %v1884
    %v1964 = vunpack.c.h.b16 %v1884
    %v1965 = vunpack.c.l.b16 %v1885
    %v1966 = vunpack.c.h.b16 %v1885
    %v1967 = vunpack.c.l.b16 %v1886
    %v1968 = vunpack.c.h.b16 %v1886
    %v1969 = vunpack.c.l.b16 %v1887
    %v1970 = vunpack.c.h.b16 %v1887
    %v1971 = vunpack.c.l.b16 %v1888
    %v1972 = vunpack.c.h.b16 %v1888
    %v1973 = vunpack.c.l.b16 %v1889
    %v1974 = vunpack.c.h.b16 %v1889
    %v1975 = vunpack.c.l.b16 %v1890
    %v1976 = vunpack.c.h.b16 %v1890
    %v1977 = vunpack.c.l.b16 %v1891
    %v1978 = vunpack.c.h.b16 %v1891
    %v1979 = vunpack.c.l.b16 %v1892
    %v1980 = vunpack.c.h.b16 %v1892
    %v1981 = vunpack.c.l.b16 %v1893
    %v1982 = vunpack.c.h.b16 %v1893
    %v1983 = vunpack.c.l.b16 %v1894
    %v1984 = vunpack.c.h.b16 %v1894
    %v1985 = vunpack.c.l.b16 %v1895
    %v1986 = vunpack.c.h.b16 %v1895
    %v1987 = vunpack.c.l.b16 %v1896
    %v1988 = vunpack.c.h.b16 %v1896
    %v1989 = vunpack.c.l.b16 %v1897
    %v1990 = vunpack.c.h.b16 %v1897
    %v1991 = vunpack.c.l.b16 %v1898
    %v1992 = vunpack.c.h.b16 %v1898
    %v1993 = vunpack.c.l.b16 %v1899
    %v1994 = vunpack.c.h.b16 %v1899
    %v1995 = vunpack.c.l.b16 %v1900
    %v1996 = vunpack.c.h.b16 %v1900
    %v1997 = vunpack.c.l.b16 %v1901
    %v1998 = vunpack.c.h.b16 %v1901
    %v1999 = vunpack.c.l.b16 %v1902
    %v2000 = vunpack.c.h.b16 %v1902
    %v2001 = vunpack.c.l.b16 %v1903
    %v2002 = vunpack.c.h.b16 %v1903
    %v2003 = vunpack.c.l.b16 %v1904
    %v2004 = vunpack.c.h.b16 %v1904
    %v2005 = vunpack.c.l.b16 %v1905
    %v2006 = vunpack.c.h.b16 %v1905
    %v2007 = vunpack.c.l.b16 %v1906
    %v2008 = vunpack.c.h.b16 %v1906
    %v2009 = vunpack.c.l.b16 %v1907
    %v2010 = vunpack.c.h.b16 %v1907
    %v2011 = vunpack.c.l.b16 %v1908
    %v2012 = vunpack.c.h.b16 %v1908
    %v2013 = vunpack.c.l.b16 %v1909
    %v2014 = vunpack.c.h.b16 %v1909
    %v2015 = vunpack.c.l.b16 %v1910
    %v2016 = vunpack.c.h.b16 %v1910
    %v2017 = vunpack.c.l.b16 %v1911
    %v2018 = vunpack.c.h.b16 %v1911
    %v2019 = vunpack.c.l.b16 %v1912
    %v2020 = vunpack.c.h.b16 %v1912
    %v2021 = vpack.c.b16 %v1959, %v1957
    %v2022 = vpack.c.b16 %v1960, %v1958
    %v2023 = vpack.c.b16 %v1963, %v1961
    %v2024 = vpack.c.b16 %v1964, %v1962
    %v2025 = vpack.c.b16 %v1967, %v1965
    %v2026 = vpack.c.b16 %v1968, %v1966
    %v2027 = vpack.c.b16 %v1971, %v1969
    %v2028 = vpack.c.b16 %v1972, %v1970
    %v2029 = vpack.c.b16 %v1975, %v1973
    %v2030 = vpack.c.b16 %v1976, %v1974
    %v2031 = vpack.c.b16 %v1979, %v1977
    %v2032 = vpack.c.b16 %v1980, %v1978
    %v2033 = vpack.c.b16 %v1983, %v1981
    %v2034 = vpack.c.b16 %v1984, %v1982
    %v2035 = vpack.c.b16 %v1987, %v1985
    %v2036 = vpack.c.b16 %v1988, %v1986
    %v2037 = vpack.c.b16 %v1991, %v1989
    %v2038 = vpack.c.b16 %v1992, %v1990
    %v2039 = vpack.c.b16 %v1995, %v1993
    %v2040 = vpack.c.b16 %v1996, %v1994
    %v2041 = vpack.c.b16 %v1999, %v1997
    %v2042 = vpack.c.b16 %v2000, %v1998
    %v2043 = vpack.c.b16 %v2003, %v2001
    %v2044 = vpack.c.b16 %v2004, %v2002
    %v2045 = vpack.c.b16 %v2007, %v2005
    %v2046 = vpack.c.b16 %v2008, %v2006
    %v2047 = vpack.c.b16 %v2011, %v2009
    %v2048 = vpack.c.b16 %v2012, %v2010
    %v2049 = vpack.c.b16 %v2015, %v2013
    %v2050 = vpack.c.b16 %v2016, %v2014
    %v2051 = vpack.c.b16 %v2019, %v2017
    %v2052 = vpack.c.b16 %v2020, %v2018
    %2085 = vmatprep.subr.bf16.mxu0 %v2022
    %2086 = vmatpush1.bf16.msra.mxu0 %v2021
    %2087 = vmatprep.subr.bf16.mxu0 %v2024
    %2088 = vmatpush1.bf16.msra.mxu0 %v2023
    %2089 = vmatprep.subr.bf16.mxu0 %v2026
    %2090 = vmatpush1.bf16.msra.mxu0 %v2025
    %2091 = vmatprep.subr.bf16.mxu0 %v2028
    %2092 = vmatpush1.bf16.msra.mxu0 %v2027
    %2093 = vmatprep.subr.bf16.mxu0 %v2030
    %2094 = vmatpush1.bf16.msra.mxu0 %v2029
    %2095 = vmatprep.subr.bf16.mxu0 %v2032
    %2096 = vmatpush1.bf16.msra.mxu0 %v2031
    %2097 = vmatprep.subr.bf16.mxu0 %v2034
    %2098 = vmatpush1.bf16.msra.mxu0 %v2033
    %2099 = vmatprep.subr.bf16.mxu0 %v2036
    %2100 = vmatpush1.bf16.msra.mxu0 %v2035
    %2101 = vmatprep.subr.bf16.mxu0 %v2038
    %2102 = vmatpush1.bf16.msra.mxu0 %v2037
    %2103 = vmatprep.subr.bf16.mxu0 %v2040
    %2104 = vmatpush1.bf16.msra.mxu0 %v2039
    %2105 = vmatprep.subr.bf16.mxu0 %v2042
    %2106 = vmatpush1.bf16.msra.mxu0 %v2041
    %2107 = vmatprep.subr.bf16.mxu0 %v2044
    %2108 = vmatpush1.bf16.msra.mxu0 %v2043
    %2109 = vmatprep.subr.bf16.mxu0 %v2046
    %2110 = vmatpush1.bf16.msra.mxu0 %v2045
    %2111 = vmatprep.subr.bf16.mxu0 %v2048
    %2112 = vmatpush1.bf16.msra.mxu0 %v2047
    %2113 = vmatprep.subr.bf16.mxu0 %v2050
    %2114 = vmatpush1.bf16.msra.mxu0 %v2049
    %2115 = vmatprep.subr.bf16.mxu0 %v2052
    %2116 = vmatpush1.bf16.msra.mxu0 %v2051
    %2117 = vmatprep.mubr.bf16.mxu0 %v1880
    %2118 = vmatmul.mubr.bf16.gmra.mrb[0].mxu0 %v1879
    %v2119 = vpop.f32.mrb[0].mxu0
    %v2120 = vadd.f32 %v1918, %v2119
    %v2121 = vpop.f32.mrb[0].mxu0
    %v2122 = vadd.f32 %v1922, %v2121
    %v2123 = vpop.f32.mrb[0].mxu0
    %v2124 = vadd.f32 %v1918, %v2123
    %v2125 = vpop.f32.mrb[0].mxu0
    %v2126 = vadd.f32 %v1922, %v2125
    %2127 = vdwg.mxu0
    %v2128 = vadd.f32 %v824, %v2120
    %v2129 = vadd.f32 %v825, %v2122
    %v2130 = vadd.f32 %v826, %v2124
    %v2131 = vadd.f32 %v827, %v2126
    %v2132 = vld [vmem:[%s11] sm:$0x3]
    %v2133 = vld [vmem:[%s12] sm:$0x3]
    %v2134 = vsel %vm1312, %v2129, 0.0
    %v2135 = vadd.f32 %v2128, %v2134
    %2136 = vadd.xlane.f32.xlu0 %v2135
    %v2137 = vpop.xlane.xlu0 %2136
    %v2138 = vsel %vm1312, %v2131, 0.0
    %v2139 = vadd.f32 %v2130, %v2138
    %2140 = vadd.xlane.f32.xlu0 %v2139
    %v2141 = vpop.xlane.xlu0 %2140
    %v2142 = vrcp.pop 200.0
    %v2143 = vmul.f32 %v2137, %v2142
    %v2144 = vmul.f32 %v2141, %v2142
    %v2145 = vsub.f32 %v2128, %v2143
    %v2146 = vsub.f32 %v2129, %v2143
    %v2147 = vsub.f32 %v2130, %v2144
    %v2148 = vsub.f32 %v2131, %v2144
    %v2149 = vmul.f32 %v2145, %v2145
    %v2150 = vmul.f32 %v2146, %v2146
    %v2151 = vmul.f32 %v2147, %v2147
    %v2152 = vmul.f32 %v2148, %v2148
    %v2153 = vsel %vm1312, %v2150, 0.0
    %v2154 = vadd.f32 %v2149, %v2153
    %2155 = vadd.xlane.f32.xlu0 %v2154
    %v2156 = vpop.xlane.xlu0 %2155
    %v2157 = vsel %vm1312, %v2152, 0.0
    %v2158 = vadd.f32 %v2151, %v2157
    %2159 = vadd.xlane.f32.xlu0 %v2158
    %v2160 = vpop.xlane.xlu0 %2159
    %v2161 = vmul.f32 %v2156, %v2142
    %v2162 = vmul.f32 %v2160, %v2142
    %v2163 = vadd.f32 %v2161, 1e-05
    %v2164 = vadd.f32 %v2162, 1e-05
    %v2165 = vrsqrt.pop %v2163
    %v2166 = vrsqrt.pop %v2164
    %v2167 = vmul.f32 %v2145, %v2165
    %v2168 = vmul.f32 %v2146, %v2165
    %v2169 = vmul.f32 %v2147, %v2166
    %v2170 = vmul.f32 %v2148, %v2166
    %v2172 = vlaneseq
    %v2173 = vshrl.u32 %v2172, 7
    %v2174 = vsub.s32 0, %v2173
    %v2175 = vrot.slane %v2132, %v2174
    %v2176 = vlaneseq
    %v2177 = vshrl.u32 %v2176, 7
    %v2178 = vsub.s32 1, %v2177
    %v2179 = vrot.slane %v2132, %v2178
    %v2182 = vmul.f32 %v2167, %v2175
    %v2183 = vmul.f32 %v2168, %v2179
    %v2184 = vmul.f32 %v2169, %v2175
    %v2185 = vmul.f32 %v2170, %v2179
    %v2187 = vlaneseq
    %v2188 = vshrl.u32 %v2187, 7
    %v2189 = vsub.s32 0, %v2188
    %v2190 = vrot.slane %v2133, %v2189
    %v2191 = vlaneseq
    %v2192 = vshrl.u32 %v2191, 7
    %v2193 = vsub.s32 1, %v2192
    %v2194 = vrot.slane %v2133, %v2193
    %v2197 = vadd.f32 %v2182, %v2190
    %v2198 = vadd.f32 %v2183, %v2194
    %v2199 = vadd.f32 %v2184, %v2190
    %v2200 = vadd.f32 %v2185, %v2194
    %v2201 = vpack.c.bf16 %v2199, %v2197
    %v2202 = vpack.c.bf16 %v2200, %v2198
    %v2203 = vld [vmem:[%s7] sm:$0xff]
    %v2204 = vld [vmem:[%s7 + $0x8] sm:$0xff]
    %v2205 = vld [vmem:[%s7 + $0x10] sm:$0xff]
    %v2206 = vld [vmem:[%s7 + $0x18] sm:$0xff]
    %v2207 = vld [vmem:[%s7 + $0x20] sm:$0xff]
    %v2208 = vld [vmem:[%s7 + $0x28] sm:$0xff]
    %v2209 = vld [vmem:[%s7 + $0x30] sm:$0xff]
    %v2210 = vld [vmem:[%s7 + $0x38] sm:$0xff]
    %v2211 = vld [vmem:[%s7 + $0x40] sm:$0xff]
    %v2212 = vld [vmem:[%s7 + $0x48] sm:$0xff]
    %v2213 = vld [vmem:[%s7 + $0x50] sm:$0xff]
    %v2214 = vld [vmem:[%s7 + $0x58] sm:$0xff]
    %v2215 = vld [vmem:[%s7 + $0x60] sm:$0xff]
    %v2216 = vld [vmem:[%s7 + $0x68] sm:$0xff]
    %v2217 = vld [vmem:[%s7 + $0x70] sm:$0xff]
    %v2218 = vld [vmem:[%s7 + $0x78] sm:$0xff]
    %v2219 = vld [vmem:[%s7 + $0x80] sm:$0xff]
    %v2220 = vld [vmem:[%s7 + $0x88] sm:$0xff]
    %v2221 = vld [vmem:[%s7 + $0x90] sm:$0xff]
    %v2222 = vld [vmem:[%s7 + $0x98] sm:$0xff]
    %v2223 = vld [vmem:[%s7 + $0xa0] sm:$0xff]
    %v2224 = vld [vmem:[%s7 + $0xa8] sm:$0xff]
    %v2225 = vld [vmem:[%s7 + $0xb0] sm:$0xff]
    %v2226 = vld [vmem:[%s7 + $0xb8] sm:$0xff]
    %v2227 = vld [vmem:[%s7 + $0xc0] sm:$0xff]
    %v2228 = vld [vmem:[%s8] sm:$0x3]
    %v2230 = vlaneseq
    %v2231 = vshrl.u32 %v2230, 7
    %v2232 = vsub.s32 0, %v2231
    %v2233 = vrot.slane %v2228, %v2232
    %v2234 = vlaneseq
    %v2235 = vshrl.u32 %v2234, 7
    %v2236 = vsub.s32 1, %v2235
    %v2237 = vrot.slane %v2228, %v2236
    %v2265 = vunpack.c.l.b16 %v2203
    %v2266 = vunpack.c.h.b16 %v2203
    %v2267 = vunpack.c.l.b16 %v2204
    %v2268 = vunpack.c.h.b16 %v2204
    %v2269 = vunpack.c.l.b16 %v2205
    %v2270 = vunpack.c.h.b16 %v2205
    %v2271 = vunpack.c.l.b16 %v2206
    %v2272 = vunpack.c.h.b16 %v2206
    %v2273 = vunpack.c.l.b16 %v2207
    %v2274 = vunpack.c.h.b16 %v2207
    %v2275 = vunpack.c.l.b16 %v2208
    %v2276 = vunpack.c.h.b16 %v2208
    %v2277 = vunpack.c.l.b16 %v2209
    %v2278 = vunpack.c.h.b16 %v2209
    %v2279 = vunpack.c.l.b16 %v2210
    %v2280 = vunpack.c.h.b16 %v2210
    %v2281 = vunpack.c.l.b16 %v2211
    %v2282 = vunpack.c.h.b16 %v2211
    %v2283 = vunpack.c.l.b16 %v2212
    %v2284 = vunpack.c.h.b16 %v2212
    %v2285 = vunpack.c.l.b16 %v2213
    %v2286 = vunpack.c.h.b16 %v2213
    %v2287 = vunpack.c.l.b16 %v2214
    %v2288 = vunpack.c.h.b16 %v2214
    %v2289 = vunpack.c.l.b16 %v2215
    %v2290 = vunpack.c.h.b16 %v2215
    %v2291 = vunpack.c.l.b16 %v2216
    %v2292 = vunpack.c.h.b16 %v2216
    %v2293 = vunpack.c.l.b16 %v2217
    %v2294 = vunpack.c.h.b16 %v2217
    %v2295 = vunpack.c.l.b16 %v2218
    %v2296 = vunpack.c.h.b16 %v2218
    %v2297 = vunpack.c.l.b16 %v2219
    %v2298 = vunpack.c.h.b16 %v2219
    %v2299 = vunpack.c.l.b16 %v2220
    %v2300 = vunpack.c.h.b16 %v2220
    %v2301 = vunpack.c.l.b16 %v2221
    %v2302 = vunpack.c.h.b16 %v2221
    %v2303 = vunpack.c.l.b16 %v2222
    %v2304 = vunpack.c.h.b16 %v2222
    %v2305 = vunpack.c.l.b16 %v2223
    %v2306 = vunpack.c.h.b16 %v2223
    %v2307 = vunpack.c.l.b16 %v2224
    %v2308 = vunpack.c.h.b16 %v2224
    %v2309 = vunpack.c.l.b16 %v2225
    %v2310 = vunpack.c.h.b16 %v2225
    %v2311 = vunpack.c.l.b16 %v2226
    %v2312 = vunpack.c.h.b16 %v2226
    %v2313 = vunpack.c.l.b16 %v2227
    %v2314 = vunpack.c.h.b16 %v2227
    %v2315 = vpack.c.b16 %v2267, %v2265
    %v2316 = vpack.c.b16 %v2268, %v2266
    %v2317 = vpack.c.b16 %v2271, %v2269
    %v2318 = vpack.c.b16 %v2272, %v2270
    %v2319 = vpack.c.b16 %v2275, %v2273
    %v2320 = vpack.c.b16 %v2276, %v2274
    %v2321 = vpack.c.b16 %v2279, %v2277
    %v2322 = vpack.c.b16 %v2280, %v2278
    %v2323 = vpack.c.b16 %v2283, %v2281
    %v2324 = vpack.c.b16 %v2284, %v2282
    %v2325 = vpack.c.b16 %v2287, %v2285
    %v2326 = vpack.c.b16 %v2288, %v2286
    %v2327 = vpack.c.b16 %v2291, %v2289
    %v2328 = vpack.c.b16 %v2292, %v2290
    %v2329 = vpack.c.b16 %v2295, %v2293
    %v2330 = vpack.c.b16 %v2296, %v2294
    %v2331 = vpack.c.b16 %v2299, %v2297
    %v2332 = vpack.c.b16 %v2300, %v2298
    %v2333 = vpack.c.b16 %v2303, %v2301
    %v2334 = vpack.c.b16 %v2304, %v2302
    %v2335 = vpack.c.b16 %v2307, %v2305
    %v2336 = vpack.c.b16 %v2308, %v2306
    %v2337 = vpack.c.b16 %v2311, %v2309
    %v2338 = vpack.c.b16 %v2312, %v2310
    %v2339 = vpack.c.b16 %v2313, %v2313
    %v2340 = vpack.c.b16 %v2314, %v2314
    %v2366 = vsel %vm1312, %v2202, 0
    %v2369 = vsel %vm1316, %v2339, 0
    %v2372 = vsel %vm1316, %v2340, 0
    %2374 = vmatprep.subr.bf16.mxu0 %v2316
    %2375 = vmatpush1.bf16.msra.mxu0 %v2315
    %2376 = vmatprep.subr.bf16.mxu0 %v2318
    %2377 = vmatpush1.bf16.msra.mxu0 %v2317
    %2378 = vmatprep.subr.bf16.mxu0 %v2320
    %2379 = vmatpush1.bf16.msra.mxu0 %v2319
    %2380 = vmatprep.subr.bf16.mxu0 %v2322
    %2381 = vmatpush1.bf16.msra.mxu0 %v2321
    %2382 = vmatprep.subr.bf16.mxu0 %v2324
    %2383 = vmatpush1.bf16.msra.mxu0 %v2323
    %2384 = vmatprep.subr.bf16.mxu0 %v2326
    %2385 = vmatpush1.bf16.msra.mxu0 %v2325
    %2386 = vmatprep.subr.bf16.mxu0 %v2328
    %2387 = vmatpush1.bf16.msra.mxu0 %v2327
    %2388 = vmatprep.subr.bf16.mxu0 %v2330
    %2389 = vmatpush1.bf16.msra.mxu0 %v2329
    %2390 = vmatprep.subr.bf16.mxu0 %v2332
    %2391 = vmatpush1.bf16.msra.mxu0 %v2331
    %2392 = vmatprep.subr.bf16.mxu0 %v2334
    %2393 = vmatpush1.bf16.msra.mxu0 %v2333
    %2394 = vmatprep.subr.bf16.mxu0 %v2336
    %2395 = vmatpush1.bf16.msra.mxu0 %v2335
    %2396 = vmatprep.subr.bf16.mxu0 %v2338
    %2397 = vmatpush1.bf16.msra.mxu0 %v2337
    %2398 = vmatprep.subr.bf16.mxu0 %v2372
    %2399 = vmatpush1.bf16.msra.mxu0 %v2369
    %2400 = vmatprep.subr.bf16.mxu0 0
    %2401 = vmatpush1.bf16.msra.mxu0 0
    %2402 = vmatprep.subr.bf16.mxu0 0
    %2403 = vmatpush1.bf16.msra.mxu0 0
    %2404 = vmatprep.subr.bf16.mxu0 0
    %2405 = vmatpush1.bf16.msra.mxu0 0
    %2406 = vmatprep.mubr.bf16.mxu0 %v2366
    %2407 = vmatmul.mubr.bf16.gmra.mrb[0].mxu0 %v2201
    %v2408 = vpop.f32.mrb[0].mxu0
    %v2409 = vadd.f32 %v2233, %v2408
    %v2410 = vpop.f32.mrb[0].mxu0
    %v2411 = vadd.f32 %v2237, %v2410
    %v2412 = vpop.f32.mrb[0].mxu0
    %v2413 = vadd.f32 %v2233, %v2412
    %v2414 = vpop.f32.mrb[0].mxu0
    %v2415 = vadd.f32 %v2237, %v2414
    %2416 = vdwg.mxu0
    %v2417 = vmax.f32 %v2409, 0.0
    %v2418 = vmax.f32 %v2411, 0.0
    %v2419 = vmax.f32 %v2413, 0.0
    %v2420 = vmax.f32 %v2415, 0.0
    %v2421 = vpack.c.bf16 %v2419, %v2417
    %v2422 = vpack.c.bf16 %v2420, %v2418
    %v2423 = vld [vmem:[#allocation2] sm:$0xff]
    %v2424 = vld [vmem:[#allocation2 + $0x8] sm:$0xff]
    %v2425 = vld [vmem:[#allocation2 + $0x10] sm:$0xff]
    %v2426 = vld [vmem:[#allocation2 + $0x18] sm:$0xff]
    %v2427 = vld [vmem:[#allocation2 + $0x20] sm:$0xff]
    %v2428 = vld [vmem:[#allocation2 + $0x28] sm:$0xff]
    %v2429 = vld [vmem:[#allocation2 + $0x30] sm:$0xff]
    %v2430 = vld [vmem:[#allocation2 + $0x38] sm:$0xff]
    %v2431 = vld [vmem:[#allocation2 + $0x40] sm:$0xff]
    %v2432 = vld [vmem:[#allocation2 + $0x48] sm:$0xff]
    %v2433 = vld [vmem:[#allocation2 + $0x50] sm:$0xff]
    %v2434 = vld [vmem:[#allocation2 + $0x58] sm:$0xff]
    %v2435 = vld [vmem:[#allocation2 + $0x60] sm:$0xff]
    %v2436 = vld [vmem:[#allocation2 + $0x68] sm:$0xff]
    %v2437 = vld [vmem:[#allocation2 + $0x70] sm:$0xff]
    %v2438 = vld [vmem:[#allocation2 + $0x78] sm:$0xff]
    %v2439 = vld [vmem:[#allocation2 + $0x80] sm:$0xff]
    %v2440 = vld [vmem:[#allocation2 + $0x88] sm:$0xff]
    %v2441 = vld [vmem:[#allocation2 + $0x90] sm:$0xff]
    %v2442 = vld [vmem:[#allocation2 + $0x98] sm:$0xff]
    %v2443 = vld [vmem:[#allocation2 + $0xa0] sm:$0xff]
    %v2444 = vld [vmem:[#allocation2 + $0xa8] sm:$0xff]
    %v2445 = vld [vmem:[#allocation2 + $0xb0] sm:$0xff]
    %v2446 = vld [vmem:[#allocation2 + $0xb8] sm:$0xff]
    %v2447 = vld [vmem:[#allocation2 + $0xc0] sm:$0xff]
    %v2448 = vld [vmem:[%s10] sm:$0x3]
    %v2450 = vlaneseq
    %v2451 = vshrl.u32 %v2450, 7
    %v2452 = vsub.s32 0, %v2451
    %v2453 = vrot.slane %v2448, %v2452
    %v2454 = vlaneseq
    %v2455 = vshrl.u32 %v2454, 7
    %v2456 = vsub.s32 1, %v2455
    %v2457 = vrot.slane %v2448, %v2456
    %v2485 = vunpack.c.l.b16 %v2423
    %v2486 = vunpack.c.h.b16 %v2423
    %v2487 = vunpack.c.l.b16 %v2424
    %v2488 = vunpack.c.h.b16 %v2424
    %v2489 = vunpack.c.l.b16 %v2425
    %v2490 = vunpack.c.h.b16 %v2425
    %v2491 = vunpack.c.l.b16 %v2426
    %v2492 = vunpack.c.h.b16 %v2426
    %v2493 = vunpack.c.l.b16 %v2427
    %v2494 = vunpack.c.h.b16 %v2427
    %v2495 = vunpack.c.l.b16 %v2428
    %v2496 = vunpack.c.h.b16 %v2428
    %v2497 = vunpack.c.l.b16 %v2429
    %v2498 = vunpack.c.h.b16 %v2429
    %v2499 = vunpack.c.l.b16 %v2430
    %v2500 = vunpack.c.h.b16 %v2430
    %v2501 = vunpack.c.l.b16 %v2431
    %v2502 = vunpack.c.h.b16 %v2431
    %v2503 = vunpack.c.l.b16 %v2432
    %v2504 = vunpack.c.h.b16 %v2432
    %v2505 = vunpack.c.l.b16 %v2433
    %v2506 = vunpack.c.h.b16 %v2433
    %v2507 = vunpack.c.l.b16 %v2434
    %v2508 = vunpack.c.h.b16 %v2434
    %v2509 = vunpack.c.l.b16 %v2435
    %v2510 = vunpack.c.h.b16 %v2435
    %v2511 = vunpack.c.l.b16 %v2436
    %v2512 = vunpack.c.h.b16 %v2436
    %v2513 = vunpack.c.l.b16 %v2437
    %v2514 = vunpack.c.h.b16 %v2437
    %v2515 = vunpack.c.l.b16 %v2438
    %v2516 = vunpack.c.h.b16 %v2438
    %v2517 = vunpack.c.l.b16 %v2439
    %v2518 = vunpack.c.h.b16 %v2439
    %v2519 = vunpack.c.l.b16 %v2440
    %v2520 = vunpack.c.h.b16 %v2440
    %v2521 = vunpack.c.l.b16 %v2441
    %v2522 = vunpack.c.h.b16 %v2441
    %v2523 = vunpack.c.l.b16 %v2442
    %v2524 = vunpack.c.h.b16 %v2442
    %v2525 = vunpack.c.l.b16 %v2443
    %v2526 = vunpack.c.h.b16 %v2443
    %v2527 = vunpack.c.l.b16 %v2444
    %v2528 = vunpack.c.h.b16 %v2444
    %v2529 = vunpack.c.l.b16 %v2445
    %v2530 = vunpack.c.h.b16 %v2445
    %v2531 = vunpack.c.l.b16 %v2446
    %v2532 = vunpack.c.h.b16 %v2446
    %v2533 = vunpack.c.l.b16 %v2447
    %v2534 = vunpack.c.h.b16 %v2447
    %v2535 = vpack.c.b16 %v2487, %v2485
    %v2536 = vpack.c.b16 %v2488, %v2486
    %v2537 = vpack.c.b16 %v2491, %v2489
    %v2538 = vpack.c.b16 %v2492, %v2490
    %v2539 = vpack.c.b16 %v2495, %v2493
    %v2540 = vpack.c.b16 %v2496, %v2494
    %v2541 = vpack.c.b16 %v2499, %v2497
    %v2542 = vpack.c.b16 %v2500, %v2498
    %v2543 = vpack.c.b16 %v2503, %v2501
    %v2544 = vpack.c.b16 %v2504, %v2502
    %v2545 = vpack.c.b16 %v2507, %v2505
    %v2546 = vpack.c.b16 %v2508, %v2506
    %v2547 = vpack.c.b16 %v2511, %v2509
    %v2548 = vpack.c.b16 %v2512, %v2510
    %v2549 = vpack.c.b16 %v2515, %v2513
    %v2550 = vpack.c.b16 %v2516, %v2514
    %v2551 = vpack.c.b16 %v2519, %v2517
    %v2552 = vpack.c.b16 %v2520, %v2518
    %v2553 = vpack.c.b16 %v2523, %v2521
    %v2554 = vpack.c.b16 %v2524, %v2522
    %v2555 = vpack.c.b16 %v2527, %v2525
    %v2556 = vpack.c.b16 %v2528, %v2526
    %v2557 = vpack.c.b16 %v2531, %v2529
    %v2558 = vpack.c.b16 %v2532, %v2530
    %v2559 = vpack.c.b16 %v2533, %v2533
    %v2560 = vpack.c.b16 %v2534, %v2534
    %v2586 = vsel %vm1312, %v2422, 0
    %v2589 = vsel %vm1316, %v2559, 0
    %v2592 = vsel %vm1316, %v2560, 0
    %2594 = vmatprep.subr.bf16.mxu0 %v2536
    %2595 = vmatpush1.bf16.msra.mxu0 %v2535
    %2596 = vmatprep.subr.bf16.mxu0 %v2538
    %2597 = vmatpush1.bf16.msra.mxu0 %v2537
    %2598 = vmatprep.subr.bf16.mxu0 %v2540
    %2599 = vmatpush1.bf16.msra.mxu0 %v2539
    %2600 = vmatprep.subr.bf16.mxu0 %v2542
    %2601 = vmatpush1.bf16.msra.mxu0 %v2541
    %2602 = vmatprep.subr.bf16.mxu0 %v2544
    %2603 = vmatpush1.bf16.msra.mxu0 %v2543
    %2604 = vmatprep.subr.bf16.mxu0 %v2546
    %2605 = vmatpush1.bf16.msra.mxu0 %v2545
    %2606 = vmatprep.subr.bf16.mxu0 %v2548
    %2607 = vmatpush1.bf16.msra.mxu0 %v2547
    %2608 = vmatprep.subr.bf16.mxu0 %v2550
    %2609 = vmatpush1.bf16.msra.mxu0 %v2549
    %2610 = vmatprep.subr.bf16.mxu0 %v2552
    %2611 = vmatpush1.bf16.msra.mxu0 %v2551
    %2612 = vmatprep.subr.bf16.mxu0 %v2554
    %2613 = vmatpush1.bf16.msra.mxu0 %v2553
    %2614 = vmatprep.subr.bf16.mxu0 %v2556
    %2615 = vmatpush1.bf16.msra.mxu0 %v2555
    %2616 = vmatprep.subr.bf16.mxu0 %v2558
    %2617 = vmatpush1.bf16.msra.mxu0 %v2557
    %2618 = vmatprep.subr.bf16.mxu0 %v2592
    %2619 = vmatpush1.bf16.msra.mxu0 %v2589
    %2620 = vmatprep.subr.bf16.mxu0 0
    %2621 = vmatpush1.bf16.msra.mxu0 0
    %2622 = vmatprep.subr.bf16.mxu0 0
    %2623 = vmatpush1.bf16.msra.mxu0 0
    %2624 = vmatprep.subr.bf16.mxu0 0
    %2625 = vmatpush1.bf16.msra.mxu0 0
    %2626 = vmatprep.mubr.bf16.mxu0 %v2586
    %2627 = vmatmul.mubr.bf16.gmra.mrb[0].mxu0 %v2421
    %v2628 = vpop.f32.mrb[0].mxu0
    %v2629 = vadd.f32 %v2453, %v2628
    %v2630 = vpop.f32.mrb[0].mxu0
    %v2631 = vadd.f32 %v2457, %v2630
    %v2632 = vpop.f32.mrb[0].mxu0
    %v2633 = vadd.f32 %v2453, %v2632
    %v2634 = vpop.f32.mrb[0].mxu0
    %v2635 = vadd.f32 %v2457, %v2634
    %2636 = vdwg.mxu0
    %v2637 = vadd.f32 %v2197, %v2629
    %v2638 = vadd.f32 %v2198, %v2631
    %v2639 = vadd.f32 %v2199, %v2633
    %v2640 = vadd.f32 %v2200, %v2635
    %v2641 = vld [vmem:[%s13] sm:$0x3]
    %v2642 = vld [vmem:[%s14] sm:$0x3]
    %v2643 = vsel %vm1312, %v2638, 0.0
    %v2644 = vadd.f32 %v2637, %v2643
    %2645 = vadd.xlane.f32.xlu0 %v2644
    %v2646 = vpop.xlane.xlu0 %2645
    %v2647 = vsel %vm1312, %v2640, 0.0
    %v2648 = vadd.f32 %v2639, %v2647
    %2649 = vadd.xlane.f32.xlu0 %v2648
    %v2650 = vpop.xlane.xlu0 %2649
    %v2651 = vmul.f32 %v2646, %v2142
    %v2652 = vmul.f32 %v2650, %v2142
    %v2653 = vsub.f32 %v2637, %v2651
    %v2654 = vsub.f32 %v2638, %v2651
    %v2655 = vsub.f32 %v2639, %v2652
    %v2656 = vsub.f32 %v2640, %v2652
    %v2657 = vmul.f32 %v2653, %v2653
    %v2658 = vmul.f32 %v2654, %v2654
    %v2659 = vmul.f32 %v2655, %v2655
    %v2660 = vmul.f32 %v2656, %v2656
    %v2661 = vsel %vm1312, %v2658, 0.0
    %v2662 = vadd.f32 %v2657, %v2661
    %2663 = vadd.xlane.f32.xlu0 %v2662
    %v2664 = vpop.xlane.xlu0 %2663
    %v2665 = vsel %vm1312, %v2660, 0.0
    %v2666 = vadd.f32 %v2659, %v2665
    %2667 = vadd.xlane.f32.xlu0 %v2666
    %v2668 = vpop.xlane.xlu0 %2667
    %v2669 = vmul.f32 %v2664, %v2142
    %v2670 = vmul.f32 %v2668, %v2142
    %v2671 = vadd.f32 %v2669, 1e-05
    %v2672 = vadd.f32 %v2670, 1e-05
    %v2673 = vrsqrt.pop %v2671
    %v2674 = vrsqrt.pop %v2672
    %v2675 = vmul.f32 %v2653, %v2673
    %v2676 = vmul.f32 %v2654, %v2673
    %v2677 = vmul.f32 %v2655, %v2674
    %v2678 = vmul.f32 %v2656, %v2674
    %v2680 = vlaneseq
    %v2681 = vshrl.u32 %v2680, 7
    %v2682 = vsub.s32 0, %v2681
    %v2683 = vrot.slane %v2641, %v2682
    %v2684 = vlaneseq
    %v2685 = vshrl.u32 %v2684, 7
    %v2686 = vsub.s32 1, %v2685
    %v2687 = vrot.slane %v2641, %v2686
    %v2690 = vmul.f32 %v2675, %v2683
    %v2691 = vmul.f32 %v2676, %v2687
    %v2692 = vmul.f32 %v2677, %v2683
    %v2693 = vmul.f32 %v2678, %v2687
    %v2695 = vlaneseq
    %v2696 = vshrl.u32 %v2695, 7
    %v2697 = vsub.s32 0, %v2696
    %v2698 = vrot.slane %v2642, %v2697
    %v2699 = vlaneseq
    %v2700 = vshrl.u32 %v2699, 7
    %v2701 = vsub.s32 1, %v2700
    %v2702 = vrot.slane %v2642, %v2701
    %v2705 = vadd.f32 %v2690, %v2698
    %v2706 = vadd.f32 %v2691, %v2702
    %v2707 = vadd.f32 %v2692, %v2698
    %v2708 = vadd.f32 %v2693, %v2702
    %v2709 = vpack.c.bf16 %v2707, %v2705
    %v2710 = vpack.c.bf16 %v2708, %v2706
    %s2711 = scalar_lea.vmem %s3, 600
    %v2712 = vld [vmem:[%s2711] sm:$0xff]
    %v2713 = vld [vmem:[%s2711 + $0x8] sm:$0xff]
    %v2714 = vld [vmem:[%s2711 + $0x10] sm:$0xff]
    %v2715 = vld [vmem:[%s2711 + $0x18] sm:$0xff]
    %v2716 = vld [vmem:[%s2711 + $0x20] sm:$0xff]
    %v2717 = vld [vmem:[%s2711 + $0x28] sm:$0xff]
    %v2718 = vld [vmem:[%s2711 + $0x30] sm:$0xff]
    %v2719 = vld [vmem:[%s2711 + $0x38] sm:$0xff]
    %v2720 = vld [vmem:[%s2711 + $0x40] sm:$0xff]
    %v2721 = vld [vmem:[%s2711 + $0x48] sm:$0xff]
    %v2722 = vld [vmem:[%s2711 + $0x50] sm:$0xff]
    %v2723 = vld [vmem:[%s2711 + $0x58] sm:$0xff]
    %v2724 = vld [vmem:[%s2711 + $0x60] sm:$0xff]
    %v2725 = vld [vmem:[%s2711 + $0x68] sm:$0xff]
    %v2726 = vld [vmem:[%s2711 + $0x70] sm:$0xff]
    %v2727 = vld [vmem:[%s2711 + $0x78] sm:$0xff]
    %v2728 = vld [vmem:[%s2711 + $0x80] sm:$0xff]
    %v2729 = vld [vmem:[%s2711 + $0x88] sm:$0xff]
    %v2730 = vld [vmem:[%s2711 + $0x90] sm:$0xff]
    %v2731 = vld [vmem:[%s2711 + $0x98] sm:$0xff]
    %v2732 = vld [vmem:[%s2711 + $0xa0] sm:$0xff]
    %v2733 = vld [vmem:[%s2711 + $0xa8] sm:$0xff]
    %v2734 = vld [vmem:[%s2711 + $0xb0] sm:$0xff]
    %v2735 = vld [vmem:[%s2711 + $0xb8] sm:$0xff]
    %v2736 = vld [vmem:[%s2711 + $0xc0] sm:$0xff]
    %v2737 = vld [vmem:[%s2711 + $0xc8] sm:$0xff]
    %v2738 = vld [vmem:[%s2711 + $0xd0] sm:$0xff]
    %v2739 = vld [vmem:[%s2711 + $0xd8] sm:$0xff]
    %v2740 = vld [vmem:[%s2711 + $0xe0] sm:$0xff]
    %v2741 = vld [vmem:[%s2711 + $0xe8] sm:$0xff]
    %v2742 = vld [vmem:[%s2711 + $0xf0] sm:$0xff]
    %v2743 = vld [vmem:[%s2711 + $0xf8] sm:$0xff]
    %v2744 = vld [vmem:[%s2711 + $0x100] sm:$0xff]
    %v2745 = vld [vmem:[%s2711 + $0x108] sm:$0xff]
    %v2746 = vld [vmem:[%s2711 + $0x110] sm:$0xff]
    %v2747 = vld [vmem:[%s2711 + $0x118] sm:$0xff]
    %v2748 = vld [vmem:[%s2711 + $0x120] sm:$0xff]
    %v2749 = vld [vmem:[%s2711 + $0x128] sm:$0xff]
    %v2750 = vld [vmem:[%s2711 + $0x130] sm:$0xff]
    %v2751 = vld [vmem:[%s2711 + $0x138] sm:$0xff]
    %v2752 = vld [vmem:[%s2711 + $0x140] sm:$0xff]
    %v2753 = vld [vmem:[%s2711 + $0x148] sm:$0xff]
    %v2754 = vld [vmem:[%s2711 + $0x150] sm:$0xff]
    %v2755 = vld [vmem:[%s2711 + $0x158] sm:$0xff]
    %v2756 = vld [vmem:[%s2711 + $0x160] sm:$0xff]
    %v2757 = vld [vmem:[%s2711 + $0x168] sm:$0xff]
    %v2758 = vld [vmem:[%s2711 + $0x170] sm:$0xff]
    %v2759 = vld [vmem:[%s2711 + $0x178] sm:$0xff]
    %v2760 = vld [vmem:[%s2711 + $0x180] sm:$0xff]
    %v2761 = vld [vmem:[%s2711 + $0x188] sm:$0xff]
    %v2762 = vld [vmem:[%s2711 + $0x190] sm:$0xff]
    %v2763 = vld [vmem:[%s2711 + $0x198] sm:$0xff]
    %v2764 = vld [vmem:[%s2711 + $0x1a0] sm:$0xff]
    %v2765 = vld [vmem:[%s2711 + $0x1a8] sm:$0xff]
    %v2766 = vld [vmem:[%s2711 + $0x1b0] sm:$0xff]
    %v2767 = vld [vmem:[%s2711 + $0x1b8] sm:$0xff]
    %v2768 = vld [vmem:[%s2711 + $0x1c0] sm:$0xff]
    %v2769 = vld [vmem:[%s2711 + $0x1c8] sm:$0xff]
    %v2770 = vld [vmem:[%s2711 + $0x1d0] sm:$0xff]
    %v2771 = vld [vmem:[%s2711 + $0x1d8] sm:$0xff]
    %v2772 = vld [vmem:[%s2711 + $0x1e0] sm:$0xff]
    %v2773 = vld [vmem:[%s2711 + $0x1e8] sm:$0xff]
    %v2774 = vld [vmem:[%s2711 + $0x1f0] sm:$0xff]
    %v2775 = vld [vmem:[%s2711 + $0x1f8] sm:$0xff]
    %v2776 = vld [vmem:[%s2711 + $0x200] sm:$0xff]
    %v2777 = vld [vmem:[%s2711 + $0x208] sm:$0xff]
    %v2778 = vld [vmem:[%s2711 + $0x210] sm:$0xff]
    %v2779 = vld [vmem:[%s2711 + $0x218] sm:$0xff]
    %v2780 = vld [vmem:[%s2711 + $0x220] sm:$0xff]
    %v2781 = vld [vmem:[%s2711 + $0x228] sm:$0xff]
    %v2782 = vld [vmem:[%s2711 + $0x230] sm:$0xff]
    %v2783 = vld [vmem:[%s2711 + $0x238] sm:$0xff]
    %v2784 = vld [vmem:[%s2711 + $0x240] sm:$0xff]
    %v2785 = vld [vmem:[%s2711 + $0x248] sm:$0xff]
    %v2786 = vld [vmem:[%s2711 + $0x250] sm:$0xff]
    %s2787 = scalar_lea.vmem %s4, 6
    %v2788 = vld [vmem:[%s2787] sm:$0x3f]
    %v2790 = vlaneseq
    %v2791 = vshrl.u32 %v2790, 7
    %v2792 = vsub.s32 0, %v2791
    %v2793 = vrot.slane %v2788, %v2792
    %v2794 = vlaneseq
    %v2795 = vshrl.u32 %v2794, 7
    %v2796 = vsub.s32 1, %v2795
    %v2797 = vrot.slane %v2788, %v2796
    %v2798 = vlaneseq
    %v2799 = vshrl.u32 %v2798, 7
    %v2800 = vsub.s32 2, %v2799
    %v2801 = vrot.slane %v2788, %v2800
    %v2802 = vlaneseq
    %v2803 = vshrl.u32 %v2802, 7
    %v2804 = vsub.s32 3, %v2803
    %v2805 = vrot.slane %v2788, %v2804
    %v2806 = vlaneseq
    %v2807 = vshrl.u32 %v2806, 7
    %v2808 = vsub.s32 4, %v2807
    %v2809 = vrot.slane %v2788, %v2808
    %v2810 = vlaneseq
    %v2811 = vshrl.u32 %v2810, 7
    %v2812 = vsub.s32 5, %v2811
    %v2813 = vrot.slane %v2788, %v2812
    %v2895 = vunpack.c.l.b16 %v2712
    %v2896 = vunpack.c.h.b16 %v2712
    %v2897 = vunpack.c.l.b16 %v2713
    %v2898 = vunpack.c.h.b16 %v2713
    %v2899 = vunpack.c.l.b16 %v2714
    %v2900 = vunpack.c.h.b16 %v2714
    %v2901 = vunpack.c.l.b16 %v2715
    %v2902 = vunpack.c.h.b16 %v2715
    %v2903 = vunpack.c.l.b16 %v2716
    %v2904 = vunpack.c.h.b16 %v2716
    %v2905 = vunpack.c.l.b16 %v2717
    %v2906 = vunpack.c.h.b16 %v2717
    %v2907 = vunpack.c.l.b16 %v2718
    %v2908 = vunpack.c.h.b16 %v2718
    %v2909 = vunpack.c.l.b16 %v2719
    %v2910 = vunpack.c.h.b16 %v2719
    %v2911 = vunpack.c.l.b16 %v2720
    %v2912 = vunpack.c.h.b16 %v2720
    %v2913 = vunpack.c.l.b16 %v2721
    %v2914 = vunpack.c.h.b16 %v2721
    %v2915 = vunpack.c.l.b16 %v2722
    %v2916 = vunpack.c.h.b16 %v2722
    %v2917 = vunpack.c.l.b16 %v2723
    %v2918 = vunpack.c.h.b16 %v2723
    %v2919 = vunpack.c.l.b16 %v2724
    %v2920 = vunpack.c.h.b16 %v2724
    %v2921 = vunpack.c.l.b16 %v2725
    %v2922 = vunpack.c.h.b16 %v2725
    %v2923 = vunpack.c.l.b16 %v2726
    %v2924 = vunpack.c.h.b16 %v2726
    %v2925 = vunpack.c.l.b16 %v2727
    %v2926 = vunpack.c.h.b16 %v2727
    %v2927 = vunpack.c.l.b16 %v2728
    %v2928 = vunpack.c.h.b16 %v2728
    %v2929 = vunpack.c.l.b16 %v2729
    %v2930 = vunpack.c.h.b16 %v2729
    %v2931 = vunpack.c.l.b16 %v2730
    %v2932 = vunpack.c.h.b16 %v2730
    %v2933 = vunpack.c.l.b16 %v2731
    %v2934 = vunpack.c.h.b16 %v2731
    %v2935 = vunpack.c.l.b16 %v2732
    %v2936 = vunpack.c.h.b16 %v2732
    %v2937 = vunpack.c.l.b16 %v2733
    %v2938 = vunpack.c.h.b16 %v2733
    %v2939 = vunpack.c.l.b16 %v2734
    %v2940 = vunpack.c.h.b16 %v2734
    %v2941 = vunpack.c.l.b16 %v2735
    %v2942 = vunpack.c.h.b16 %v2735
    %v2943 = vunpack.c.l.b16 %v2736
    %v2944 = vunpack.c.h.b16 %v2736
    %v2945 = vunpack.c.l.b16 %v2737
    %v2946 = vunpack.c.h.b16 %v2737
    %v2947 = vunpack.c.l.b16 %v2738
    %v2948 = vunpack.c.h.b16 %v2738
    %v2949 = vunpack.c.l.b16 %v2739
    %v2950 = vunpack.c.h.b16 %v2739
    %v2951 = vunpack.c.l.b16 %v2740
    %v2952 = vunpack.c.h.b16 %v2740
    %v2953 = vunpack.c.l.b16 %v2741
    %v2954 = vunpack.c.h.b16 %v2741
    %v2955 = vunpack.c.l.b16 %v2742
    %v2956 = vunpack.c.h.b16 %v2742
    %v2957 = vunpack.c.l.b16 %v2743
    %v2958 = vunpack.c.h.b16 %v2743
    %v2959 = vunpack.c.l.b16 %v2744
    %v2960 = vunpack.c.h.b16 %v2744
    %v2961 = vunpack.c.l.b16 %v2745
    %v2962 = vunpack.c.h.b16 %v2745
    %v2963 = vunpack.c.l.b16 %v2746
    %v2964 = vunpack.c.h.b16 %v2746
    %v2965 = vunpack.c.l.b16 %v2747
    %v2966 = vunpack.c.h.b16 %v2747
    %v2967 = vunpack.c.l.b16 %v2748
    %v2968 = vunpack.c.h.b16 %v2748
    %v2969 = vunpack.c.l.b16 %v2749
    %v2970 = vunpack.c.h.b16 %v2749
    %v2971 = vunpack.c.l.b16 %v2750
    %v2972 = vunpack.c.h.b16 %v2750
    %v2973 = vunpack.c.l.b16 %v2751
    %v2974 = vunpack.c.h.b16 %v2751
    %v2975 = vunpack.c.l.b16 %v2752
    %v2976 = vunpack.c.h.b16 %v2752
    %v2977 = vunpack.c.l.b16 %v2753
    %v2978 = vunpack.c.h.b16 %v2753
    %v2979 = vunpack.c.l.b16 %v2754
    %v2980 = vunpack.c.h.b16 %v2754
    %v2981 = vunpack.c.l.b16 %v2755
    %v2982 = vunpack.c.h.b16 %v2755
    %v2983 = vunpack.c.l.b16 %v2756
    %v2984 = vunpack.c.h.b16 %v2756
    %v2985 = vunpack.c.l.b16 %v2757
    %v2986 = vunpack.c.h.b16 %v2757
    %v2987 = vunpack.c.l.b16 %v2758
    %v2988 = vunpack.c.h.b16 %v2758
    %v2989 = vunpack.c.l.b16 %v2759
    %v2990 = vunpack.c.h.b16 %v2759
    %v2991 = vunpack.c.l.b16 %v2760
    %v2992 = vunpack.c.h.b16 %v2760
    %v2993 = vunpack.c.l.b16 %v2761
    %v2994 = vunpack.c.h.b16 %v2761
    %v2995 = vunpack.c.l.b16 %v2762
    %v2996 = vunpack.c.h.b16 %v2762
    %v2997 = vunpack.c.l.b16 %v2763
    %v2998 = vunpack.c.h.b16 %v2763
    %v2999 = vunpack.c.l.b16 %v2764
    %v3000 = vunpack.c.h.b16 %v2764
    %v3001 = vunpack.c.l.b16 %v2765
    %v3002 = vunpack.c.h.b16 %v2765
    %v3003 = vunpack.c.l.b16 %v2766
    %v3004 = vunpack.c.h.b16 %v2766
    %v3005 = vunpack.c.l.b16 %v2767
    %v3006 = vunpack.c.h.b16 %v2767
    %v3007 = vunpack.c.l.b16 %v2768
    %v3008 = vunpack.c.h.b16 %v2768
    %v3009 = vunpack.c.l.b16 %v2769
    %v3010 = vunpack.c.h.b16 %v2769
    %v3011 = vunpack.c.l.b16 %v2770
    %v3012 = vunpack.c.h.b16 %v2770
    %v3013 = vunpack.c.l.b16 %v2771
    %v3014 = vunpack.c.h.b16 %v2771
    %v3015 = vunpack.c.l.b16 %v2772
    %v3016 = vunpack.c.h.b16 %v2772
    %v3017 = vunpack.c.l.b16 %v2773
    %v3018 = vunpack.c.h.b16 %v2773
    %v3019 = vunpack.c.l.b16 %v2774
    %v3020 = vunpack.c.h.b16 %v2774
    %v3021 = vunpack.c.l.b16 %v2775
    %v3022 = vunpack.c.h.b16 %v2775
    %v3023 = vunpack.c.l.b16 %v2776
    %v3024 = vunpack.c.h.b16 %v2776
    %v3025 = vunpack.c.l.b16 %v2777
    %v3026 = vunpack.c.h.b16 %v2777
    %v3027 = vunpack.c.l.b16 %v2778
    %v3028 = vunpack.c.h.b16 %v2778
    %v3029 = vunpack.c.l.b16 %v2779
    %v3030 = vunpack.c.h.b16 %v2779
    %v3031 = vunpack.c.l.b16 %v2780
    %v3032 = vunpack.c.h.b16 %v2780
    %v3033 = vunpack.c.l.b16 %v2781
    %v3034 = vunpack.c.h.b16 %v2781
    %v3035 = vunpack.c.l.b16 %v2782
    %v3036 = vunpack.c.h.b16 %v2782
    %v3037 = vunpack.c.l.b16 %v2783
    %v3038 = vunpack.c.h.b16 %v2783
    %v3039 = vunpack.c.l.b16 %v2784
    %v3040 = vunpack.c.h.b16 %v2784
    %v3041 = vunpack.c.l.b16 %v2785
    %v3042 = vunpack.c.h.b16 %v2785
    %v3043 = vunpack.c.l.b16 %v2786
    %v3044 = vunpack.c.h.b16 %v2786
    %v3045 = vpack.c.b16 %v2901, %v2895
    %v3046 = vpack.c.b16 %v2902, %v2896
    %v3047 = vpack.c.b16 %v2903, %v2897
    %v3048 = vpack.c.b16 %v2904, %v2898
    %v3049 = vpack.c.b16 %v2905, %v2899
    %v3050 = vpack.c.b16 %v2906, %v2900
    %v3051 = vpack.c.b16 %v2913, %v2907
    %v3052 = vpack.c.b16 %v2914, %v2908
    %v3053 = vpack.c.b16 %v2915, %v2909
    %v3054 = vpack.c.b16 %v2916, %v2910
    %v3055 = vpack.c.b16 %v2917, %v2911
    %v3056 = vpack.c.b16 %v2918, %v2912
    %v3057 = vpack.c.b16 %v2925, %v2919
    %v3058 = vpack.c.b16 %v2926, %v2920
    %v3059 = vpack.c.b16 %v2927, %v2921
    %v3060 = vpack.c.b16 %v2928, %v2922
    %v3061 = vpack.c.b16 %v2929, %v2923
    %v3062 = vpack.c.b16 %v2930, %v2924
    %v3063 = vpack.c.b16 %v2937, %v2931
    %v3064 = vpack.c.b16 %v2938, %v2932
    %v3065 = vpack.c.b16 %v2939, %v2933
    %v3066 = vpack.c.b16 %v2940, %v2934
    %v3067 = vpack.c.b16 %v2941, %v2935
    %v3068 = vpack.c.b16 %v2942, %v2936
    %v3069 = vpack.c.b16 %v2949, %v2943
    %v3070 = vpack.c.b16 %v2950, %v2944
    %v3071 = vpack.c.b16 %v2951, %v2945
    %v3072 = vpack.c.b16 %v2952, %v2946
    %v3073 = vpack.c.b16 %v2953, %v2947
    %v3074 = vpack.c.b16 %v2954, %v2948
    %v3075 = vpack.c.b16 %v2961, %v2955
    %v3076 = vpack.c.b16 %v2962, %v2956
    %v3077 = vpack.c.b16 %v2963, %v2957
    %v3078 = vpack.c.b16 %v2964, %v2958
    %v3079 = vpack.c.b16 %v2965, %v2959
    %v3080 = vpack.c.b16 %v2966, %v2960
    %v3081 = vpack.c.b16 %v2973, %v2967
    %v3082 = vpack.c.b16 %v2974, %v2968
    %v3083 = vpack.c.b16 %v2975, %v2969
    %v3084 = vpack.c.b16 %v2976, %v2970
    %v3085 = vpack.c.b16 %v2977, %v2971
    %v3086 = vpack.c.b16 %v2978, %v2972
    %v3087 = vpack.c.b16 %v2985, %v2979
    %v3088 = vpack.c.b16 %v2986, %v2980
    %v3089 = vpack.c.b16 %v2987, %v2981
    %v3090 = vpack.c.b16 %v2988, %v2982
    %v3091 = vpack.c.b16 %v2989, %v2983
    %v3092 = vpack.c.b16 %v2990, %v2984
    %v3093 = vpack.c.b16 %v2997, %v2991
    %v3094 = vpack.c.b16 %v2998, %v2992
    %v3095 = vpack.c.b16 %v2999, %v2993
    %v3096 = vpack.c.b16 %v3000, %v2994
    %v3097 = vpack.c.b16 %v3001, %v2995
    %v3098 = vpack.c.b16 %v3002, %v2996
    %v3099 = vpack.c.b16 %v3009, %v3003
    %v3100 = vpack.c.b16 %v3010, %v3004
    %v3101 = vpack.c.b16 %v3011, %v3005
    %v3102 = vpack.c.b16 %v3012, %v3006
    %v3103 = vpack.c.b16 %v3013, %v3007
    %v3104 = vpack.c.b16 %v3014, %v3008
    %v3105 = vpack.c.b16 %v3021, %v3015
    %v3106 = vpack.c.b16 %v3022, %v3016
    %v3107 = vpack.c.b16 %v3023, %v3017
    %v3108 = vpack.c.b16 %v3024, %v3018
    %v3109 = vpack.c.b16 %v3025, %v3019
    %v3110 = vpack.c.b16 %v3026, %v3020
    %v3111 = vpack.c.b16 %v3033, %v3027
    %v3112 = vpack.c.b16 %v3034, %v3028
    %v3113 = vpack.c.b16 %v3035, %v3029
    %v3114 = vpack.c.b16 %v3036, %v3030
    %v3115 = vpack.c.b16 %v3037, %v3031
    %v3116 = vpack.c.b16 %v3038, %v3032
    %v3117 = vpack.c.b16 %v3039, %v3039
    %v3118 = vpack.c.b16 %v3040, %v3040
    %v3119 = vpack.c.b16 %v3041, %v3041
    %v3120 = vpack.c.b16 %v3042, %v3042
    %v3121 = vpack.c.b16 %v3043, %v3043
    %v3122 = vpack.c.b16 %v3044, %v3044
    %v3196 = vsel %vm1312, %v2710, 0
    %v3199 = vsel %vm1316, %v3117, 0
    %v3202 = vsel %vm1316, %v3118, 0
    %v3205 = vsel %vm1316, %v3119, 0
    %v3208 = vsel %vm1316, %v3120, 0
    %v3211 = vsel %vm1316, %v3121, 0
    %v3214 = vsel %vm1316, %v3122, 0
    %3216 = vmatprep.subr.bf16.mxu0 %v3046
    %3217 = vmatpush1.bf16.msra.mxu0 %v3045
    %3218 = vmatprep.subr.bf16.mxu0 %v3052
    %3219 = vmatpush1.bf16.msra.mxu0 %v3051
    %3220 = vmatprep.subr.bf16.mxu0 %v3058
    %3221 = vmatpush1.bf16.msra.mxu0 %v3057
    %3222 = vmatprep.subr.bf16.mxu0 %v3064
    %3223 = vmatpush1.bf16.msra.mxu0 %v3063
    %3224 = vmatprep.subr.bf16.mxu0 %v3070
    %3225 = vmatpush1.bf16.msra.mxu0 %v3069
    %3226 = vmatprep.subr.bf16.mxu0 %v3076
    %3227 = vmatpush1.bf16.msra.mxu0 %v3075
    %3228 = vmatprep.subr.bf16.mxu0 %v3082
    %3229 = vmatpush1.bf16.msra.mxu0 %v3081
    %3230 = vmatprep.subr.bf16.mxu0 %v3088
    %3231 = vmatpush1.bf16.msra.mxu0 %v3087
    %3232 = vmatprep.subr.bf16.mxu0 %v3094
    %3233 = vmatpush1.bf16.msra.mxu0 %v3093
    %3234 = vmatprep.subr.bf16.mxu0 %v3100
    %3235 = vmatpush1.bf16.msra.mxu0 %v3099
    %3236 = vmatprep.subr.bf16.mxu0 %v3106
    %3237 = vmatpush1.bf16.msra.mxu0 %v3105
    %3238 = vmatprep.subr.bf16.mxu0 %v3112
    %3239 = vmatpush1.bf16.msra.mxu0 %v3111
    %3240 = vmatprep.subr.bf16.mxu0 %v3202
    %3241 = vmatpush1.bf16.msra.mxu0 %v3199
    %3242 = vmatprep.subr.bf16.mxu0 0
    %3243 = vmatpush1.bf16.msra.mxu0 0
    %3244 = vmatprep.subr.bf16.mxu0 0
    %3245 = vmatpush1.bf16.msra.mxu0 0
    %3246 = vmatprep.subr.bf16.mxu0 0
    %3247 = vmatpush1.bf16.msra.mxu0 0
    %3248 = vmatprep.mubr.bf16.mxu0 %v3196
    %3249 = vmatmul.mubr.bf16.gmra.mrb[0].mxu0 %v2709
    %v3250 = vpop.f32.mrb[0].mxu0
    %v3251 = vadd.f32 %v2793, %v3250
    %v3252 = vpop.f32.mrb[0].mxu0
    %v3253 = vadd.f32 %v2797, %v3252
    %v3254 = vpop.f32.mrb[0].mxu0
    %v3255 = vadd.f32 %v2793, %v3254
    %v3256 = vpop.f32.mrb[0].mxu0
    %v3257 = vadd.f32 %v2797, %v3256
    %3258 = vdwg.mxu0
    %3259 = vmatprep.subr.bf16.mxu0 %v3048
    %3260 = vmatpush1.bf16.msra.mxu0 %v3047
    %3261 = vmatprep.subr.bf16.mxu0 %v3054
    %3262 = vmatpush1.bf16.msra.mxu0 %v3053
    %3263 = vmatprep.subr.bf16.mxu0 %v3060
    %3264 = vmatpush1.bf16.msra.mxu0 %v3059
    %3265 = vmatprep.subr.bf16.mxu0 %v3066
    %3266 = vmatpush1.bf16.msra.mxu0 %v3065
    %3267 = vmatprep.subr.bf16.mxu0 %v3072
    %3268 = vmatpush1.bf16.msra.mxu0 %v3071
    %3269 = vmatprep.subr.bf16.mxu0 %v3078
    %3270 = vmatpush1.bf16.msra.mxu0 %v3077
    %3271 = vmatprep.subr.bf16.mxu0 %v3084
    %3272 = vmatpush1.bf16.msra.mxu0 %v3083
    %3273 = vmatprep.subr.bf16.mxu0 %v3090
    %3274 = vmatpush1.bf16.msra.mxu0 %v3089
    %3275 = vmatprep.subr.bf16.mxu0 %v3096
    %3276 = vmatpush1.bf16.msra.mxu0 %v3095
    %3277 = vmatprep.subr.bf16.mxu0 %v3102
    %3278 = vmatpush1.bf16.msra.mxu0 %v3101
    %3279 = vmatprep.subr.bf16.mxu0 %v3108
    %3280 = vmatpush1.bf16.msra.mxu0 %v3107
    %3281 = vmatprep.subr.bf16.mxu0 %v3114
    %3282 = vmatpush1.bf16.msra.mxu0 %v3113
    %3283 = vmatprep.subr.bf16.mxu0 %v3208
    %3284 = vmatpush1.bf16.msra.mxu0 %v3205
    %3285 = vmatprep.subr.bf16.mxu0 0
    %3286 = vmatpush1.bf16.msra.mxu0 0
    %3287 = vmatprep.subr.bf16.mxu0 0
    %3288 = vmatpush1.bf16.msra.mxu0 0
    %3289 = vmatprep.subr.bf16.mxu0 0
    %3290 = vmatpush1.bf16.msra.mxu0 0
    %3291 = vmatprep.mubr.bf16.mxu0 %v3196
    %3292 = vmatmul.mubr.bf16.gmra.mrb[0].mxu0 %v2709
    %v3293 = vpop.f32.mrb[0].mxu0
    %v3294 = vadd.f32 %v2801, %v3293
    %v3295 = vpop.f32.mrb[0].mxu0
    %v3296 = vadd.f32 %v2805, %v3295
    %v3297 = vpop.f32.mrb[0].mxu0
    %v3298 = vadd.f32 %v2801, %v3297
    %v3299 = vpop.f32.mrb[0].mxu0
    %v3300 = vadd.f32 %v2805, %v3299
    %3301 = vdwg.mxu0
    %3302 = vmatprep.subr.bf16.mxu0 %v3050
    %3303 = vmatpush1.bf16.msra.mxu0 %v3049
    %3304 = vmatprep.subr.bf16.mxu0 %v3056
    %3305 = vmatpush1.bf16.msra.mxu0 %v3055
    %3306 = vmatprep.subr.bf16.mxu0 %v3062
    %3307 = vmatpush1.bf16.msra.mxu0 %v3061
    %3308 = vmatprep.subr.bf16.mxu0 %v3068
    %3309 = vmatpush1.bf16.msra.mxu0 %v3067
    %3310 = vmatprep.subr.bf16.mxu0 %v3074
    %3311 = vmatpush1.bf16.msra.mxu0 %v3073
    %3312 = vmatprep.subr.bf16.mxu0 %v3080
    %3313 = vmatpush1.bf16.msra.mxu0 %v3079
    %3314 = vmatprep.subr.bf16.mxu0 %v3086
    %3315 = vmatpush1.bf16.msra.mxu0 %v3085
    %3316 = vmatprep.subr.bf16.mxu0 %v3092
    %3317 = vmatpush1.bf16.msra.mxu0 %v3091
    %3318 = vmatprep.subr.bf16.mxu0 %v3098
    %3319 = vmatpush1.bf16.msra.mxu0 %v3097
    %3320 = vmatprep.subr.bf16.mxu0 %v3104
    %3321 = vmatpush1.bf16.msra.mxu0 %v3103
    %3322 = vmatprep.subr.bf16.mxu0 %v3110
    %3323 = vmatpush1.bf16.msra.mxu0 %v3109
    %3324 = vmatprep.subr.bf16.mxu0 %v3116
    %3325 = vmatpush1.bf16.msra.mxu0 %v3115
    %3326 = vmatprep.subr.bf16.mxu0 %v3214
    %3327 = vmatpush1.bf16.msra.mxu0 %v3211
    %3328 = vmatprep.subr.bf16.mxu0 0
    %3329 = vmatpush1.bf16.msra.mxu0 0
    %3330 = vmatprep.subr.bf16.mxu0 0
    %3331 = vmatpush1.bf16.msra.mxu0 0
    %3332 = vmatprep.subr.bf16.mxu0 0
    %3333 = vmatpush1.bf16.msra.mxu0 0
    %3334 = vmatprep.mubr.bf16.mxu0 %v3196
    %3335 = vmatmul.mubr.bf16.gmra.mrb[0].mxu0 %v2709
    %v3336 = vpop.f32.mrb[0].mxu0
    %v3337 = vadd.f32 %v2809, %v3336
    %v3338 = vpop.f32.mrb[0].mxu0
    %v3339 = vadd.f32 %v2813, %v3338
    %v3340 = vpop.f32.mrb[0].mxu0
    %v3341 = vadd.f32 %v2809, %v3340
    %v3342 = vpop.f32.mrb[0].mxu0
    %v3343 = vadd.f32 %v2813, %v3342
    %3344 = vdwg.mxu0
    %v3345 = vpack.c.bf16 %v3255, %v3251
    %v3346 = vpack.c.bf16 %v3257, %v3253
    %v3347 = vpack.c.bf16 %v3298, %v3294
    %v3348 = vpack.c.bf16 %v3300, %v3296
    %v3349 = vpack.c.bf16 %v3341, %v3337
    %v3350 = vpack.c.bf16 %v3343, %v3339
    %3351 = vmatprep.subr.bf16.mxu0 0
    %3352 = vmatpush1.bf16.xpose.msra.mxu0 %v3347
    %3353 = vmatprep.subr.bf16.mxu0 0
    %3354 = vmatpush1.bf16.xpose.msra.mxu0 0
    %3355 = vmatprep.subr.bf16.mxu0 0
    %3356 = vmatpush1.bf16.xpose.msra.mxu0 0
    %3357 = vmatprep.subr.bf16.mxu0 0
    %3358 = vmatpush1.bf16.xpose.msra.mxu0 0
    %3359 = vmatprep.subr.bf16.mxu0 0
    %3360 = vmatpush1.bf16.xpose.msra.mxu0 0
    %3361 = vmatprep.subr.bf16.mxu0 0
    %3362 = vmatpush1.bf16.xpose.msra.mxu0 0
    %3363 = vmatprep.subr.bf16.mxu0 0
    %3364 = vmatpush1.bf16.xpose.msra.mxu0 0
    %3365 = vmatprep.subr.bf16.mxu0 0
    %3366 = vmatpush1.bf16.xpose.msra.mxu0 0
    %3367 = vmatprep.subr.bf16.mxu0 0
    %3368 = vmatpush1.bf16.xpose.msra.mxu0 0
    %3369 = vmatprep.subr.bf16.mxu0 0
    %3370 = vmatpush1.bf16.xpose.msra.mxu0 0
    %3371 = vmatprep.subr.bf16.mxu0 0
    %3372 = vmatpush1.bf16.xpose.msra.mxu0 0
    %3373 = vmatprep.subr.bf16.mxu0 0
    %3374 = vmatpush1.bf16.xpose.msra.mxu0 0
    %3375 = vmatprep.subr.bf16.mxu0 0
    %3376 = vmatpush1.bf16.xpose.msra.mxu0 0
    %3377 = vmatprep.subr.bf16.mxu0 0
    %3378 = vmatpush1.bf16.xpose.msra.mxu0 0
    %3379 = vmatprep.subr.bf16.mxu0 0
    %3380 = vmatpush1.bf16.xpose.msra.mxu0 0
    %3381 = vmatprep.subr.bf16.mxu0 0
    %3382 = vmatpush1.bf16.xpose.msra.mxu0 0
    %3383 = vmatprep.mubr.bf16.mxu0 0
    %3384 = vmatmul.mubr.bf16.gmra.mrb[0].mxu0 %v3345
    %v3385 = vpop.f32.mrb[0].mxu0
    %v3386 = vadd.f32 0.0, %v3385
    %v3387 = vpop.f32.mrb[0].mxu0
    %v3388 = vpop.f32.mrb[0].mxu0
    %v3389 = vpop.f32.mrb[0].mxu0
    %3390 = vdwg.mxu0
    %v3391 = vsel %vm1510, %v3386, -inf
    %3392 = vmax.xlane.f32.xlu0 %v3391
    %v3393 = vpop.xlane.xlu0 %3392
    %v3394 = vsub.f32 %v3386, %v3393
    %v3395 = vmul.f32 %v3394, 1.442695
    %v3396 = vpow.pop %v3395
    %v3397 = vsel %vm1510, %v3396, 0.0
    %3398 = vadd.xlane.f32.xlu0 %v3397
    %v3399 = vpop.xlane.xlu0 %3398
    %v3400 = vrcp.pop %v3399
    %v3401 = vmul.f32 %v3396, %v3400
    %v3402 = vpack.c.bf16 %v3401, %v3401
    %v3404 = vsel %vm1510, %v3402, 0
    %v3407 = vsel %vm1316, %v3349, 0
    %3409 = vmatprep.subr.bf16.mxu0 0
    %3410 = vmatpush1.bf16.msra.mxu0 %v3407
    %3411 = vmatprep.subr.bf16.mxu0 0
    %3412 = vmatpush1.bf16.msra.mxu0 0
    %3413 = vmatprep.subr.bf16.mxu0 0
    %3414 = vmatpush1.bf16.msra.mxu0 0
    %3415 = vmatprep.subr.bf16.mxu0 0
    %3416 = vmatpush1.bf16.msra.mxu0 0
    %3417 = vmatprep.subr.bf16.mxu0 0
    %3418 = vmatpush1.bf16.msra.mxu0 0
    %3419 = vmatprep.subr.bf16.mxu0 0
    %3420 = vmatpush1.bf16.msra.mxu0 0
    %3421 = vmatprep.subr.bf16.mxu0 0
    %3422 = vmatpush1.bf16.msra.mxu0 0
    %3423 = vmatprep.subr.bf16.mxu0 0
    %3424 = vmatpush1.bf16.msra.mxu0 0
    %3425 = vmatprep.subr.bf16.mxu0 0
    %3426 = vmatpush1.bf16.msra.mxu0 0
    %3427 = vmatprep.subr.bf16.mxu0 0
    %3428 = vmatpush1.bf16.msra.mxu0 0
    %3429 = vmatprep.subr.bf16.mxu0 0
    %3430 = vmatpush1.bf16.msra.mxu0 0
    %3431 = vmatprep.subr.bf16.mxu0 0
    %3432 = vmatpush1.bf16.msra.mxu0 0
    %3433 = vmatprep.subr.bf16.mxu0 0
    %3434 = vmatpush1.bf16.msra.mxu0 0
    %3435 = vmatprep.subr.bf16.mxu0 0
    %3436 = vmatpush1.bf16.msra.mxu0 0
    %3437 = vmatprep.subr.bf16.mxu0 0
    %3438 = vmatpush1.bf16.msra.mxu0 0
    %3439 = vmatprep.subr.bf16.mxu0 0
    %3440 = vmatpush1.bf16.msra.mxu0 0
    %3441 = vmatprep.mubr.bf16.mxu0 0
    %3442 = vmatmul.mubr.bf16.gmra.mrb[0].mxu0 %v3404
    %v3443 = vpop.f32.mrb[0].mxu0
    %v3444 = vadd.f32 0.0, %v3443
    %v3445 = vpop.f32.mrb[0].mxu0
    %v3446 = vpop.f32.mrb[0].mxu0
    %v3447 = vpop.f32.mrb[0].mxu0
    %3448 = vdwg.mxu0
    %3449 = vmatprep.subr.bf16.mxu0 0
    %3450 = vmatpush1.bf16.xpose.msra.mxu0 %v3348
    %3451 = vmatprep.subr.bf16.mxu0 0
    %3452 = vmatpush1.bf16.xpose.msra.mxu0 0
    %3453 = vmatprep.subr.bf16.mxu0 0
    %3454 = vmatpush1.bf16.xpose.msra.mxu0 0
    %3455 = vmatprep.subr.bf16.mxu0 0
    %3456 = vmatpush1.bf16.xpose.msra.mxu0 0
    %3457 = vmatprep.subr.bf16.mxu0 0
    %3458 = vmatpush1.bf16.xpose.msra.mxu0 0
    %3459 = vmatprep.subr.bf16.mxu0 0
    %3460 = vmatpush1.bf16.xpose.msra.mxu0 0
    %3461 = vmatprep.subr.bf16.mxu0 0
    %3462 = vmatpush1.bf16.xpose.msra.mxu0 0
    %3463 = vmatprep.subr.bf16.mxu0 0
    %3464 = vmatpush1.bf16.xpose.msra.mxu0 0
    %3465 = vmatprep.subr.bf16.mxu0 0
    %3466 = vmatpush1.bf16.xpose.msra.mxu0 0
    %3467 = vmatprep.subr.bf16.mxu0 0
    %3468 = vmatpush1.bf16.xpose.msra.mxu0 0
    %3469 = vmatprep.subr.bf16.mxu0 0
    %3470 = vmatpush1.bf16.xpose.msra.mxu0 0
    %3471 = vmatprep.subr.bf16.mxu0 0
    %3472 = vmatpush1.bf16.xpose.msra.mxu0 0
    %3473 = vmatprep.subr.bf16.mxu0 0
    %3474 = vmatpush1.bf16.xpose.msra.mxu0 0
    %3475 = vmatprep.subr.bf16.mxu0 0
    %3476 = vmatpush1.bf16.xpose.msra.mxu0 0
    %3477 = vmatprep.subr.bf16.mxu0 0
    %3478 = vmatpush1.bf16.xpose.msra.mxu0 0
    %3479 = vmatprep.subr.bf16.mxu0 0
    %3480 = vmatpush1.bf16.xpose.msra.mxu0 0
    %3481 = vmatprep.mubr.bf16.mxu0 0
    %3482 = vmatmul.mubr.bf16.gmra.mrb[0].mxu0 %v3346
    %v3483 = vpop.f32.mrb[0].mxu0
    %v3484 = vadd.f32 0.0, %v3483
    %v3485 = vpop.f32.mrb[0].mxu0
    %v3486 = vpop.f32.mrb[0].mxu0
    %v3487 = vpop.f32.mrb[0].mxu0
    %3488 = vdwg.mxu0
    %v3489 = vsel %vm1510, %v3484, -inf
    %3490 = vmax.xlane.f32.xlu0 %v3489
    %v3491 = vpop.xlane.xlu0 %3490
    %v3492 = vsub.f32 %v3484, %v3491
    %v3493 = vmul.f32 %v3492, 1.442695
    %v3494 = vpow.pop %v3493
    %v3495 = vsel %vm1510, %v3494, 0.0
    %3496 = vadd.xlane.f32.xlu0 %v3495
    %v3497 = vpop.xlane.xlu0 %3496
    %v3498 = vrcp.pop %v3497
    %v3499 = vmul.f32 %v3494, %v3498
    %v3500 = vpack.c.bf16 %v3499, %v3499
    %v3502 = vsel %vm1510, %v3500, 0
    %v3505 = vsel %vm1316, %v3350, 0
    %3507 = vmatprep.subr.bf16.mxu0 0
    %3508 = vmatpush1.bf16.msra.mxu0 %v3505
    %3509 = vmatprep.subr.bf16.mxu0 0
    %3510 = vmatpush1.bf16.msra.mxu0 0
    %3511 = vmatprep.subr.bf16.mxu0 0
    %3512 = vmatpush1.bf16.msra.mxu0 0
    %3513 = vmatprep.subr.bf16.mxu0 0
    %3514 = vmatpush1.bf16.msra.mxu0 0
    %3515 = vmatprep.subr.bf16.mxu0 0
    %3516 = vmatpush1.bf16.msra.mxu0 0
    %3517 = vmatprep.subr.bf16.mxu0 0
    %3518 = vmatpush1.bf16.msra.mxu0 0
    %3519 = vmatprep.subr.bf16.mxu0 0
    %3520 = vmatpush1.bf16.msra.mxu0 0
    %3521 = vmatprep.subr.bf16.mxu0 0
    %3522 = vmatpush1.bf16.msra.mxu0 0
    %3523 = vmatprep.subr.bf16.mxu0 0
    %3524 = vmatpush1.bf16.msra.mxu0 0
    %3525 = vmatprep.subr.bf16.mxu0 0
    %3526 = vmatpush1.bf16.msra.mxu0 0
    %3527 = vmatprep.subr.bf16.mxu0 0
    %3528 = vmatpush1.bf16.msra.mxu0 0
    %3529 = vmatprep.subr.bf16.mxu0 0
    %3530 = vmatpush1.bf16.msra.mxu0 0
    %3531 = vmatprep.subr.bf16.mxu0 0
    %3532 = vmatpush1.bf16.msra.mxu0 0
    %3533 = vmatprep.subr.bf16.mxu0 0
    %3534 = vmatpush1.bf16.msra.mxu0 0
    %3535 = vmatprep.subr.bf16.mxu0 0
    %3536 = vmatpush1.bf16.msra.mxu0 0
    %3537 = vmatprep.subr.bf16.mxu0 0
    %3538 = vmatpush1.bf16.msra.mxu0 0
    %3539 = vmatprep.mubr.bf16.mxu0 0
    %3540 = vmatmul.mubr.bf16.gmra.mrb[0].mxu0 %v3502
    %v3541 = vpop.f32.mrb[0].mxu0
    %v3542 = vadd.f32 0.0, %v3541
    %v3543 = vpop.f32.mrb[0].mxu0
    %v3544 = vpop.f32.mrb[0].mxu0
    %v3545 = vpop.f32.mrb[0].mxu0
    %3546 = vdwg.mxu0
    %v3548 = vrot.slane %v3345, 4
    %v3551 = vrot.slane %v3347, 4
    %3553 = vmatprep.subr.bf16.mxu0 0
    %3554 = vmatpush1.bf16.xpose.msra.mxu0 %v3551
    %3555 = vmatprep.subr.bf16.mxu0 0
    %3556 = vmatpush1.bf16.xpose.msra.mxu0 0
    %3557 = vmatprep.subr.bf16.mxu0 0
    %3558 = vmatpush1.bf16.xpose.msra.mxu0 0
    %3559 = vmatprep.subr.bf16.mxu0 0
    %3560 = vmatpush1.bf16.xpose.msra.mxu0 0
    %3561 = vmatprep.subr.bf16.mxu0 0
    %3562 = vmatpush1.bf16.xpose.msra.mxu0 0
    %3563 = vmatprep.subr.bf16.mxu0 0
    %3564 = vmatpush1.bf16.xpose.msra.mxu0 0
    %3565 = vmatprep.subr.bf16.mxu0 0
    %3566 = vmatpush1.bf16.xpose.msra.mxu0 0
    %3567 = vmatprep.subr.bf16.mxu0 0
    %3568 = vmatpush1.bf16.xpose.msra.mxu0 0
    %3569 = vmatprep.subr.bf16.mxu0 0
    %3570 = vmatpush1.bf16.xpose.msra.mxu0 0
    %3571 = vmatprep.subr.bf16.mxu0 0
    %3572 = vmatpush1.bf16.xpose.msra.mxu0 0
    %3573 = vmatprep.subr.bf16.mxu0 0
    %3574 = vmatpush1.bf16.xpose.msra.mxu0 0
    %3575 = vmatprep.subr.bf16.mxu0 0
    %3576 = vmatpush1.bf16.xpose.msra.mxu0 0
    %3577 = vmatprep.subr.bf16.mxu0 0
    %3578 = vmatpush1.bf16.xpose.msra.mxu0 0
    %3579 = vmatprep.subr.bf16.mxu0 0
    %3580 = vmatpush1.bf16.xpose.msra.mxu0 0
    %3581 = vmatprep.subr.bf16.mxu0 0
    %3582 = vmatpush1.bf16.xpose.msra.mxu0 0
    %3583 = vmatprep.subr.bf16.mxu0 0
    %3584 = vmatpush1.bf16.xpose.msra.mxu0 0
    %3585 = vmatprep.mubr.bf16.mxu0 0
    %3586 = vmatmul.mubr.bf16.gmra.mrb[0].mxu0 %v3548
    %v3587 = vpop.f32.mrb[0].mxu0
    %v3588 = vadd.f32 0.0, %v3587
    %v3589 = vpop.f32.mrb[0].mxu0
    %v3590 = vpop.f32.mrb[0].mxu0
    %v3591 = vpop.f32.mrb[0].mxu0
    %3592 = vdwg.mxu0
    %v3593 = vsel %vm1510, %v3588, -inf
    %3594 = vmax.xlane.f32.xlu0 %v3593
    %v3595 = vpop.xlane.xlu0 %3594
    %v3596 = vsub.f32 %v3588, %v3595
    %v3597 = vmul.f32 %v3596, 1.442695
    %v3598 = vpow.pop %v3597
    %v3599 = vsel %vm1510, %v3598, 0.0
    %3600 = vadd.xlane.f32.xlu0 %v3599
    %v3601 = vpop.xlane.xlu0 %3600
    %v3602 = vrcp.pop %v3601
    %v3603 = vmul.f32 %v3598, %v3602
    %v3604 = vpack.c.bf16 %v3603, %v3603
    %v3606 = vrot.slane %v3349, 4
    %v3608 = vsel %vm1510, %v3604, 0
    %v3611 = vsel %vm1316, %v3606, 0
    %3613 = vmatprep.subr.bf16.mxu0 0
    %3614 = vmatpush1.bf16.msra.mxu0 %v3611
    %3615 = vmatprep.subr.bf16.mxu0 0
    %3616 = vmatpush1.bf16.msra.mxu0 0
    %3617 = vmatprep.subr.bf16.mxu0 0
    %3618 = vmatpush1.bf16.msra.mxu0 0
    %3619 = vmatprep.subr.bf16.mxu0 0
    %3620 = vmatpush1.bf16.msra.mxu0 0
    %3621 = vmatprep.subr.bf16.mxu0 0
    %3622 = vmatpush1.bf16.msra.mxu0 0
    %3623 = vmatprep.subr.bf16.mxu0 0
    %3624 = vmatpush1.bf16.msra.mxu0 0
    %3625 = vmatprep.subr.bf16.mxu0 0
    %3626 = vmatpush1.bf16.msra.mxu0 0
    %3627 = vmatprep.subr.bf16.mxu0 0
    %3628 = vmatpush1.bf16.msra.mxu0 0
    %3629 = vmatprep.subr.bf16.mxu0 0
    %3630 = vmatpush1.bf16.msra.mxu0 0
    %3631 = vmatprep.subr.bf16.mxu0 0
    %3632 = vmatpush1.bf16.msra.mxu0 0
    %3633 = vmatprep.subr.bf16.mxu0 0
    %3634 = vmatpush1.bf16.msra.mxu0 0
    %3635 = vmatprep.subr.bf16.mxu0 0
    %3636 = vmatpush1.bf16.msra.mxu0 0
    %3637 = vmatprep.subr.bf16.mxu0 0
    %3638 = vmatpush1.bf16.msra.mxu0 0
    %3639 = vmatprep.subr.bf16.mxu0 0
    %3640 = vmatpush1.bf16.msra.mxu0 0
    %3641 = vmatprep.subr.bf16.mxu0 0
    %3642 = vmatpush1.bf16.msra.mxu0 0
    %3643 = vmatprep.subr.bf16.mxu0 0
    %3644 = vmatpush1.bf16.msra.mxu0 0
    %3645 = vmatprep.mubr.bf16.mxu0 0
    %3646 = vmatmul.mubr.bf16.gmra.mrb[0].mxu0 %v3608
    %v3647 = vpop.f32.mrb[0].mxu0
    %v3648 = vadd.f32 0.0, %v3647
    %v3649 = vpop.f32.mrb[0].mxu0
    %v3650 = vpop.f32.mrb[0].mxu0
    %v3651 = vpop.f32.mrb[0].mxu0
    %3652 = vdwg.mxu0
    %v3654 = vrot.slane %v3346, 4
    %v3657 = vrot.slane %v3348, 4
    %3659 = vmatprep.subr.bf16.mxu0 0
    %3660 = vmatpush1.bf16.xpose.msra.mxu0 %v3657
    %3661 = vmatprep.subr.bf16.mxu0 0
    %3662 = vmatpush1.bf16.xpose.msra.mxu0 0
    %3663 = vmatprep.subr.bf16.mxu0 0
    %3664 = vmatpush1.bf16.xpose.msra.mxu0 0
    %3665 = vmatprep.subr.bf16.mxu0 0
    %3666 = vmatpush1.bf16.xpose.msra.mxu0 0
    %3667 = vmatprep.subr.bf16.mxu0 0
    %3668 = vmatpush1.bf16.xpose.msra.mxu0 0
    %3669 = vmatprep.subr.bf16.mxu0 0
    %3670 = vmatpush1.bf16.xpose.msra.mxu0 0
    %3671 = vmatprep.subr.bf16.mxu0 0
    %3672 = vmatpush1.bf16.xpose.msra.mxu0 0
    %3673 = vmatprep.subr.bf16.mxu0 0
    %3674 = vmatpush1.bf16.xpose.msra.mxu0 0
    %3675 = vmatprep.subr.bf16.mxu0 0
    %3676 = vmatpush1.bf16.xpose.msra.mxu0 0
    %3677 = vmatprep.subr.bf16.mxu0 0
    %3678 = vmatpush1.bf16.xpose.msra.mxu0 0
    %3679 = vmatprep.subr.bf16.mxu0 0
    %3680 = vmatpush1.bf16.xpose.msra.mxu0 0
    %3681 = vmatprep.subr.bf16.mxu0 0
    %3682 = vmatpush1.bf16.xpose.msra.mxu0 0
    %3683 = vmatprep.subr.bf16.mxu0 0
    %3684 = vmatpush1.bf16.xpose.msra.mxu0 0
    %3685 = vmatprep.subr.bf16.mxu0 0
    %3686 = vmatpush1.bf16.xpose.msra.mxu0 0
    %3687 = vmatprep.subr.bf16.mxu0 0
    %3688 = vmatpush1.bf16.xpose.msra.mxu0 0
    %3689 = vmatprep.subr.bf16.mxu0 0
    %3690 = vmatpush1.bf16.xpose.msra.mxu0 0
    %3691 = vmatprep.mubr.bf16.mxu0 0
    %3692 = vmatmul.mubr.bf16.gmra.mrb[0].mxu0 %v3654
    %v3693 = vpop.f32.mrb[0].mxu0
    %v3694 = vadd.f32 0.0, %v3693
    %v3695 = vpop.f32.mrb[0].mxu0
    %v3696 = vpop.f32.mrb[0].mxu0
    %v3697 = vpop.f32.mrb[0].mxu0
    %3698 = vdwg.mxu0
    %v3699 = vsel %vm1510, %v3694, -inf
    %3700 = vmax.xlane.f32.xlu0 %v3699
    %v3701 = vpop.xlane.xlu0 %3700
    %v3702 = vsub.f32 %v3694, %v3701
    %v3703 = vmul.f32 %v3702, 1.442695
    %v3704 = vpow.pop %v3703
    %v3705 = vsel %vm1510, %v3704, 0.0
    %3706 = vadd.xlane.f32.xlu0 %v3705
    %v3707 = vpop.xlane.xlu0 %3706
    %v3708 = vrcp.pop %v3707
    %v3709 = vmul.f32 %v3704, %v3708
    %v3710 = vpack.c.bf16 %v3709, %v3709
    %v3712 = vrot.slane %v3350, 4
    %v3714 = vsel %vm1510, %v3710, 0
    %v3717 = vsel %vm1316, %v3712, 0
    %3719 = vmatprep.subr.bf16.mxu0 0
    %3720 = vmatpush1.bf16.msra.mxu0 %v3717
    %3721 = vmatprep.subr.bf16.mxu0 0
    %3722 = vmatpush1.bf16.msra.mxu0 0
    %3723 = vmatprep.subr.bf16.mxu0 0
    %3724 = vmatpush1.bf16.msra.mxu0 0
    %3725 = vmatprep.subr.bf16.mxu0 0
    %3726 = vmatpush1.bf16.msra.mxu0 0
    %3727 = vmatprep.subr.bf16.mxu0 0
    %3728 = vmatpush1.bf16.msra.mxu0 0
    %3729 = vmatprep.subr.bf16.mxu0 0
    %3730 = vmatpush1.bf16.msra.mxu0 0
    %3731 = vmatprep.subr.bf16.mxu0 0
    %3732 = vmatpush1.bf16.msra.mxu0 0
    %3733 = vmatprep.subr.bf16.mxu0 0
    %3734 = vmatpush1.bf16.msra.mxu0 0
    %3735 = vmatprep.subr.bf16.mxu0 0
    %3736 = vmatpush1.bf16.msra.mxu0 0
    %3737 = vmatprep.subr.bf16.mxu0 0
    %3738 = vmatpush1.bf16.msra.mxu0 0
    %3739 = vmatprep.subr.bf16.mxu0 0
    %3740 = vmatpush1.bf16.msra.mxu0 0
    %3741 = vmatprep.subr.bf16.mxu0 0
    %3742 = vmatpush1.bf16.msra.mxu0 0
    %3743 = vmatprep.subr.bf16.mxu0 0
    %3744 = vmatpush1.bf16.msra.mxu0 0
    %3745 = vmatprep.subr.bf16.mxu0 0
    %3746 = vmatpush1.bf16.msra.mxu0 0
    %3747 = vmatprep.subr.bf16.mxu0 0
    %3748 = vmatpush1.bf16.msra.mxu0 0
    %3749 = vmatprep.subr.bf16.mxu0 0
    %3750 = vmatpush1.bf16.msra.mxu0 0
    %3751 = vmatprep.mubr.bf16.mxu0 0
    %3752 = vmatmul.mubr.bf16.gmra.mrb[0].mxu0 %v3714
    %v3753 = vpop.f32.mrb[0].mxu0
    %v3754 = vadd.f32 0.0, %v3753
    %v3755 = vpop.f32.mrb[0].mxu0
    %v3756 = vpop.f32.mrb[0].mxu0
    %v3757 = vpop.f32.mrb[0].mxu0
    %3758 = vdwg.mxu0
    %v3759 = vpack.c.bf16 %v3648, %v3444
    %v3760 = vpack.c.bf16 %v3754, %v3542
    %s3761 = scalar_lea.vmem %s5, 256
    %v3762 = vld [vmem:[%s3761] sm:$0xff]
    %v3763 = vld [vmem:[%s3761 + $0x8] sm:$0xff]
    %v3764 = vld [vmem:[%s3761 + $0x10] sm:$0xff]
    %v3765 = vld [vmem:[%s3761 + $0x18] sm:$0xff]
    %v3766 = vld [vmem:[%s3761 + $0x20] sm:$0xff]
    %v3767 = vld [vmem:[%s3761 + $0x28] sm:$0xff]
    %v3768 = vld [vmem:[%s3761 + $0x30] sm:$0xff]
    %v3769 = vld [vmem:[%s3761 + $0x38] sm:$0xff]
    %v3770 = vld [vmem:[%s3761 + $0x40] sm:$0xff]
    %v3771 = vld [vmem:[%s3761 + $0x48] sm:$0xff]
    %v3772 = vld [vmem:[%s3761 + $0x50] sm:$0xff]
    %v3773 = vld [vmem:[%s3761 + $0x58] sm:$0xff]
    %v3774 = vld [vmem:[%s3761 + $0x60] sm:$0xff]
    %v3775 = vld [vmem:[%s3761 + $0x68] sm:$0xff]
    %v3776 = vld [vmem:[%s3761 + $0x70] sm:$0xff]
    %v3777 = vld [vmem:[%s3761 + $0x78] sm:$0xff]
    %v3778 = vld [vmem:[%s3761 + $0x80] sm:$0xff]
    %v3779 = vld [vmem:[%s3761 + $0x88] sm:$0xff]
    %v3780 = vld [vmem:[%s3761 + $0x90] sm:$0xff]
    %v3781 = vld [vmem:[%s3761 + $0x98] sm:$0xff]
    %v3782 = vld [vmem:[%s3761 + $0xa0] sm:$0xff]
    %v3783 = vld [vmem:[%s3761 + $0xa8] sm:$0xff]
    %v3784 = vld [vmem:[%s3761 + $0xb0] sm:$0xff]
    %v3785 = vld [vmem:[%s3761 + $0xb8] sm:$0xff]
    %v3786 = vld [vmem:[%s3761 + $0xc0] sm:$0xff]
    %v3787 = vld [vmem:[%s3761 + $0xc8] sm:$0xff]
    %v3788 = vld [vmem:[%s3761 + $0xd0] sm:$0xff]
    %v3789 = vld [vmem:[%s3761 + $0xd8] sm:$0xff]
    %v3790 = vld [vmem:[%s3761 + $0xe0] sm:$0xff]
    %v3791 = vld [vmem:[%s3761 + $0xe8] sm:$0xff]
    %v3792 = vld [vmem:[%s3761 + $0xf0] sm:$0xff]
    %v3793 = vld [vmem:[%s3761 + $0xf8] sm:$0xff]
    %s3794 = scalar_lea.vmem %s6, 2
    %v3795 = vld [vmem:[%s3794] sm:$0x3]
    %v3797 = vlaneseq
    %v3798 = vshrl.u32 %v3797, 7
    %v3799 = vsub.s32 0, %v3798
    %v3800 = vrot.slane %v3795, %v3799
    %v3801 = vlaneseq
    %v3802 = vshrl.u32 %v3801, 7
    %v3803 = vsub.s32 1, %v3802
    %v3804 = vrot.slane %v3795, %v3803
    %v3839 = vunpack.c.l.b16 %v3762
    %v3840 = vunpack.c.h.b16 %v3762
    %v3841 = vunpack.c.l.b16 %v3763
    %v3842 = vunpack.c.h.b16 %v3763
    %v3843 = vunpack.c.l.b16 %v3764
    %v3844 = vunpack.c.h.b16 %v3764
    %v3845 = vunpack.c.l.b16 %v3765
    %v3846 = vunpack.c.h.b16 %v3765
    %v3847 = vunpack.c.l.b16 %v3766
    %v3848 = vunpack.c.h.b16 %v3766
    %v3849 = vunpack.c.l.b16 %v3767
    %v3850 = vunpack.c.h.b16 %v3767
    %v3851 = vunpack.c.l.b16 %v3768
    %v3852 = vunpack.c.h.b16 %v3768
    %v3853 = vunpack.c.l.b16 %v3769
    %v3854 = vunpack.c.h.b16 %v3769
    %v3855 = vunpack.c.l.b16 %v3770
    %v3856 = vunpack.c.h.b16 %v3770
    %v3857 = vunpack.c.l.b16 %v3771
    %v3858 = vunpack.c.h.b16 %v3771
    %v3859 = vunpack.c.l.b16 %v3772
    %v3860 = vunpack.c.h.b16 %v3772
    %v3861 = vunpack.c.l.b16 %v3773
    %v3862 = vunpack.c.h.b16 %v3773
    %v3863 = vunpack.c.l.b16 %v3774
    %v3864 = vunpack.c.h.b16 %v3774
    %v3865 = vunpack.c.l.b16 %v3775
    %v3866 = vunpack.c.h.b16 %v3775
    %v3867 = vunpack.c.l.b16 %v3776
    %v3868 = vunpack.c.h.b16 %v3776
    %v3869 = vunpack.c.l.b16 %v3777
    %v3870 = vunpack.c.h.b16 %v3777
    %v3871 = vunpack.c.l.b16 %v3778
    %v3872 = vunpack.c.h.b16 %v3778
    %v3873 = vunpack.c.l.b16 %v3779
    %v3874 = vunpack.c.h.b16 %v3779
    %v3875 = vunpack.c.l.b16 %v3780
    %v3876 = vunpack.c.h.b16 %v3780
    %v3877 = vunpack.c.l.b16 %v3781
    %v3878 = vunpack.c.h.b16 %v3781
    %v3879 = vunpack.c.l.b16 %v3782
    %v3880 = vunpack.c.h.b16 %v3782
    %v3881 = vunpack.c.l.b16 %v3783
    %v3882 = vunpack.c.h.b16 %v3783
    %v3883 = vunpack.c.l.b16 %v3784
    %v3884 = vunpack.c.h.b16 %v3784
    %v3885 = vunpack.c.l.b16 %v3785
    %v3886 = vunpack.c.h.b16 %v3785
    %v3887 = vunpack.c.l.b16 %v3786
    %v3888 = vunpack.c.h.b16 %v3786
    %v3889 = vunpack.c.l.b16 %v3787
    %v3890 = vunpack.c.h.b16 %v3787
    %v3891 = vunpack.c.l.b16 %v3788
    %v3892 = vunpack.c.h.b16 %v3788
    %v3893 = vunpack.c.l.b16 %v3789
    %v3894 = vunpack.c.h.b16 %v3789
    %v3895 = vunpack.c.l.b16 %v3790
    %v3896 = vunpack.c.h.b16 %v3790
    %v3897 = vunpack.c.l.b16 %v3791
    %v3898 = vunpack.c.h.b16 %v3791
    %v3899 = vunpack.c.l.b16 %v3792
    %v3900 = vunpack.c.h.b16 %v3792
    %v3901 = vunpack.c.l.b16 %v3793
    %v3902 = vunpack.c.h.b16 %v3793
    %v3903 = vpack.c.b16 %v3841, %v3839
    %v3904 = vpack.c.b16 %v3842, %v3840
    %v3905 = vpack.c.b16 %v3845, %v3843
    %v3906 = vpack.c.b16 %v3846, %v3844
    %v3907 = vpack.c.b16 %v3849, %v3847
    %v3908 = vpack.c.b16 %v3850, %v3848
    %v3909 = vpack.c.b16 %v3853, %v3851
    %v3910 = vpack.c.b16 %v3854, %v3852
    %v3911 = vpack.c.b16 %v3857, %v3855
    %v3912 = vpack.c.b16 %v3858, %v3856
    %v3913 = vpack.c.b16 %v3861, %v3859
    %v3914 = vpack.c.b16 %v3862, %v3860
    %v3915 = vpack.c.b16 %v3865, %v3863
    %v3916 = vpack.c.b16 %v3866, %v3864
    %v3917 = vpack.c.b16 %v3869, %v3867
    %v3918 = vpack.c.b16 %v3870, %v3868
    %v3919 = vpack.c.b16 %v3873, %v3871
    %v3920 = vpack.c.b16 %v3874, %v3872
    %v3921 = vpack.c.b16 %v3877, %v3875
    %v3922 = vpack.c.b16 %v3878, %v3876
    %v3923 = vpack.c.b16 %v3881, %v3879
    %v3924 = vpack.c.b16 %v3882, %v3880
    %v3925 = vpack.c.b16 %v3885, %v3883
    %v3926 = vpack.c.b16 %v3886, %v3884
    %v3927 = vpack.c.b16 %v3889, %v3887
    %v3928 = vpack.c.b16 %v3890, %v3888
    %v3929 = vpack.c.b16 %v3893, %v3891
    %v3930 = vpack.c.b16 %v3894, %v3892
    %v3931 = vpack.c.b16 %v3897, %v3895
    %v3932 = vpack.c.b16 %v3898, %v3896
    %v3933 = vpack.c.b16 %v3901, %v3899
    %v3934 = vpack.c.b16 %v3902, %v3900
    %3967 = vmatprep.subr.bf16.mxu0 %v3904
    %3968 = vmatpush1.bf16.msra.mxu0 %v3903
    %3969 = vmatprep.subr.bf16.mxu0 %v3906
    %3970 = vmatpush1.bf16.msra.mxu0 %v3905
    %3971 = vmatprep.subr.bf16.mxu0 %v3908
    %3972 = vmatpush1.bf16.msra.mxu0 %v3907
    %3973 = vmatprep.subr.bf16.mxu0 %v3910
    %3974 = vmatpush1.bf16.msra.mxu0 %v3909
    %3975 = vmatprep.subr.bf16.mxu0 %v3912
    %3976 = vmatpush1.bf16.msra.mxu0 %v3911
    %3977 = vmatprep.subr.bf16.mxu0 %v3914
    %3978 = vmatpush1.bf16.msra.mxu0 %v3913
    %3979 = vmatprep.subr.bf16.mxu0 %v3916
    %3980 = vmatpush1.bf16.msra.mxu0 %v3915
    %3981 = vmatprep.subr.bf16.mxu0 %v3918
    %3982 = vmatpush1.bf16.msra.mxu0 %v3917
    %3983 = vmatprep.subr.bf16.mxu0 %v3920
    %3984 = vmatpush1.bf16.msra.mxu0 %v3919
    %3985 = vmatprep.subr.bf16.mxu0 %v3922
    %3986 = vmatpush1.bf16.msra.mxu0 %v3921
    %3987 = vmatprep.subr.bf16.mxu0 %v3924
    %3988 = vmatpush1.bf16.msra.mxu0 %v3923
    %3989 = vmatprep.subr.bf16.mxu0 %v3926
    %3990 = vmatpush1.bf16.msra.mxu0 %v3925
    %3991 = vmatprep.subr.bf16.mxu0 %v3928
    %3992 = vmatpush1.bf16.msra.mxu0 %v3927
    %3993 = vmatprep.subr.bf16.mxu0 %v3930
    %3994 = vmatpush1.bf16.msra.mxu0 %v3929
    %3995 = vmatprep.subr.bf16.mxu0 %v3932
    %3996 = vmatpush1.bf16.msra.mxu0 %v3931
    %3997 = vmatprep.subr.bf16.mxu0 %v3934
    %3998 = vmatpush1.bf16.msra.mxu0 %v3933
    %3999 = vmatprep.mubr.bf16.mxu0 %v3760
    %4000 = vmatmul.mubr.bf16.gmra.mrb[0].mxu0 %v3759
    %v4001 = vpop.f32.mrb[0].mxu0
    %v4002 = vadd.f32 %v3800, %v4001
    %v4003 = vpop.f32.mrb[0].mxu0
    %v4004 = vadd.f32 %v3804, %v4003
    %v4005 = vpop.f32.mrb[0].mxu0
    %v4006 = vadd.f32 %v3800, %v4005
    %v4007 = vpop.f32.mrb[0].mxu0
    %v4008 = vadd.f32 %v3804, %v4007
    %4009 = vdwg.mxu0
    %v4010 = vadd.f32 %v2705, %v4002
    %v4011 = vadd.f32 %v2706, %v4004
    %v4012 = vadd.f32 %v2707, %v4006
    %v4013 = vadd.f32 %v2708, %v4008
    %s4014 = scalar_lea.vmem %s11, 2
    %v4015 = vld [vmem:[%s4014] sm:$0x3]
    %s4016 = scalar_lea.vmem %s12, 2
    %v4017 = vld [vmem:[%s4016] sm:$0x3]
    %v4018 = vsel %vm1312, %v4011, 0.0
    %v4019 = vadd.f32 %v4010, %v4018
    %4020 = vadd.xlane.f32.xlu0 %v4019
    %v4021 = vpop.xlane.xlu0 %4020
    %v4022 = vsel %vm1312, %v4013, 0.0
    %v4023 = vadd.f32 %v4012, %v4022
    %4024 = vadd.xlane.f32.xlu0 %v4023
    %v4025 = vpop.xlane.xlu0 %4024
    %v4026 = vmul.f32 %v4021, %v2142
    %v4027 = vmul.f32 %v4025, %v2142
    %v4028 = vsub.f32 %v4010, %v4026
    %v4029 = vsub.f32 %v4011, %v4026
    %v4030 = vsub.f32 %v4012, %v4027
    %v4031 = vsub.f32 %v4013, %v4027
    %v4032 = vmul.f32 %v4028, %v4028
    %v4033 = vmul.f32 %v4029, %v4029
    %v4034 = vmul.f32 %v4030, %v4030
    %v4035 = vmul.f32 %v4031, %v4031
    %v4036 = vsel %vm1312, %v4033, 0.0
    %v4037 = vadd.f32 %v4032, %v4036
    %4038 = vadd.xlane.f32.xlu0 %v4037
    %v4039 = vpop.xlane.xlu0 %4038
    %v4040 = vsel %vm1312, %v4035, 0.0
    %v4041 = vadd.f32 %v4034, %v4040
    %4042 = vadd.xlane.f32.xlu0 %v4041
    %v4043 = vpop.xlane.xlu0 %4042
    %v4044 = vmul.f32 %v4039, %v2142
    %v4045 = vmul.f32 %v4043, %v2142
    %v4046 = vadd.f32 %v4044, 1e-05
    %v4047 = vadd.f32 %v4045, 1e-05
    %v4048 = vrsqrt.pop %v4046
    %v4049 = vrsqrt.pop %v4047
    %v4050 = vmul.f32 %v4028, %v4048
    %v4051 = vmul.f32 %v4029, %v4048
    %v4052 = vmul.f32 %v4030, %v4049
    %v4053 = vmul.f32 %v4031, %v4049
    %v4055 = vlaneseq
    %v4056 = vshrl.u32 %v4055, 7
    %v4057 = vsub.s32 0, %v4056
    %v4058 = vrot.slane %v4015, %v4057
    %v4059 = vlaneseq
    %v4060 = vshrl.u32 %v4059, 7
    %v4061 = vsub.s32 1, %v4060
    %v4062 = vrot.slane %v4015, %v4061
    %v4065 = vmul.f32 %v4050, %v4058
    %v4066 = vmul.f32 %v4051, %v4062
    %v4067 = vmul.f32 %v4052, %v4058
    %v4068 = vmul.f32 %v4053, %v4062
    %v4070 = vlaneseq
    %v4071 = vshrl.u32 %v4070, 7
    %v4072 = vsub.s32 0, %v4071
    %v4073 = vrot.slane %v4017, %v4072
    %v4074 = vlaneseq
    %v4075 = vshrl.u32 %v4074, 7
    %v4076 = vsub.s32 1, %v4075
    %v4077 = vrot.slane %v4017, %v4076
    %v4080 = vadd.f32 %v4065, %v4073
    %v4081 = vadd.f32 %v4066, %v4077
    %v4082 = vadd.f32 %v4067, %v4073
    %v4083 = vadd.f32 %v4068, %v4077
    %v4084 = vpack.c.bf16 %v4082, %v4080
    %v4085 = vpack.c.bf16 %v4083, %v4081
    %s4086 = scalar_lea.vmem %s7, 200
    %v4087 = vld [vmem:[%s4086] sm:$0xff]
    %v4088 = vld [vmem:[%s4086 + $0x8] sm:$0xff]
    %v4089 = vld [vmem:[%s4086 + $0x10] sm:$0xff]
    %v4090 = vld [vmem:[%s4086 + $0x18] sm:$0xff]
    %v4091 = vld [vmem:[%s4086 + $0x20] sm:$0xff]
    %v4092 = vld [vmem:[%s4086 + $0x28] sm:$0xff]
    %v4093 = vld [vmem:[%s4086 + $0x30] sm:$0xff]
    %v4094 = vld [vmem:[%s4086 + $0x38] sm:$0xff]
    %v4095 = vld [vmem:[%s4086 + $0x40] sm:$0xff]
    %v4096 = vld [vmem:[%s4086 + $0x48] sm:$0xff]
    %v4097 = vld [vmem:[%s4086 + $0x50] sm:$0xff]
    %v4098 = vld [vmem:[%s4086 + $0x58] sm:$0xff]
    %v4099 = vld [vmem:[%s4086 + $0x60] sm:$0xff]
    %v4100 = vld [vmem:[%s4086 + $0x68] sm:$0xff]
    %v4101 = vld [vmem:[%s4086 + $0x70] sm:$0xff]
    %v4102 = vld [vmem:[%s4086 + $0x78] sm:$0xff]
    %v4103 = vld [vmem:[%s4086 + $0x80] sm:$0xff]
    %v4104 = vld [vmem:[%s4086 + $0x88] sm:$0xff]
    %v4105 = vld [vmem:[%s4086 + $0x90] sm:$0xff]
    %v4106 = vld [vmem:[%s4086 + $0x98] sm:$0xff]
    %v4107 = vld [vmem:[%s4086 + $0xa0] sm:$0xff]
    %v4108 = vld [vmem:[%s4086 + $0xa8] sm:$0xff]
    %v4109 = vld [vmem:[%s4086 + $0xb0] sm:$0xff]
    %v4110 = vld [vmem:[%s4086 + $0xb8] sm:$0xff]
    %v4111 = vld [vmem:[%s4086 + $0xc0] sm:$0xff]
    %s4112 = scalar_lea.vmem %s8, 2
    %v4113 = vld [vmem:[%s4112] sm:$0x3]
    %v4115 = vlaneseq
    %v4116 = vshrl.u32 %v4115, 7
    %v4117 = vsub.s32 0, %v4116
    %v4118 = vrot.slane %v4113, %v4117
    %v4119 = vlaneseq
    %v4120 = vshrl.u32 %v4119, 7
    %v4121 = vsub.s32 1, %v4120
    %v4122 = vrot.slane %v4113, %v4121
    %v4150 = vunpack.c.l.b16 %v4087
    %v4151 = vunpack.c.h.b16 %v4087
    %v4152 = vunpack.c.l.b16 %v4088
    %v4153 = vunpack.c.h.b16 %v4088
    %v4154 = vunpack.c.l.b16 %v4089
    %v4155 = vunpack.c.h.b16 %v4089
    %v4156 = vunpack.c.l.b16 %v4090
    %v4157 = vunpack.c.h.b16 %v4090
    %v4158 = vunpack.c.l.b16 %v4091
    %v4159 = vunpack.c.h.b16 %v4091
    %v4160 = vunpack.c.l.b16 %v4092
    %v4161 = vunpack.c.h.b16 %v4092
    %v4162 = vunpack.c.l.b16 %v4093
    %v4163 = vunpack.c.h.b16 %v4093
    %v4164 = vunpack.c.l.b16 %v4094
    %v4165 = vunpack.c.h.b16 %v4094
    %v4166 = vunpack.c.l.b16 %v4095
    %v4167 = vunpack.c.h.b16 %v4095
    %v4168 = vunpack.c.l.b16 %v4096
    %v4169 = vunpack.c.h.b16 %v4096
    %v4170 = vunpack.c.l.b16 %v4097
    %v4171 = vunpack.c.h.b16 %v4097
    %v4172 = vunpack.c.l.b16 %v4098
    %v4173 = vunpack.c.h.b16 %v4098
    %v4174 = vunpack.c.l.b16 %v4099
    %v4175 = vunpack.c.h.b16 %v4099
    %v4176 = vunpack.c.l.b16 %v4100
    %v4177 = vunpack.c.h.b16 %v4100
    %v4178 = vunpack.c.l.b16 %v4101
    %v4179 = vunpack.c.h.b16 %v4101
    %v4180 = vunpack.c.l.b16 %v4102
    %v4181 = vunpack.c.h.b16 %v4102
    %v4182 = vunpack.c.l.b16 %v4103
    %v4183 = vunpack.c.h.b16 %v4103
    %v4184 = vunpack.c.l.b16 %v4104
    %v4185 = vunpack.c.h.b16 %v4104
    %v4186 = vunpack.c.l.b16 %v4105
    %v4187 = vunpack.c.h.b16 %v4105
    %v4188 = vunpack.c.l.b16 %v4106
    %v4189 = vunpack.c.h.b16 %v4106
    %v4190 = vunpack.c.l.b16 %v4107
    %v4191 = vunpack.c.h.b16 %v4107
    %v4192 = vunpack.c.l.b16 %v4108
    %v4193 = vunpack.c.h.b16 %v4108
    %v4194 = vunpack.c.l.b16 %v4109
    %v4195 = vunpack.c.h.b16 %v4109
    %v4196 = vunpack.c.l.b16 %v4110
    %v4197 = vunpack.c.h.b16 %v4110
    %v4198 = vunpack.c.l.b16 %v4111
    %v4199 = vunpack.c.h.b16 %v4111
    %v4200 = vpack.c.b16 %v4152, %v4150
    %v4201 = vpack.c.b16 %v4153, %v4151
    %v4202 = vpack.c.b16 %v4156, %v4154
    %v4203 = vpack.c.b16 %v4157, %v4155
    %v4204 = vpack.c.b16 %v4160, %v4158
    %v4205 = vpack.c.b16 %v4161, %v4159
    %v4206 = vpack.c.b16 %v4164, %v4162
    %v4207 = vpack.c.b16 %v4165, %v4163
    %v4208 = vpack.c.b16 %v4168, %v4166
    %v4209 = vpack.c.b16 %v4169, %v4167
    %v4210 = vpack.c.b16 %v4172, %v4170
    %v4211 = vpack.c.b16 %v4173, %v4171
    %v4212 = vpack.c.b16 %v4176, %v4174
    %v4213 = vpack.c.b16 %v4177, %v4175
    %v4214 = vpack.c.b16 %v4180, %v4178
    %v4215 = vpack.c.b16 %v4181, %v4179
    %v4216 = vpack.c.b16 %v4184, %v4182
    %v4217 = vpack.c.b16 %v4185, %v4183
    %v4218 = vpack.c.b16 %v4188, %v4186
    %v4219 = vpack.c.b16 %v4189, %v4187
    %v4220 = vpack.c.b16 %v4192, %v4190
    %v4221 = vpack.c.b16 %v4193, %v4191
    %v4222 = vpack.c.b16 %v4196, %v4194
    %v4223 = vpack.c.b16 %v4197, %v4195
    %v4224 = vpack.c.b16 %v4198, %v4198
    %v4225 = vpack.c.b16 %v4199, %v4199
    %v4251 = vsel %vm1312, %v4085, 0
    %v4254 = vsel %vm1316, %v4224, 0
    %v4257 = vsel %vm1316, %v4225, 0
    %4259 = vmatprep.subr.bf16.mxu0 %v4201
    %4260 = vmatpush1.bf16.msra.mxu0 %v4200
    %4261 = vmatprep.subr.bf16.mxu0 %v4203
    %4262 = vmatpush1.bf16.msra.mxu0 %v4202
    %4263 = vmatprep.subr.bf16.mxu0 %v4205
    %4264 = vmatpush1.bf16.msra.mxu0 %v4204
    %4265 = vmatprep.subr.bf16.mxu0 %v4207
    %4266 = vmatpush1.bf16.msra.mxu0 %v4206
    %4267 = vmatprep.subr.bf16.mxu0 %v4209
    %4268 = vmatpush1.bf16.msra.mxu0 %v4208
    %4269 = vmatprep.subr.bf16.mxu0 %v4211
    %4270 = vmatpush1.bf16.msra.mxu0 %v4210
    %4271 = vmatprep.subr.bf16.mxu0 %v4213
    %4272 = vmatpush1.bf16.msra.mxu0 %v4212
    %4273 = vmatprep.subr.bf16.mxu0 %v4215
    %4274 = vmatpush1.bf16.msra.mxu0 %v4214
    %4275 = vmatprep.subr.bf16.mxu0 %v4217
    %4276 = vmatpush1.bf16.msra.mxu0 %v4216
    %4277 = vmatprep.subr.bf16.mxu0 %v4219
    %4278 = vmatpush1.bf16.msra.mxu0 %v4218
    %4279 = vmatprep.subr.bf16.mxu0 %v4221
    %4280 = vmatpush1.bf16.msra.mxu0 %v4220
    %4281 = vmatprep.subr.bf16.mxu0 %v4223
    %4282 = vmatpush1.bf16.msra.mxu0 %v4222
    %4283 = vmatprep.subr.bf16.mxu0 %v4257
    %4284 = vmatpush1.bf16.msra.mxu0 %v4254
    %4285 = vmatprep.subr.bf16.mxu0 0
    %4286 = vmatpush1.bf16.msra.mxu0 0
    %4287 = vmatprep.subr.bf16.mxu0 0
    %4288 = vmatpush1.bf16.msra.mxu0 0
    %4289 = vmatprep.subr.bf16.mxu0 0
    %4290 = vmatpush1.bf16.msra.mxu0 0
    %4291 = vmatprep.mubr.bf16.mxu0 %v4251
    %4292 = vmatmul.mubr.bf16.gmra.mrb[0].mxu0 %v4084
    %v4293 = vpop.f32.mrb[0].mxu0
    %v4294 = vadd.f32 %v4118, %v4293
    %v4295 = vpop.f32.mrb[0].mxu0
    %v4296 = vadd.f32 %v4122, %v4295
    %v4297 = vpop.f32.mrb[0].mxu0
    %v4298 = vadd.f32 %v4118, %v4297
    %v4299 = vpop.f32.mrb[0].mxu0
    %v4300 = vadd.f32 %v4122, %v4299
    %4301 = vdwg.mxu0
    %v4302 = vmax.f32 %v4294, 0.0
    %v4303 = vmax.f32 %v4296, 0.0
    %v4304 = vmax.f32 %v4298, 0.0
    %v4305 = vmax.f32 %v4300, 0.0
    %v4306 = vpack.c.bf16 %v4304, %v4302
    %v4307 = vpack.c.bf16 %v4305, %v4303
    %s4308 = scalar_lea.vmem [#allocation2], 200
    %v4309 = vld [vmem:[%s4308] sm:$0xff]
    %v4310 = vld [vmem:[%s4308 + $0x8] sm:$0xff]
    %v4311 = vld [vmem:[%s4308 + $0x10] sm:$0xff]
    %v4312 = vld [vmem:[%s4308 + $0x18] sm:$0xff]
    %v4313 = vld [vmem:[%s4308 + $0x20] sm:$0xff]
    %v4314 = vld [vmem:[%s4308 + $0x28] sm:$0xff]
    %v4315 = vld [vmem:[%s4308 + $0x30] sm:$0xff]
    %v4316 = vld [vmem:[%s4308 + $0x38] sm:$0xff]
    %v4317 = vld [vmem:[%s4308 + $0x40] sm:$0xff]
    %v4318 = vld [vmem:[%s4308 + $0x48] sm:$0xff]
    %v4319 = vld [vmem:[%s4308 + $0x50] sm:$0xff]
    %v4320 = vld [vmem:[%s4308 + $0x58] sm:$0xff]
    %v4321 = vld [vmem:[%s4308 + $0x60] sm:$0xff]
    %v4322 = vld [vmem:[%s4308 + $0x68] sm:$0xff]
    %v4323 = vld [vmem:[%s4308 + $0x70] sm:$0xff]
    %v4324 = vld [vmem:[%s4308 + $0x78] sm:$0xff]
    %v4325 = vld [vmem:[%s4308 + $0x80] sm:$0xff]
    %v4326 = vld [vmem:[%s4308 + $0x88] sm:$0xff]
    %v4327 = vld [vmem:[%s4308 + $0x90] sm:$0xff]
    %v4328 = vld [vmem:[%s4308 + $0x98] sm:$0xff]
    %v4329 = vld [vmem:[%s4308 + $0xa0] sm:$0xff]
    %v4330 = vld [vmem:[%s4308 + $0xa8] sm:$0xff]
    %v4331 = vld [vmem:[%s4308 + $0xb0] sm:$0xff]
    %v4332 = vld [vmem:[%s4308 + $0xb8] sm:$0xff]
    %v4333 = vld [vmem:[%s4308 + $0xc0] sm:$0xff]
    %s4334 = scalar_lea.vmem %s10, 2
    %v4335 = vld [vmem:[%s4334] sm:$0x3]
    %v4337 = vlaneseq
    %v4338 = vshrl.u32 %v4337, 7
    %v4339 = vsub.s32 0, %v4338
    %v4340 = vrot.slane %v4335, %v4339
    %v4341 = vlaneseq
    %v4342 = vshrl.u32 %v4341, 7
    %v4343 = vsub.s32 1, %v4342
    %v4344 = vrot.slane %v4335, %v4343
    %v4372 = vunpack.c.l.b16 %v4309
    %v4373 = vunpack.c.h.b16 %v4309
    %v4374 = vunpack.c.l.b16 %v4310
    %v4375 = vunpack.c.h.b16 %v4310
    %v4376 = vunpack.c.l.b16 %v4311
    %v4377 = vunpack.c.h.b16 %v4311
    %v4378 = vunpack.c.l.b16 %v4312
    %v4379 = vunpack.c.h.b16 %v4312
    %v4380 = vunpack.c.l.b16 %v4313
    %v4381 = vunpack.c.h.b16 %v4313
    %v4382 = vunpack.c.l.b16 %v4314
    %v4383 = vunpack.c.h.b16 %v4314
    %v4384 = vunpack.c.l.b16 %v4315
    %v4385 = vunpack.c.h.b16 %v4315
    %v4386 = vunpack.c.l.b16 %v4316
    %v4387 = vunpack.c.h.b16 %v4316
    %v4388 = vunpack.c.l.b16 %v4317
    %v4389 = vunpack.c.h.b16 %v4317
    %v4390 = vunpack.c.l.b16 %v4318
    %v4391 = vunpack.c.h.b16 %v4318
    %v4392 = vunpack.c.l.b16 %v4319
    %v4393 = vunpack.c.h.b16 %v4319
    %v4394 = vunpack.c.l.b16 %v4320
    %v4395 = vunpack.c.h.b16 %v4320
    %v4396 = vunpack.c.l.b16 %v4321
    %v4397 = vunpack.c.h.b16 %v4321
    %v4398 = vunpack.c.l.b16 %v4322
    %v4399 = vunpack.c.h.b16 %v4322
    %v4400 = vunpack.c.l.b16 %v4323
    %v4401 = vunpack.c.h.b16 %v4323
    %v4402 = vunpack.c.l.b16 %v4324
    %v4403 = vunpack.c.h.b16 %v4324
    %v4404 = vunpack.c.l.b16 %v4325
    %v4405 = vunpack.c.h.b16 %v4325
    %v4406 = vunpack.c.l.b16 %v4326
    %v4407 = vunpack.c.h.b16 %v4326
    %v4408 = vunpack.c.l.b16 %v4327
    %v4409 = vunpack.c.h.b16 %v4327
    %v4410 = vunpack.c.l.b16 %v4328
    %v4411 = vunpack.c.h.b16 %v4328
    %v4412 = vunpack.c.l.b16 %v4329
    %v4413 = vunpack.c.h.b16 %v4329
    %v4414 = vunpack.c.l.b16 %v4330
    %v4415 = vunpack.c.h.b16 %v4330
    %v4416 = vunpack.c.l.b16 %v4331
    %v4417 = vunpack.c.h.b16 %v4331
    %v4418 = vunpack.c.l.b16 %v4332
    %v4419 = vunpack.c.h.b16 %v4332
    %v4420 = vunpack.c.l.b16 %v4333
    %v4421 = vunpack.c.h.b16 %v4333
    %v4422 = vpack.c.b16 %v4374, %v4372
    %v4423 = vpack.c.b16 %v4375, %v4373
    %v4424 = vpack.c.b16 %v4378, %v4376
    %v4425 = vpack.c.b16 %v4379, %v4377
    %v4426 = vpack.c.b16 %v4382, %v4380
    %v4427 = vpack.c.b16 %v4383, %v4381
    %v4428 = vpack.c.b16 %v4386, %v4384
    %v4429 = vpack.c.b16 %v4387, %v4385
    %v4430 = vpack.c.b16 %v4390, %v4388
    %v4431 = vpack.c.b16 %v4391, %v4389
    %v4432 = vpack.c.b16 %v4394, %v4392
    %v4433 = vpack.c.b16 %v4395, %v4393
    %v4434 = vpack.c.b16 %v4398, %v4396
    %v4435 = vpack.c.b16 %v4399, %v4397
    %v4436 = vpack.c.b16 %v4402, %v4400
    %v4437 = vpack.c.b16 %v4403, %v4401
    %v4438 = vpack.c.b16 %v4406, %v4404
    %v4439 = vpack.c.b16 %v4407, %v4405
    %v4440 = vpack.c.b16 %v4410, %v4408
    %v4441 = vpack.c.b16 %v4411, %v4409
    %v4442 = vpack.c.b16 %v4414, %v4412
    %v4443 = vpack.c.b16 %v4415, %v4413
    %v4444 = vpack.c.b16 %v4418, %v4416
    %v4445 = vpack.c.b16 %v4419, %v4417
    %v4446 = vpack.c.b16 %v4420, %v4420
    %v4447 = vpack.c.b16 %v4421, %v4421
    %v4473 = vsel %vm1312, %v4307, 0
    %v4476 = vsel %vm1316, %v4446, 0
    %v4479 = vsel %vm1316, %v4447, 0
    %4481 = vmatprep.subr.bf16.mxu0 %v4423
    %4482 = vmatpush1.bf16.msra.mxu0 %v4422
    %4483 = vmatprep.subr.bf16.mxu0 %v4425
    %4484 = vmatpush1.bf16.msra.mxu0 %v4424
    %4485 = vmatprep.subr.bf16.mxu0 %v4427
    %4486 = vmatpush1.bf16.msra.mxu0 %v4426
    %4487 = vmatprep.subr.bf16.mxu0 %v4429
    %4488 = vmatpush1.bf16.msra.mxu0 %v4428
    %4489 = vmatprep.subr.bf16.mxu0 %v4431
    %4490 = vmatpush1.bf16.msra.mxu0 %v4430
    %4491 = vmatprep.subr.bf16.mxu0 %v4433
    %4492 = vmatpush1.bf16.msra.mxu0 %v4432
    %4493 = vmatprep.subr.bf16.mxu0 %v4435
    %4494 = vmatpush1.bf16.msra.mxu0 %v4434
    %4495 = vmatprep.subr.bf16.mxu0 %v4437
    %4496 = vmatpush1.bf16.msra.mxu0 %v4436
    %4497 = vmatprep.subr.bf16.mxu0 %v4439
    %4498 = vmatpush1.bf16.msra.mxu0 %v4438
    %4499 = vmatprep.subr.bf16.mxu0 %v4441
    %4500 = vmatpush1.bf16.msra.mxu0 %v4440
    %4501 = vmatprep.subr.bf16.mxu0 %v4443
    %4502 = vmatpush1.bf16.msra.mxu0 %v4442
    %4503 = vmatprep.subr.bf16.mxu0 %v4445
    %4504 = vmatpush1.bf16.msra.mxu0 %v4444
    %4505 = vmatprep.subr.bf16.mxu0 %v4479
    %4506 = vmatpush1.bf16.msra.mxu0 %v4476
    %4507 = vmatprep.subr.bf16.mxu0 0
    %4508 = vmatpush1.bf16.msra.mxu0 0
    %4509 = vmatprep.subr.bf16.mxu0 0
    %4510 = vmatpush1.bf16.msra.mxu0 0
    %4511 = vmatprep.subr.bf16.mxu0 0
    %4512 = vmatpush1.bf16.msra.mxu0 0
    %4513 = vmatprep.mubr.bf16.mxu0 %v4473
    %4514 = vmatmul.mubr.bf16.gmra.mrb[0].mxu0 %v4306
    %v4515 = vpop.f32.mrb[0].mxu0
    %v4516 = vadd.f32 %v4340, %v4515
    %v4517 = vpop.f32.mrb[0].mxu0
    %v4518 = vadd.f32 %v4344, %v4517
    %v4519 = vpop.f32.mrb[0].mxu0
    %v4520 = vadd.f32 %v4340, %v4519
    %v4521 = vpop.f32.mrb[0].mxu0
    %v4522 = vadd.f32 %v4344, %v4521
    %4523 = vdwg.mxu0
    %v4524 = vadd.f32 %v4080, %v4516
    %v4525 = vadd.f32 %v4081, %v4518
    %v4526 = vadd.f32 %v4082, %v4520
    %v4527 = vadd.f32 %v4083, %v4522
    %s4528 = scalar_lea.vmem %s13, 2
    %v4529 = vld [vmem:[%s4528] sm:$0x3]
    %s4530 = scalar_lea.vmem %s14, 2
    %v4531 = vld [vmem:[%s4530] sm:$0x3]
    %v4532 = vsel %vm1312, %v4525, 0.0
    %v4533 = vadd.f32 %v4524, %v4532
    %4534 = vadd.xlane.f32.xlu0 %v4533
    %v4535 = vpop.xlane.xlu0 %4534
    %v4536 = vsel %vm1312, %v4527, 0.0
    %v4537 = vadd.f32 %v4526, %v4536
    %4538 = vadd.xlane.f32.xlu0 %v4537
    %v4539 = vpop.xlane.xlu0 %4538
    %v4540 = vmul.f32 %v4535, %v2142
    %v4541 = vmul.f32 %v4539, %v2142
    %v4542 = vsub.f32 %v4524, %v4540
    %v4543 = vsub.f32 %v4525, %v4540
    %v4544 = vsub.f32 %v4526, %v4541
    %v4545 = vsub.f32 %v4527, %v4541
    %v4546 = vmul.f32 %v4542, %v4542
    %v4547 = vmul.f32 %v4543, %v4543
    %v4548 = vmul.f32 %v4544, %v4544
    %v4549 = vmul.f32 %v4545, %v4545
    %v4550 = vsel %vm1312, %v4547, 0.0
    %v4551 = vadd.f32 %v4546, %v4550
    %4552 = vadd.xlane.f32.xlu0 %v4551
    %v4553 = vpop.xlane.xlu0 %4552
    %v4554 = vsel %vm1312, %v4549, 0.0
    %v4555 = vadd.f32 %v4548, %v4554
    %4556 = vadd.xlane.f32.xlu0 %v4555
    %v4557 = vpop.xlane.xlu0 %4556
    %v4558 = vmul.f32 %v4553, %v2142
    %v4559 = vmul.f32 %v4557, %v2142
    %v4560 = vadd.f32 %v4558, 1e-05
    %v4561 = vadd.f32 %v4559, 1e-05
    %v4562 = vrsqrt.pop %v4560
    %v4563 = vrsqrt.pop %v4561
    %v4564 = vmul.f32 %v4542, %v4562
    %v4565 = vmul.f32 %v4543, %v4562
    %v4566 = vmul.f32 %v4544, %v4563
    %v4567 = vmul.f32 %v4545, %v4563
    %v4569 = vlaneseq
    %v4570 = vshrl.u32 %v4569, 7
    %v4571 = vsub.s32 0, %v4570
    %v4572 = vrot.slane %v4529, %v4571
    %v4573 = vlaneseq
    %v4574 = vshrl.u32 %v4573, 7
    %v4575 = vsub.s32 1, %v4574
    %v4576 = vrot.slane %v4529, %v4575
    %v4579 = vmul.f32 %v4564, %v4572
    %v4580 = vmul.f32 %v4565, %v4576
    %v4581 = vmul.f32 %v4566, %v4572
    %v4582 = vmul.f32 %v4567, %v4576
    %v4584 = vlaneseq
    %v4585 = vshrl.u32 %v4584, 7
    %v4586 = vsub.s32 0, %v4585
    %v4587 = vrot.slane %v4531, %v4586
    %v4588 = vlaneseq
    %v4589 = vshrl.u32 %v4588, 7
    %v4590 = vsub.s32 1, %v4589
    %v4591 = vrot.slane %v4531, %v4590
    %v4594 = vadd.f32 %v4579, %v4587
    %v4595 = vadd.f32 %v4580, %v4591
    %v4596 = vadd.f32 %v4581, %v4587
    %v4597 = vadd.f32 %v4582, %v4591
    %v4598 = vpack.c.bf16 %v4596, %v4594
    %v4599 = vpack.c.bf16 %v4597, %v4595
    %v4600 = vld [vmem:[%s15] sm:$0xf]
    %v4601 = vld [vmem:[%s15 + $0x4] sm:$0xf]
    %v4602 = vld [vmem:[%s15 + $0x8] sm:$0xf]
    %v4603 = vld [vmem:[%s15 + $0xc] sm:$0xf]
    %v4604 = vld [vmem:[%s15 + $0x10] sm:$0xf]
    %v4605 = vld [vmem:[%s15 + $0x14] sm:$0xf]
    %v4606 = vld [vmem:[%s15 + $0x18] sm:$0xf]
    %v4607 = vld [vmem:[%s15 + $0x1c] sm:$0xf]
    %v4608 = vld [vmem:[%s15 + $0x20] sm:$0xf]
    %v4609 = vld [vmem:[%s15 + $0x24] sm:$0xf]
    %v4610 = vld [vmem:[%s15 + $0x28] sm:$0xf]
    %v4611 = vld [vmem:[%s15 + $0x2c] sm:$0xf]
    %v4612 = vld [vmem:[%s15 + $0x30] sm:$0xf]
    %v4613 = vld [vmem:[%s15 + $0x34] sm:$0xf]
    %v4614 = vld [vmem:[%s15 + $0x38] sm:$0xf]
    %v4615 = vld [vmem:[%s15 + $0x3c] sm:$0xf]
    %v4616 = vld [vmem:[%s15 + $0x40] sm:$0xf]
    %v4617 = vld [vmem:[%s15 + $0x44] sm:$0xf]
    %v4618 = vld [vmem:[%s15 + $0x48] sm:$0xf]
    %v4619 = vld [vmem:[%s15 + $0x4c] sm:$0xf]
    %v4620 = vld [vmem:[%s15 + $0x50] sm:$0xf]
    %v4621 = vld [vmem:[%s15 + $0x54] sm:$0xf]
    %v4622 = vld [vmem:[%s15 + $0x58] sm:$0xf]
    %v4623 = vld [vmem:[%s15 + $0x5c] sm:$0xf]
    %v4624 = vld [vmem:[%s15 + $0x60] sm:$0xf]
    %v4625 = vld [vmem:[%s16] sm:$0x1]
    %v4627 = vlaneseq
    %v4628 = vshrl.u32 %v4627, 7
    %v4629 = vsub.s32 0, %v4628
    %v4630 = vrot.slane %v4625, %v4629
    %v4657 = vunpack.c.l.b16 %v4600
    %v4658 = vunpack.c.l.b16 %v4601
    %v4659 = vunpack.c.l.b16 %v4602
    %v4660 = vunpack.c.l.b16 %v4603
    %v4661 = vunpack.c.l.b16 %v4604
    %v4662 = vunpack.c.l.b16 %v4605
    %v4663 = vunpack.c.l.b16 %v4606
    %v4664 = vunpack.c.l.b16 %v4607
    %v4665 = vunpack.c.l.b16 %v4608
    %v4666 = vunpack.c.l.b16 %v4609
    %v4667 = vunpack.c.l.b16 %v4610
    %v4668 = vunpack.c.l.b16 %v4611
    %v4669 = vunpack.c.l.b16 %v4612
    %v4670 = vunpack.c.l.b16 %v4613
    %v4671 = vunpack.c.l.b16 %v4614
    %v4672 = vunpack.c.l.b16 %v4615
    %v4673 = vunpack.c.l.b16 %v4616
    %v4674 = vunpack.c.l.b16 %v4617
    %v4675 = vunpack.c.l.b16 %v4618
    %v4676 = vunpack.c.l.b16 %v4619
    %v4677 = vunpack.c.l.b16 %v4620
    %v4678 = vunpack.c.l.b16 %v4621
    %v4679 = vunpack.c.l.b16 %v4622
    %v4680 = vunpack.c.l.b16 %v4623
    %v4681 = vunpack.c.l.b16 %v4624
    %v4682 = vpack.c.b16 %v4658, %v4657
    %v4683 = vpack.c.b16 %v4660, %v4659
    %v4684 = vpack.c.b16 %v4662, %v4661
    %v4685 = vpack.c.b16 %v4664, %v4663
    %v4686 = vpack.c.b16 %v4666, %v4665
    %v4687 = vpack.c.b16 %v4668, %v4667
    %v4688 = vpack.c.b16 %v4670, %v4669
    %v4689 = vpack.c.b16 %v4672, %v4671
    %v4690 = vpack.c.b16 %v4674, %v4673
    %v4691 = vpack.c.b16 %v4676, %v4675
    %v4692 = vpack.c.b16 %v4678, %v4677
    %v4693 = vpack.c.b16 %v4680, %v4679
    %v4694 = vpack.c.b16 %v4681, %v4681
    %v4708 = vsel %vm1312, %v4599, 0
    %v4711 = vsel %vm1316, %v4694, 0
    %4713 = vmatprep.subr.bf16.mxu0 0
    %4714 = vmatpush1.bf16.msra.mxu0 %v4682
    %4715 = vmatprep.subr.bf16.mxu0 0
    %4716 = vmatpush1.bf16.msra.mxu0 %v4683
    %4717 = vmatprep.subr.bf16.mxu0 0
    %4718 = vmatpush1.bf16.msra.mxu0 %v4684
    %4719 = vmatprep.subr.bf16.mxu0 0
    %4720 = vmatpush1.bf16.msra.mxu0 %v4685
    %4721 = vmatprep.subr.bf16.mxu0 0
    %4722 = vmatpush1.bf16.msra.mxu0 %v4686
    %4723 = vmatprep.subr.bf16.mxu0 0
    %4724 = vmatpush1.bf16.msra.mxu0 %v4687
    %4725 = vmatprep.subr.bf16.mxu0 0
    %4726 = vmatpush1.bf16.msra.mxu0 %v4688
    %4727 = vmatprep.subr.bf16.mxu0 0
    %4728 = vmatpush1.bf16.msra.mxu0 %v4689
    %4729 = vmatprep.subr.bf16.mxu0 0
    %4730 = vmatpush1.bf16.msra.mxu0 %v4690
    %4731 = vmatprep.subr.bf16.mxu0 0
    %4732 = vmatpush1.bf16.msra.mxu0 %v4691
    %4733 = vmatprep.subr.bf16.mxu0 0
    %4734 = vmatpush1.bf16.msra.mxu0 %v4692
    %4735 = vmatprep.subr.bf16.mxu0 0
    %4736 = vmatpush1.bf16.msra.mxu0 %v4693
    %4737 = vmatprep.subr.bf16.mxu0 0
    %4738 = vmatpush1.bf16.msra.mxu0 %v4711
    %4739 = vmatprep.subr.bf16.mxu0 0
    %4740 = vmatpush1.bf16.msra.mxu0 0
    %4741 = vmatprep.subr.bf16.mxu0 0
    %4742 = vmatpush1.bf16.msra.mxu0 0
    %4743 = vmatprep.subr.bf16.mxu0 0
    %4744 = vmatpush1.bf16.msra.mxu0 0
    %4745 = vmatprep.mubr.bf16.mxu0 %v4708
    %4746 = vmatmul.mubr.bf16.gmra.mrb[0].mxu0 %v4598
    %v4747 = vpop.f32.mrb[0].mxu0
    %v4748 = vadd.f32 %v4630, %v4747
    %v4749 = vpop.f32.mrb[0].mxu0
    %v4750 = vpop.f32.mrb[0].mxu0
    %v4751 = vadd.f32 %v4630, %v4750
    %v4752 = vpop.f32.mrb[0].mxu0
    %4753 = vdwg.mxu0
    %vm4754 = vcmask 72704
    %v4755 = vsel %vm4754, %v4748, -inf
    %4756 = vmax.xlane.f32.xlu0 %v4755
    %v4757 = vpop.xlane.xlu0 %4756
    %v4758 = vsel %vm4754, %v4751, -inf
    %4759 = vmax.xlane.f32.xlu0 %v4758
    %v4760 = vpop.xlane.xlu0 %4759
    %v4761 = vsub.f32 %v4748, %v4757
    %v4762 = vsub.f32 %v4751, %v4760
    %v4763 = vmul.f32 %v4761, 1.442695
    %v4764 = vpow.pop %v4763
    %v4765 = vmul.f32 %v4762, 1.442695
    %v4766 = vpow.pop %v4765
    %v4767 = vsel %vm4754, %v4764, 0.0
    %4768 = vadd.xlane.f32.xlu0 %v4767
    %v4769 = vpop.xlane.xlu0 %4768
    %v4770 = vsel %vm4754, %v4766, 0.0
    %4771 = vadd.xlane.f32.xlu0 %v4770
    %v4772 = vpop.xlane.xlu0 %4771
    %v4773 = vrcp.pop %v4769
    %v4774 = vmul.f32 %v4764, %v4773
    %v4775 = vrcp.pop %v4772
    %v4776 = vmul.f32 %v4766, %v4775
    %4777 = vst.msk [vmem:[%s17] sm:$0xff] %vm4754, %v4774
    %4778 = vst.msk [vmem:[%s17 + $0x8] sm:$0xff] %vm4754, %v4776
    // Predicated region
    $region74: #{ner_forward.1} parent=1 // pred_check
      _
    $region75: #{ner_forward.1} parent=1 // pred_check_branch
      %4780 = sbr.rel (0) target = $region77
    $region76: #{ner_forward.1} parent=1 // pred_region
      _
    $region77: #{ner_forward.1} parent=1 // pred_fallthru
      _
    // Predicated region
    $region78: #{ner_forward.1} parent=1 // pred_check
      _
    $region79: #{ner_forward.1} parent=1 // pred_check_branch
      %4782 = sbr.rel (0) target = $region81
    $region80: #{ner_forward.1} parent=1 // pred_region
      _
    $region81: #{ner_forward.1} parent=1 // pred_fallthru
      _
    %4783 = vsyncpa [#allocation3], 1

</llo_original>
